<compile_context>
chip_gen: v5e
topology: v5e:2x2
jax: 0.10.0
libtpu: 0.0.40
codegen_flags: <defaults>
</compile_context>

<pallas_src>
import jax
import jax.numpy as jnp
from jax.experimental import pallas as pl
from jax.experimental.pallas import tpu as pltpu


def cbow_kernel(idx_ref, emb_hbm, w_ref, out_ref,
                gather_buf, hidden_sc, m_sc, l_sc, copy_sems):
    j = pl.program_id(0)
    n_tiles = pl.num_programs(0)
    C, B, D = gather_buf.shape
    TV = w_ref.shape[1]

    @pl.when(j == 0)
    def _prologue():
        # Real gather: DMA exactly the B*C needed embedding rows from HBM.
        copies = []
        for b in range(B):
            for c in range(C):
                row = idx_ref[b * C + c]                      # SMEM scalar read
                cp = pltpu.make_async_copy(
                    emb_hbm.at[pl.ds(row, 1)],                # (1, D) HBM view
                    gather_buf.at[c, pl.ds(b, 1)],            # (1, D) VMEM view
                    copy_sems.at[c, b])
                cp.start()
                copies.append(cp)
        for cp in copies:                                     # overlap, then wait all
            cp.wait()
        # Mean over the context dimension: pure VPU reduction (no matmul).
        hidden_sc[...] = jnp.mean(gather_buf[...], axis=0)    # (B, D), f32
        # Online-logsumexp running state.
        m_sc[...] = jnp.full_like(m_sc, -jnp.inf)
        l_sc[...] = jnp.zeros_like(l_sc)

    # Projection for this vocab tile: (B, D) @ (D, TV) on the MXU (f32 acc).
    logits = jnp.dot(hidden_sc[...], w_ref[...],
                     preferred_element_type=jnp.float32)      # (B, TV)

    # Online logsumexp accumulation across vocab tiles.
    m_new = jnp.maximum(m_sc[...], jnp.max(logits, axis=-1, keepdims=True))
    l_sc[...] = (l_sc[...] * jnp.exp(m_sc[...] - m_new)
                 + jnp.sum(jnp.exp(logits - m_new), axis=-1, keepdims=True))
    m_sc[...] = m_new

    # Stage raw logits for this tile into the resident (B, V) output block
    # (lane-dense, 128-aligned stores).
    off = pl.multiple_of(j * TV, TV)
    out_ref[:, pl.ds(off, TV)] = logits

    @pl.when(j == n_tiles - 1)
    def _epilogue():
        lse = m_sc[...] + jnp.log(l_sc[...])                  # (B, 1)
        out_ref[...] = out_ref[...] - lse                     # log_softmax


def cbow_forward(indices, emb_table, linear_weight, *, tv=128):
    """indices: (B, C) int32; emb_table: (V, D); linear_weight: (V, D) like
    torch.nn.Linear(D, V).weight.  Returns (B, V) log-probabilities."""
    B, C = indices.shape
    V, D = emb_table.shape
    assert linear_weight.shape == (V, D)
    assert V % tv == 0 and tv % 128 == 0

    idx_flat = indices.reshape(B * C).astype(jnp.int32)
    # Pre-transpose once outside the kernel: (D, V) keeps the MXU output
    # lane-dense and avoids a per-call V x D relayout inside the kernel.
    w_dv = jnp.transpose(linear_weight)

    grid_spec = pltpu.PrefetchScalarGridSpec(
        num_scalar_prefetch=1,                                 # idx_flat -> SMEM
        grid=(V // tv,),
        in_specs=[
            pl.BlockSpec(memory_space=pl.ANY),                 # emb table stays in HBM
            pl.BlockSpec((D, tv), lambda j, idx: (0, j)),      # pipelined weight tile
        ],
        out_specs=pl.BlockSpec((B, V), lambda j, idx: (0, 0)),  # resident output block
        scratch_shapes=[
            pltpu.VMEM((C, B, D), jnp.float32),                # gathered context rows
            pltpu.VMEM((B, D), jnp.float32),                   # hidden = mean(ctx)
            pltpu.VMEM((B, 1), jnp.float32),                   # running max
            pltpu.VMEM((B, 1), jnp.float32),                   # running sum
            pltpu.SemaphoreType.DMA((C, B)),                   # per-row gather sems
        ],
    )
    # TODO(synk): for v7x megacore, add a 'parallel' axis (batch blocks, or a
    # 2-way vocab split with a small cross-core LSE combine) to use both TCs.
    return pl.pallas_call(
        cbow_kernel,
        out_shape=jax.ShapeDtypeStruct((B, V), jnp.float32),
        grid_spec=grid_spec,
        compiler_params=pltpu.CompilerParams(
            # The vocab-tile axis carries the logsumexp reduction and the
            # resident output block -> must be "arbitrary".
            dimension_semantics=("arbitrary",),
        ),
    )(idx_flat, emb_table, w_dv)


if __name__ == "__main__":
    vocab_size = 256
    embedding_dim = 128
    batch = 8
    context = 4  # CBOW context window (dim=1 of the inputs)

    key = jax.random.PRNGKey(0)
    k_idx, k_emb, k_w = jax.random.split(key, 3)

    indices = jax.random.randint(k_idx, (batch, context), 0, vocab_size,
                                 dtype=jnp.int32)
    emb_table = jax.random.normal(k_emb, (vocab_size, embedding_dim),
                                  dtype=jnp.float32)
    # nn.Linear(embedding_dim, vocab_size, bias=False).weight -> (V, D)
    linear_weight = (jax.random.uniform(k_w, (vocab_size, embedding_dim),
                                        dtype=jnp.float32) - 0.5) * 0.2

    log_probs = cbow_forward(indices, emb_table, linear_weight)
    jax.block_until_ready(log_probs)

    # Reference check in plain JAX (same math as the PyTorch forward).
    embeds = emb_table[indices]                       # (B, C, D)
    hidden = embeds.mean(axis=1)                      # (B, D)
    logits = hidden @ linear_weight.T                 # (B, V)
    ref = jax.nn.log_softmax(logits, axis=-1)
    assert jnp.allclose(log_probs, ref, atol=1e-4, rtol=1e-4)

    print("KERNEL_OK")
</pallas_src>

<mosaic_0001>
module attributes {stable_mosaic.version = 11 : i64} {
  func.func @cbow_kernel(%arg0: i32, %arg1: memref<32xi32, #tpu.memory_space<smem>>, %arg2: memref<256x128xf32, #tpu.memory_space<any>>, %arg3: memref<128x128xf32, #tpu.memory_space<vmem>>, %arg4: memref<8x256xf32, #tpu.memory_space<vmem>>, %arg5: memref<4x8x128xf32, #tpu.memory_space<vmem>>, %arg6: memref<8x128xf32, #tpu.memory_space<vmem>>, %arg7: memref<8x1xf32, #tpu.memory_space<vmem>>, %arg8: memref<8x1xf32, #tpu.memory_space<vmem>>, %arg9: memref<4x8x!tpu.dma_semaphore, #tpu.memory_space<semaphore_mem>>) attributes {dimension_semantics = [#tpu.dimension_semantics<arbitrary>], iteration_bounds = array<i64: 2>, scalar_prefetch = 1 : i64, scratch_operands = 5 : i64, tpu.core_type = #tpu.core_type<tc>, window_params = [{}, {transform_indices = @transform_1, window_bounds = array<i64: 128, 128>}, {pipeline_mode = #tpu.pipeline_mode<synchronous>, transform_indices = @transform_2, window_bounds = array<i64: 8, 256>}]} {
    %c0_i32 = arith.constant 0 : i32
    %0 = arith.cmpi eq, %arg0, %c0_i32 : i32
    %1 = arith.extui %0 : i1 to i32
    %c0_i32_0 = arith.constant 0 : i32
    %2 = arith.cmpi ne, %1, %c0_i32_0 : i32
    scf.if %2 {
      %c0_18 = arith.constant 0 : index
      %30 = memref.load %arg1[%c0_18] : memref<32xi32, #tpu.memory_space<smem>>
      %c0_i32_19 = arith.constant 0 : i32
      %c0_i32_20 = arith.constant 0 : i32
      %c0_i32_21 = arith.constant 0 : i32
      %c0_i32_22 = arith.constant 0 : i32
      %31 = tpu.memref_slice %arg2[%30, %c0_i32_22] : memref<256x128xf32, #tpu.memory_space<any>> -> memref<1x128xf32, #tpu.memory_space<any>>
      %c0_i32_23 = arith.constant 0 : i32
      %c0_i32_24 = arith.constant 0 : i32
      %32 = tpu.memref_slice %arg5[%c0_i32_19, %c0_i32_23, %c0_i32_24] : memref<4x8x128xf32, #tpu.memory_space<vmem>> -> memref<1x1x128xf32, #tpu.memory_space<vmem>>
      %33 = tpu.memref_squeeze %32 : memref<1x1x128xf32, #tpu.memory_space<vmem>> -> memref<1x128xf32, #tpu.memory_space<vmem>>
      %34 = tpu.memref_slice %arg9[%c0_i32_20, %c0_i32_21] : memref<4x8x!tpu.dma_semaphore, #tpu.memory_space<semaphore_mem>> -> memref<1x1x!tpu.dma_semaphore, #tpu.memory_space<semaphore_mem>>
      %35 = tpu.memref_squeeze %34 : memref<1x1x!tpu.dma_semaphore, #tpu.memory_space<semaphore_mem>> -> memref<!tpu.dma_semaphore, #tpu.memory_space<semaphore_mem>>
      tpu.enqueue_dma source(%31 : memref<1x128xf32, #tpu.memory_space<any>>) target(%33 : memref<1x128xf32, #tpu.memory_space<vmem>>) target_semaphore(%35 : memref<!tpu.dma_semaphore, #tpu.memory_space<semaphore_mem>>)
      %c1 = arith.constant 1 : index
      %36 = memref.load %arg1[%c1] : memref<32xi32, #tpu.memory_space<smem>>
      %c1_i32_25 = arith.constant 1 : i32
      %c1_i32_26 = arith.constant 1 : i32
      %c0_i32_27 = arith.constant 0 : i32
      %c0_i32_28 = arith.constant 0 : i32
      %37 = tpu.memref_slice %arg2[%36, %c0_i32_28] : memref<256x128xf32, #tpu.memory_space<any>> -> memref<1x128xf32, #tpu.memory_space<any>>
      %c0_i32_29 = arith.constant 0 : i32
      %c0_i32_30 = arith.constant 0 : i32
      %38 = tpu.memref_slice %arg5[%c1_i32_25, %c0_i32_29, %c0_i32_30] : memref<4x8x128xf32, #tpu.memory_space<vmem>> -> memref<1x1x128xf32, #tpu.memory_space<vmem>>
      %39 = tpu.memref_squeeze %38 : memref<1x1x128xf32, #tpu.memory_space<vmem>> -> memref<1x128xf32, #tpu.memory_space<vmem>>
      %40 = tpu.memref_slice %arg9[%c1_i32_26, %c0_i32_27] : memref<4x8x!tpu.dma_semaphore, #tpu.memory_space<semaphore_mem>> -> memref<1x1x!tpu.dma_semaphore, #tpu.memory_space<semaphore_mem>>
      %41 = tpu.memref_squeeze %40 : memref<1x1x!tpu.dma_semaphore, #tpu.memory_space<semaphore_mem>> -> memref<!tpu.dma_semaphore, #tpu.memory_space<semaphore_mem>>
      tpu.enqueue_dma source(%37 : memref<1x128xf32, #tpu.memory_space<any>>) target(%39 : memref<1x128xf32, #tpu.memory_space<vmem>>) target_semaphore(%41 : memref<!tpu.dma_semaphore, #tpu.memory_space<semaphore_mem>>)
      %c2 = arith.constant 2 : index
      %42 = memref.load %arg1[%c2] : memref<32xi32, #tpu.memory_space<smem>>
      %c2_i32 = arith.constant 2 : i32
      %c2_i32_31 = arith.constant 2 : i32
      %c0_i32_32 = arith.constant 0 : i32
      %c0_i32_33 = arith.constant 0 : i32
      %43 = tpu.memref_slice %arg2[%42, %c0_i32_33] : memref<256x128xf32, #tpu.memory_space<any>> -> memref<1x128xf32, #tpu.memory_space<any>>
      %c0_i32_34 = arith.constant 0 : i32
      %c0_i32_35 = arith.constant 0 : i32
      %44 = tpu.memref_slice %arg5[%c2_i32, %c0_i32_34, %c0_i32_35] : memref<4x8x128xf32, #tpu.memory_space<vmem>> -> memref<1x1x128xf32, #tpu.memory_space<vmem>>
      %45 = tpu.memref_squeeze %44 : memref<1x1x128xf32, #tpu.memory_space<vmem>> -> memref<1x128xf32, #tpu.memory_space<vmem>>
      %46 = tpu.memref_slice %arg9[%c2_i32_31, %c0_i32_32] : memref<4x8x!tpu.dma_semaphore, #tpu.memory_space<semaphore_mem>> -> memref<1x1x!tpu.dma_semaphore, #tpu.memory_space<semaphore_mem>>
      %47 = tpu.memref_squeeze %46 : memref<1x1x!tpu.dma_semaphore, #tpu.memory_space<semaphore_mem>> -> memref<!tpu.dma_semaphore, #tpu.memory_space<semaphore_mem>>
      tpu.enqueue_dma source(%43 : memref<1x128xf32, #tpu.memory_space<any>>) target(%45 : memref<1x128xf32, #tpu.memory_space<vmem>>) target_semaphore(%47 : memref<!tpu.dma_semaphore, #tpu.memory_space<semaphore_mem>>)
      %c3 = arith.constant 3 : index
      %48 = memref.load %arg1[%c3] : memref<32xi32, #tpu.memory_space<smem>>
      %c3_i32 = arith.constant 3 : i32
      %c3_i32_36 = arith.constant 3 : i32
      %c0_i32_37 = arith.constant 0 : i32
      %c0_i32_38 = arith.constant 0 : i32
      %49 = tpu.memref_slice %arg2[%48, %c0_i32_38] : memref<256x128xf32, #tpu.memory_space<any>> -> memref<1x128xf32, #tpu.memory_space<any>>
      %c0_i32_39 = arith.constant 0 : i32
      %c0_i32_40 = arith.constant 0 : i32
      %50 = tpu.memref_slice %arg5[%c3_i32, %c0_i32_39, %c0_i32_40] : memref<4x8x128xf32, #tpu.memory_space<vmem>> -> memref<1x1x128xf32, #tpu.memory_space<vmem>>
      %51 = tpu.memref_squeeze %50 : memref<1x1x128xf32, #tpu.memory_space<vmem>> -> memref<1x128xf32, #tpu.memory_space<vmem>>
      %52 = tpu.memref_slice %arg9[%c3_i32_36, %c0_i32_37] : memref<4x8x!tpu.dma_semaphore, #tpu.memory_space<semaphore_mem>> -> memref<1x1x!tpu.dma_semaphore, #tpu.memory_space<semaphore_mem>>
      %53 = tpu.memref_squeeze %52 : memref<1x1x!tpu.dma_semaphore, #tpu.memory_space<semaphore_mem>> -> memref<!tpu.dma_semaphore, #tpu.memory_space<semaphore_mem>>
      tpu.enqueue_dma source(%49 : memref<1x128xf32, #tpu.memory_space<any>>) target(%51 : memref<1x128xf32, #tpu.memory_space<vmem>>) target_semaphore(%53 : memref<!tpu.dma_semaphore, #tpu.memory_space<semaphore_mem>>)
      %c4 = arith.constant 4 : index
      %54 = memref.load %arg1[%c4] : memref<32xi32, #tpu.memory_space<smem>>
      %c0_i32_41 = arith.constant 0 : i32
      %c0_i32_42 = arith.constant 0 : i32
      %c1_i32_43 = arith.constant 1 : i32
      %c0_i32_44 = arith.constant 0 : i32
      %55 = tpu.memref_slice %arg2[%54, %c0_i32_44] : memref<256x128xf32, #tpu.memory_space<any>> -> memref<1x128xf32, #tpu.memory_space<any>>
      %c1_i32_45 = arith.constant 1 : i32
      %c0_i32_46 = arith.constant 0 : i32
      %56 = tpu.memref_slice %arg5[%c0_i32_41, %c1_i32_45, %c0_i32_46] : memref<4x8x128xf32, #tpu.memory_space<vmem>> -> memref<1x1x128xf32, #tpu.memory_space<vmem>>
      %57 = tpu.memref_squeeze %56 : memref<1x1x128xf32, #tpu.memory_space<vmem>> -> memref<1x128xf32, #tpu.memory_space<vmem>>
      %58 = tpu.memref_slice %arg9[%c0_i32_42, %c1_i32_43] : memref<4x8x!tpu.dma_semaphore, #tpu.memory_space<semaphore_mem>> -> memref<1x1x!tpu.dma_semaphore, #tpu.memory_space<semaphore_mem>>
      %59 = tpu.memref_squeeze %58 : memref<1x1x!tpu.dma_semaphore, #tpu.memory_space<semaphore_mem>> -> memref<!tpu.dma_semaphore, #tpu.memory_space<semaphore_mem>>
      tpu.enqueue_dma source(%55 : memref<1x128xf32, #tpu.memory_space<any>>) target(%57 : memref<1x128xf32, #tpu.memory_space<vmem>>) target_semaphore(%59 : memref<!tpu.dma_semaphore, #tpu.memory_space<semaphore_mem>>)
      %c5 = arith.constant 5 : index
      %60 = memref.load %arg1[%c5] : memref<32xi32, #tpu.memory_space<smem>>
      %c1_i32_47 = arith.constant 1 : i32
      %c1_i32_48 = arith.constant 1 : i32
      %c1_i32_49 = arith.constant 1 : i32
      %c0_i32_50 = arith.constant 0 : i32
      %61 = tpu.memref_slice %arg2[%60, %c0_i32_50] : memref<256x128xf32, #tpu.memory_space<any>> -> memref<1x128xf32, #tpu.memory_space<any>>
      %c1_i32_51 = arith.constant 1 : i32
      %c0_i32_52 = arith.constant 0 : i32
      %62 = tpu.memref_slice %arg5[%c1_i32_47, %c1_i32_51, %c0_i32_52] : memref<4x8x128xf32, #tpu.memory_space<vmem>> -> memref<1x1x128xf32, #tpu.memory_space<vmem>>
      %63 = tpu.memref_squeeze %62 : memref<1x1x128xf32, #tpu.memory_space<vmem>> -> memref<1x128xf32, #tpu.memory_space<vmem>>
      %64 = tpu.memref_slice %arg9[%c1_i32_48, %c1_i32_49] : memref<4x8x!tpu.dma_semaphore, #tpu.memory_space<semaphore_mem>> -> memref<1x1x!tpu.dma_semaphore, #tpu.memory_space<semaphore_mem>>
      %65 = tpu.memref_squeeze %64 : memref<1x1x!tpu.dma_semaphore, #tpu.memory_space<semaphore_mem>> -> memref<!tpu.dma_semaphore, #tpu.memory_space<semaphore_mem>>
      tpu.enqueue_dma source(%61 : memref<1x128xf32, #tpu.memory_space<any>>) target(%63 : memref<1x128xf32, #tpu.memory_space<vmem>>) target_semaphore(%65 : memref<!tpu.dma_semaphore, #tpu.memory_space<semaphore_mem>>)
      %c6 = arith.constant 6 : index
      %66 = memref.load %arg1[%c6] : memref<32xi32, #tpu.memory_space<smem>>
      %c2_i32_53 = arith.constant 2 : i32
      %c2_i32_54 = arith.constant 2 : i32
      %c1_i32_55 = arith.constant 1 : i32
      %c0_i32_56 = arith.constant 0 : i32
      %67 = tpu.memref_slice %arg2[%66, %c0_i32_56] : memref<256x128xf32, #tpu.memory_space<any>> -> memref<1x128xf32, #tpu.memory_space<any>>
      %c1_i32_57 = arith.constant 1 : i32
      %c0_i32_58 = arith.constant 0 : i32
      %68 = tpu.memref_slice %arg5[%c2_i32_53, %c1_i32_57, %c0_i32_58] : memref<4x8x128xf32, #tpu.memory_space<vmem>> -> memref<1x1x128xf32, #tpu.memory_space<vmem>>
      %69 = tpu.memref_squeeze %68 : memref<1x1x128xf32, #tpu.memory_space<vmem>> -> memref<1x128xf32, #tpu.memory_space<vmem>>
      %70 = tpu.memref_slice %arg9[%c2_i32_54, %c1_i32_55] : memref<4x8x!tpu.dma_semaphore, #tpu.memory_space<semaphore_mem>> -> memref<1x1x!tpu.dma_semaphore, #tpu.memory_space<semaphore_mem>>
      %71 = tpu.memref_squeeze %70 : memref<1x1x!tpu.dma_semaphore, #tpu.memory_space<semaphore_mem>> -> memref<!tpu.dma_semaphore, #tpu.memory_space<semaphore_mem>>
      tpu.enqueue_dma source(%67 : memref<1x128xf32, #tpu.memory_space<any>>) target(%69 : memref<1x128xf32, #tpu.memory_space<vmem>>) target_semaphore(%71 : memref<!tpu.dma_semaphore, #tpu.memory_space<semaphore_mem>>)
      %c7 = arith.constant 7 : index
      %72 = memref.load %arg1[%c7] : memref<32xi32, #tpu.memory_space<smem>>
      %c3_i32_59 = arith.constant 3 : i32
      %c3_i32_60 = arith.constant 3 : i32
      %c1_i32_61 = arith.constant 1 : i32
      %c0_i32_62 = arith.constant 0 : i32
      %73 = tpu.memref_slice %arg2[%72, %c0_i32_62] : memref<256x128xf32, #tpu.memory_space<any>> -> memref<1x128xf32, #tpu.memory_space<any>>
      %c1_i32_63 = arith.constant 1 : i32
      %c0_i32_64 = arith.constant 0 : i32
      %74 = tpu.memref_slice %arg5[%c3_i32_59, %c1_i32_63, %c0_i32_64] : memref<4x8x128xf32, #tpu.memory_space<vmem>> -> memref<1x1x128xf32, #tpu.memory_space<vmem>>
      %75 = tpu.memref_squeeze %74 : memref<1x1x128xf32, #tpu.memory_space<vmem>> -> memref<1x128xf32, #tpu.memory_space<vmem>>
      %76 = tpu.memref_slice %arg9[%c3_i32_60, %c1_i32_61] : memref<4x8x!tpu.dma_semaphore, #tpu.memory_space<semaphore_mem>> -> memref<1x1x!tpu.dma_semaphore, #tpu.memory_space<semaphore_mem>>
      %77 = tpu.memref_squeeze %76 : memref<1x1x!tpu.dma_semaphore, #tpu.memory_space<semaphore_mem>> -> memref<!tpu.dma_semaphore, #tpu.memory_space<semaphore_mem>>
      tpu.enqueue_dma source(%73 : memref<1x128xf32, #tpu.memory_space<any>>) target(%75 : memref<1x128xf32, #tpu.memory_space<vmem>>) target_semaphore(%77 : memref<!tpu.dma_semaphore, #tpu.memory_space<semaphore_mem>>)
      %c8 = arith.constant 8 : index
      %78 = memref.load %arg1[%c8] : memref<32xi32, #tpu.memory_space<smem>>
      %c0_i32_65 = arith.constant 0 : i32
      %c0_i32_66 = arith.constant 0 : i32
      %c2_i32_67 = arith.constant 2 : i32
      %c0_i32_68 = arith.constant 0 : i32
      %79 = tpu.memref_slice %arg2[%78, %c0_i32_68] : memref<256x128xf32, #tpu.memory_space<any>> -> memref<1x128xf32, #tpu.memory_space<any>>
      %c2_i32_69 = arith.constant 2 : i32
      %c0_i32_70 = arith.constant 0 : i32
      %80 = tpu.memref_slice %arg5[%c0_i32_65, %c2_i32_69, %c0_i32_70] : memref<4x8x128xf32, #tpu.memory_space<vmem>> -> memref<1x1x128xf32, #tpu.memory_space<vmem>>
      %81 = tpu.memref_squeeze %80 : memref<1x1x128xf32, #tpu.memory_space<vmem>> -> memref<1x128xf32, #tpu.memory_space<vmem>>
      %82 = tpu.memref_slice %arg9[%c0_i32_66, %c2_i32_67] : memref<4x8x!tpu.dma_semaphore, #tpu.memory_space<semaphore_mem>> -> memref<1x1x!tpu.dma_semaphore, #tpu.memory_space<semaphore_mem>>
      %83 = tpu.memref_squeeze %82 : memref<1x1x!tpu.dma_semaphore, #tpu.memory_space<semaphore_mem>> -> memref<!tpu.dma_semaphore, #tpu.memory_space<semaphore_mem>>
      tpu.enqueue_dma source(%79 : memref<1x128xf32, #tpu.memory_space<any>>) target(%81 : memref<1x128xf32, #tpu.memory_space<vmem>>) target_semaphore(%83 : memref<!tpu.dma_semaphore, #tpu.memory_space<semaphore_mem>>)
      %c9 = arith.constant 9 : index
      %84 = memref.load %arg1[%c9] : memref<32xi32, #tpu.memory_space<smem>>
      %c1_i32_71 = arith.constant 1 : i32
      %c1_i32_72 = arith.constant 1 : i32
      %c2_i32_73 = arith.constant 2 : i32
      %c0_i32_74 = arith.constant 0 : i32
      %85 = tpu.memref_slice %arg2[%84, %c0_i32_74] : memref<256x128xf32, #tpu.memory_space<any>> -> memref<1x128xf32, #tpu.memory_space<any>>
      %c2_i32_75 = arith.constant 2 : i32
      %c0_i32_76 = arith.constant 0 : i32
      %86 = tpu.memref_slice %arg5[%c1_i32_71, %c2_i32_75, %c0_i32_76] : memref<4x8x128xf32, #tpu.memory_space<vmem>> -> memref<1x1x128xf32, #tpu.memory_space<vmem>>
      %87 = tpu.memref_squeeze %86 : memref<1x1x128xf32, #tpu.memory_space<vmem>> -> memref<1x128xf32, #tpu.memory_space<vmem>>
      %88 = tpu.memref_slice %arg9[%c1_i32_72, %c2_i32_73] : memref<4x8x!tpu.dma_semaphore, #tpu.memory_space<semaphore_mem>> -> memref<1x1x!tpu.dma_semaphore, #tpu.memory_space<semaphore_mem>>
      %89 = tpu.memref_squeeze %88 : memref<1x1x!tpu.dma_semaphore, #tpu.memory_space<semaphore_mem>> -> memref<!tpu.dma_semaphore, #tpu.memory_space<semaphore_mem>>
      tpu.enqueue_dma source(%85 : memref<1x128xf32, #tpu.memory_space<any>>) target(%87 : memref<1x128xf32, #tpu.memory_space<vmem>>) target_semaphore(%89 : memref<!tpu.dma_semaphore, #tpu.memory_space<semaphore_mem>>)
      %c10 = arith.constant 10 : index
      %90 = memref.load %arg1[%c10] : memref<32xi32, #tpu.memory_space<smem>>
      %c2_i32_77 = arith.constant 2 : i32
      %c2_i32_78 = arith.constant 2 : i32
      %c2_i32_79 = arith.constant 2 : i32
      %c0_i32_80 = arith.constant 0 : i32
      %91 = tpu.memref_slice %arg2[%90, %c0_i32_80] : memref<256x128xf32, #tpu.memory_space<any>> -> memref<1x128xf32, #tpu.memory_space<any>>
      %c2_i32_81 = arith.constant 2 : i32
      %c0_i32_82 = arith.constant 0 : i32
      %92 = tpu.memref_slice %arg5[%c2_i32_77, %c2_i32_81, %c0_i32_82] : memref<4x8x128xf32, #tpu.memory_space<vmem>> -> memref<1x1x128xf32, #tpu.memory_space<vmem>>
      %93 = tpu.memref_squeeze %92 : memref<1x1x128xf32, #tpu.memory_space<vmem>> -> memref<1x128xf32, #tpu.memory_space<vmem>>
      %94 = tpu.memref_slice %arg9[%c2_i32_78, %c2_i32_79] : memref<4x8x!tpu.dma_semaphore, #tpu.memory_space<semaphore_mem>> -> memref<1x1x!tpu.dma_semaphore, #tpu.memory_space<semaphore_mem>>
      %95 = tpu.memref_squeeze %94 : memref<1x1x!tpu.dma_semaphore, #tpu.memory_space<semaphore_mem>> -> memref<!tpu.dma_semaphore, #tpu.memory_space<semaphore_mem>>
      tpu.enqueue_dma source(%91 : memref<1x128xf32, #tpu.memory_space<any>>) target(%93 : memref<1x128xf32, #tpu.memory_space<vmem>>) target_semaphore(%95 : memref<!tpu.dma_semaphore, #tpu.memory_space<semaphore_mem>>)
      %c11 = arith.constant 11 : index
      %96 = memref.load %arg1[%c11] : memref<32xi32, #tpu.memory_space<smem>>
      %c3_i32_83 = arith.constant 3 : i32
      %c3_i32_84 = arith.constant 3 : i32
      %c2_i32_85 = arith.constant 2 : i32
      %c0_i32_86 = arith.constant 0 : i32
      %97 = tpu.memref_slice %arg2[%96, %c0_i32_86] : memref<256x128xf32, #tpu.memory_space<any>> -> memref<1x128xf32, #tpu.memory_space<any>>
      %c2_i32_87 = arith.constant 2 : i32
      %c0_i32_88 = arith.constant 0 : i32
      %98 = tpu.memref_slice %arg5[%c3_i32_83, %c2_i32_87, %c0_i32_88] : memref<4x8x128xf32, #tpu.memory_space<vmem>> -> memref<1x1x128xf32, #tpu.memory_space<vmem>>
      %99 = tpu.memref_squeeze %98 : memref<1x1x128xf32, #tpu.memory_space<vmem>> -> memref<1x128xf32, #tpu.memory_space<vmem>>
      %100 = tpu.memref_slice %arg9[%c3_i32_84, %c2_i32_85] : memref<4x8x!tpu.dma_semaphore, #tpu.memory_space<semaphore_mem>> -> memref<1x1x!tpu.dma_semaphore, #tpu.memory_space<semaphore_mem>>
      %101 = tpu.memref_squeeze %100 : memref<1x1x!tpu.dma_semaphore, #tpu.memory_space<semaphore_mem>> -> memref<!tpu.dma_semaphore, #tpu.memory_space<semaphore_mem>>
      tpu.enqueue_dma source(%97 : memref<1x128xf32, #tpu.memory_space<any>>) target(%99 : memref<1x128xf32, #tpu.memory_space<vmem>>) target_semaphore(%101 : memref<!tpu.dma_semaphore, #tpu.memory_space<semaphore_mem>>)
      %c12 = arith.constant 12 : index
      %102 = memref.load %arg1[%c12] : memref<32xi32, #tpu.memory_space<smem>>
      %c0_i32_89 = arith.constant 0 : i32
      %c0_i32_90 = arith.constant 0 : i32
      %c3_i32_91 = arith.constant 3 : i32
      %c0_i32_92 = arith.constant 0 : i32
      %103 = tpu.memref_slice %arg2[%102, %c0_i32_92] : memref<256x128xf32, #tpu.memory_space<any>> -> memref<1x128xf32, #tpu.memory_space<any>>
      %c3_i32_93 = arith.constant 3 : i32
      %c0_i32_94 = arith.constant 0 : i32
      %104 = tpu.memref_slice %arg5[%c0_i32_89, %c3_i32_93, %c0_i32_94] : memref<4x8x128xf32, #tpu.memory_space<vmem>> -> memref<1x1x128xf32, #tpu.memory_space<vmem>>
      %105 = tpu.memref_squeeze %104 : memref<1x1x128xf32, #tpu.memory_space<vmem>> -> memref<1x128xf32, #tpu.memory_space<vmem>>
      %106 = tpu.memref_slice %arg9[%c0_i32_90, %c3_i32_91] : memref<4x8x!tpu.dma_semaphore, #tpu.memory_space<semaphore_mem>> -> memref<1x1x!tpu.dma_semaphore, #tpu.memory_space<semaphore_mem>>
      %107 = tpu.memref_squeeze %106 : memref<1x1x!tpu.dma_semaphore, #tpu.memory_space<semaphore_mem>> -> memref<!tpu.dma_semaphore, #tpu.memory_space<semaphore_mem>>
      tpu.enqueue_dma source(%103 : memref<1x128xf32, #tpu.memory_space<any>>) target(%105 : memref<1x128xf32, #tpu.memory_space<vmem>>) target_semaphore(%107 : memref<!tpu.dma_semaphore, #tpu.memory_space<semaphore_mem>>)
      %c13 = arith.constant 13 : index
      %108 = memref.load %arg1[%c13] : memref<32xi32, #tpu.memory_space<smem>>
      %c1_i32_95 = arith.constant 1 : i32
      %c1_i32_96 = arith.constant 1 : i32
      %c3_i32_97 = arith.constant 3 : i32
      %c0_i32_98 = arith.constant 0 : i32
      %109 = tpu.memref_slice %arg2[%108, %c0_i32_98] : memref<256x128xf32, #tpu.memory_space<any>> -> memref<1x128xf32, #tpu.memory_space<any>>
      %c3_i32_99 = arith.constant 3 : i32
      %c0_i32_100 = arith.constant 0 : i32
      %110 = tpu.memref_slice %arg5[%c1_i32_95, %c3_i32_99, %c0_i32_100] : memref<4x8x128xf32, #tpu.memory_space<vmem>> -> memref<1x1x128xf32, #tpu.memory_space<vmem>>
      %111 = tpu.memref_squeeze %110 : memref<1x1x128xf32, #tpu.memory_space<vmem>> -> memref<1x128xf32, #tpu.memory_space<vmem>>
      %112 = tpu.memref_slice %arg9[%c1_i32_96, %c3_i32_97] : memref<4x8x!tpu.dma_semaphore, #tpu.memory_space<semaphore_mem>> -> memref<1x1x!tpu.dma_semaphore, #tpu.memory_space<semaphore_mem>>
      %113 = tpu.memref_squeeze %112 : memref<1x1x!tpu.dma_semaphore, #tpu.memory_space<semaphore_mem>> -> memref<!tpu.dma_semaphore, #tpu.memory_space<semaphore_mem>>
      tpu.enqueue_dma source(%109 : memref<1x128xf32, #tpu.memory_space<any>>) target(%111 : memref<1x128xf32, #tpu.memory_space<vmem>>) target_semaphore(%113 : memref<!tpu.dma_semaphore, #tpu.memory_space<semaphore_mem>>)
      %c14 = arith.constant 14 : index
      %114 = memref.load %arg1[%c14] : memref<32xi32, #tpu.memory_space<smem>>
      %c2_i32_101 = arith.constant 2 : i32
      %c2_i32_102 = arith.constant 2 : i32
      %c3_i32_103 = arith.constant 3 : i32
      %c0_i32_104 = arith.constant 0 : i32
      %115 = tpu.memref_slice %arg2[%114, %c0_i32_104] : memref<256x128xf32, #tpu.memory_space<any>> -> memref<1x128xf32, #tpu.memory_space<any>>
      %c3_i32_105 = arith.constant 3 : i32
      %c0_i32_106 = arith.constant 0 : i32
      %116 = tpu.memref_slice %arg5[%c2_i32_101, %c3_i32_105, %c0_i32_106] : memref<4x8x128xf32, #tpu.memory_space<vmem>> -> memref<1x1x128xf32, #tpu.memory_space<vmem>>
      %117 = tpu.memref_squeeze %116 : memref<1x1x128xf32, #tpu.memory_space<vmem>> -> memref<1x128xf32, #tpu.memory_space<vmem>>
      %118 = tpu.memref_slice %arg9[%c2_i32_102, %c3_i32_103] : memref<4x8x!tpu.dma_semaphore, #tpu.memory_space<semaphore_mem>> -> memref<1x1x!tpu.dma_semaphore, #tpu.memory_space<semaphore_mem>>
      %119 = tpu.memref_squeeze %118 : memref<1x1x!tpu.dma_semaphore, #tpu.memory_space<semaphore_mem>> -> memref<!tpu.dma_semaphore, #tpu.memory_space<semaphore_mem>>
      tpu.enqueue_dma source(%115 : memref<1x128xf32, #tpu.memory_space<any>>) target(%117 : memref<1x128xf32, #tpu.memory_space<vmem>>) target_semaphore(%119 : memref<!tpu.dma_semaphore, #tpu.memory_space<semaphore_mem>>)
      %c15 = arith.constant 15 : index
      %120 = memref.load %arg1[%c15] : memref<32xi32, #tpu.memory_space<smem>>
      %c3_i32_107 = arith.constant 3 : i32
      %c3_i32_108 = arith.constant 3 : i32
      %c3_i32_109 = arith.constant 3 : i32
      %c0_i32_110 = arith.constant 0 : i32
      %121 = tpu.memref_slice %arg2[%120, %c0_i32_110] : memref<256x128xf32, #tpu.memory_space<any>> -> memref<1x128xf32, #tpu.memory_space<any>>
      %c3_i32_111 = arith.constant 3 : i32
      %c0_i32_112 = arith.constant 0 : i32
      %122 = tpu.memref_slice %arg5[%c3_i32_107, %c3_i32_111, %c0_i32_112] : memref<4x8x128xf32, #tpu.memory_space<vmem>> -> memref<1x1x128xf32, #tpu.memory_space<vmem>>
      %123 = tpu.memref_squeeze %122 : memref<1x1x128xf32, #tpu.memory_space<vmem>> -> memref<1x128xf32, #tpu.memory_space<vmem>>
      %124 = tpu.memref_slice %arg9[%c3_i32_108, %c3_i32_109] : memref<4x8x!tpu.dma_semaphore, #tpu.memory_space<semaphore_mem>> -> memref<1x1x!tpu.dma_semaphore, #tpu.memory_space<semaphore_mem>>
      %125 = tpu.memref_squeeze %124 : memref<1x1x!tpu.dma_semaphore, #tpu.memory_space<semaphore_mem>> -> memref<!tpu.dma_semaphore, #tpu.memory_space<semaphore_mem>>
      tpu.enqueue_dma source(%121 : memref<1x128xf32, #tpu.memory_space<any>>) target(%123 : memref<1x128xf32, #tpu.memory_space<vmem>>) target_semaphore(%125 : memref<!tpu.dma_semaphore, #tpu.memory_space<semaphore_mem>>)
      %c16 = arith.constant 16 : index
      %126 = memref.load %arg1[%c16] : memref<32xi32, #tpu.memory_space<smem>>
      %c0_i32_113 = arith.constant 0 : i32
      %c0_i32_114 = arith.constant 0 : i32
      %c4_i32 = arith.constant 4 : i32
      %c0_i32_115 = arith.constant 0 : i32
      %127 = tpu.memref_slice %arg2[%126, %c0_i32_115] : memref<256x128xf32, #tpu.memory_space<any>> -> memref<1x128xf32, #tpu.memory_space<any>>
      %c4_i32_116 = arith.constant 4 : i32
      %c0_i32_117 = arith.constant 0 : i32
      %128 = tpu.memref_slice %arg5[%c0_i32_113, %c4_i32_116, %c0_i32_117] : memref<4x8x128xf32, #tpu.memory_space<vmem>> -> memref<1x1x128xf32, #tpu.memory_space<vmem>>
      %129 = tpu.memref_squeeze %128 : memref<1x1x128xf32, #tpu.memory_space<vmem>> -> memref<1x128xf32, #tpu.memory_space<vmem>>
      %130 = tpu.memref_slice %arg9[%c0_i32_114, %c4_i32] : memref<4x8x!tpu.dma_semaphore, #tpu.memory_space<semaphore_mem>> -> memref<1x1x!tpu.dma_semaphore, #tpu.memory_space<semaphore_mem>>
      %131 = tpu.memref_squeeze %130 : memref<1x1x!tpu.dma_semaphore, #tpu.memory_space<semaphore_mem>> -> memref<!tpu.dma_semaphore, #tpu.memory_space<semaphore_mem>>
      tpu.enqueue_dma source(%127 : memref<1x128xf32, #tpu.memory_space<any>>) target(%129 : memref<1x128xf32, #tpu.memory_space<vmem>>) target_semaphore(%131 : memref<!tpu.dma_semaphore, #tpu.memory_space<semaphore_mem>>)
      %c17 = arith.constant 17 : index
      %132 = memref.load %arg1[%c17] : memref<32xi32, #tpu.memory_space<smem>>
      %c1_i32_118 = arith.constant 1 : i32
      %c1_i32_119 = arith.constant 1 : i32
      %c4_i32_120 = arith.constant 4 : i32
      %c0_i32_121 = arith.constant 0 : i32
      %133 = tpu.memref_slice %arg2[%132, %c0_i32_121] : memref<256x128xf32, #tpu.memory_space<any>> -> memref<1x128xf32, #tpu.memory_space<any>>
      %c4_i32_122 = arith.constant 4 : i32
      %c0_i32_123 = arith.constant 0 : i32
      %134 = tpu.memref_slice %arg5[%c1_i32_118, %c4_i32_122, %c0_i32_123] : memref<4x8x128xf32, #tpu.memory_space<vmem>> -> memref<1x1x128xf32, #tpu.memory_space<vmem>>
      %135 = tpu.memref_squeeze %134 : memref<1x1x128xf32, #tpu.memory_space<vmem>> -> memref<1x128xf32, #tpu.memory_space<vmem>>
      %136 = tpu.memref_slice %arg9[%c1_i32_119, %c4_i32_120] : memref<4x8x!tpu.dma_semaphore, #tpu.memory_space<semaphore_mem>> -> memref<1x1x!tpu.dma_semaphore, #tpu.memory_space<semaphore_mem>>
      %137 = tpu.memref_squeeze %136 : memref<1x1x!tpu.dma_semaphore, #tpu.memory_space<semaphore_mem>> -> memref<!tpu.dma_semaphore, #tpu.memory_space<semaphore_mem>>
      tpu.enqueue_dma source(%133 : memref<1x128xf32, #tpu.memory_space<any>>) target(%135 : memref<1x128xf32, #tpu.memory_space<vmem>>) target_semaphore(%137 : memref<!tpu.dma_semaphore, #tpu.memory_space<semaphore_mem>>)
      %c18 = arith.constant 18 : index
      %138 = memref.load %arg1[%c18] : memref<32xi32, #tpu.memory_space<smem>>
      %c2_i32_124 = arith.constant 2 : i32
      %c2_i32_125 = arith.constant 2 : i32
      %c4_i32_126 = arith.constant 4 : i32
      %c0_i32_127 = arith.constant 0 : i32
      %139 = tpu.memref_slice %arg2[%138, %c0_i32_127] : memref<256x128xf32, #tpu.memory_space<any>> -> memref<1x128xf32, #tpu.memory_space<any>>
      %c4_i32_128 = arith.constant 4 : i32
      %c0_i32_129 = arith.constant 0 : i32
      %140 = tpu.memref_slice %arg5[%c2_i32_124, %c4_i32_128, %c0_i32_129] : memref<4x8x128xf32, #tpu.memory_space<vmem>> -> memref<1x1x128xf32, #tpu.memory_space<vmem>>
      %141 = tpu.memref_squeeze %140 : memref<1x1x128xf32, #tpu.memory_space<vmem>> -> memref<1x128xf32, #tpu.memory_space<vmem>>
      %142 = tpu.memref_slice %arg9[%c2_i32_125, %c4_i32_126] : memref<4x8x!tpu.dma_semaphore, #tpu.memory_space<semaphore_mem>> -> memref<1x1x!tpu.dma_semaphore, #tpu.memory_space<semaphore_mem>>
      %143 = tpu.memref_squeeze %142 : memref<1x1x!tpu.dma_semaphore, #tpu.memory_space<semaphore_mem>> -> memref<!tpu.dma_semaphore, #tpu.memory_space<semaphore_mem>>
      tpu.enqueue_dma source(%139 : memref<1x128xf32, #tpu.memory_space<any>>) target(%141 : memref<1x128xf32, #tpu.memory_space<vmem>>) target_semaphore(%143 : memref<!tpu.dma_semaphore, #tpu.memory_space<semaphore_mem>>)
      %c19 = arith.constant 19 : index
      %144 = memref.load %arg1[%c19] : memref<32xi32, #tpu.memory_space<smem>>
      %c3_i32_130 = arith.constant 3 : i32
      %c3_i32_131 = arith.constant 3 : i32
      %c4_i32_132 = arith.constant 4 : i32
      %c0_i32_133 = arith.constant 0 : i32
      %145 = tpu.memref_slice %arg2[%144, %c0_i32_133] : memref<256x128xf32, #tpu.memory_space<any>> -> memref<1x128xf32, #tpu.memory_space<any>>
      %c4_i32_134 = arith.constant 4 : i32
      %c0_i32_135 = arith.constant 0 : i32
      %146 = tpu.memref_slice %arg5[%c3_i32_130, %c4_i32_134, %c0_i32_135] : memref<4x8x128xf32, #tpu.memory_space<vmem>> -> memref<1x1x128xf32, #tpu.memory_space<vmem>>
      %147 = tpu.memref_squeeze %146 : memref<1x1x128xf32, #tpu.memory_space<vmem>> -> memref<1x128xf32, #tpu.memory_space<vmem>>
      %148 = tpu.memref_slice %arg9[%c3_i32_131, %c4_i32_132] : memref<4x8x!tpu.dma_semaphore, #tpu.memory_space<semaphore_mem>> -> memref<1x1x!tpu.dma_semaphore, #tpu.memory_space<semaphore_mem>>
      %149 = tpu.memref_squeeze %148 : memref<1x1x!tpu.dma_semaphore, #tpu.memory_space<semaphore_mem>> -> memref<!tpu.dma_semaphore, #tpu.memory_space<semaphore_mem>>
      tpu.enqueue_dma source(%145 : memref<1x128xf32, #tpu.memory_space<any>>) target(%147 : memref<1x128xf32, #tpu.memory_space<vmem>>) target_semaphore(%149 : memref<!tpu.dma_semaphore, #tpu.memory_space<semaphore_mem>>)
      %c20 = arith.constant 20 : index
      %150 = memref.load %arg1[%c20] : memref<32xi32, #tpu.memory_space<smem>>
      %c0_i32_136 = arith.constant 0 : i32
      %c0_i32_137 = arith.constant 0 : i32
      %c5_i32 = arith.constant 5 : i32
      %c0_i32_138 = arith.constant 0 : i32
      %151 = tpu.memref_slice %arg2[%150, %c0_i32_138] : memref<256x128xf32, #tpu.memory_space<any>> -> memref<1x128xf32, #tpu.memory_space<any>>
      %c5_i32_139 = arith.constant 5 : i32
      %c0_i32_140 = arith.constant 0 : i32
      %152 = tpu.memref_slice %arg5[%c0_i32_136, %c5_i32_139, %c0_i32_140] : memref<4x8x128xf32, #tpu.memory_space<vmem>> -> memref<1x1x128xf32, #tpu.memory_space<vmem>>
      %153 = tpu.memref_squeeze %152 : memref<1x1x128xf32, #tpu.memory_space<vmem>> -> memref<1x128xf32, #tpu.memory_space<vmem>>
      %154 = tpu.memref_slice %arg9[%c0_i32_137, %c5_i32] : memref<4x8x!tpu.dma_semaphore, #tpu.memory_space<semaphore_mem>> -> memref<1x1x!tpu.dma_semaphore, #tpu.memory_space<semaphore_mem>>
      %155 = tpu.memref_squeeze %154 : memref<1x1x!tpu.dma_semaphore, #tpu.memory_space<semaphore_mem>> -> memref<!tpu.dma_semaphore, #tpu.memory_space<semaphore_mem>>
      tpu.enqueue_dma source(%151 : memref<1x128xf32, #tpu.memory_space<any>>) target(%153 : memref<1x128xf32, #tpu.memory_space<vmem>>) target_semaphore(%155 : memref<!tpu.dma_semaphore, #tpu.memory_space<semaphore_mem>>)
      %c21 = arith.constant 21 : index
      %156 = memref.load %arg1[%c21] : memref<32xi32, #tpu.memory_space<smem>>
      %c1_i32_141 = arith.constant 1 : i32
      %c1_i32_142 = arith.constant 1 : i32
      %c5_i32_143 = arith.constant 5 : i32
      %c0_i32_144 = arith.constant 0 : i32
      %157 = tpu.memref_slice %arg2[%156, %c0_i32_144] : memref<256x128xf32, #tpu.memory_space<any>> -> memref<1x128xf32, #tpu.memory_space<any>>
      %c5_i32_145 = arith.constant 5 : i32
      %c0_i32_146 = arith.constant 0 : i32
      %158 = tpu.memref_slice %arg5[%c1_i32_141, %c5_i32_145, %c0_i32_146] : memref<4x8x128xf32, #tpu.memory_space<vmem>> -> memref<1x1x128xf32, #tpu.memory_space<vmem>>
      %159 = tpu.memref_squeeze %158 : memref<1x1x128xf32, #tpu.memory_space<vmem>> -> memref<1x128xf32, #tpu.memory_space<vmem>>
      %160 = tpu.memref_slice %arg9[%c1_i32_142, %c5_i32_143] : memref<4x8x!tpu.dma_semaphore, #tpu.memory_space<semaphore_mem>> -> memref<1x1x!tpu.dma_semaphore, #tpu.memory_space<semaphore_mem>>
      %161 = tpu.memref_squeeze %160 : memref<1x1x!tpu.dma_semaphore, #tpu.memory_space<semaphore_mem>> -> memref<!tpu.dma_semaphore, #tpu.memory_space<semaphore_mem>>
      tpu.enqueue_dma source(%157 : memref<1x128xf32, #tpu.memory_space<any>>) target(%159 : memref<1x128xf32, #tpu.memory_space<vmem>>) target_semaphore(%161 : memref<!tpu.dma_semaphore, #tpu.memory_space<semaphore_mem>>)
      %c22 = arith.constant 22 : index
      %162 = memref.load %arg1[%c22] : memref<32xi32, #tpu.memory_space<smem>>
      %c2_i32_147 = arith.constant 2 : i32
      %c2_i32_148 = arith.constant 2 : i32
      %c5_i32_149 = arith.constant 5 : i32
      %c0_i32_150 = arith.constant 0 : i32
      %163 = tpu.memref_slice %arg2[%162, %c0_i32_150] : memref<256x128xf32, #tpu.memory_space<any>> -> memref<1x128xf32, #tpu.memory_space<any>>
      %c5_i32_151 = arith.constant 5 : i32
      %c0_i32_152 = arith.constant 0 : i32
      %164 = tpu.memref_slice %arg5[%c2_i32_147, %c5_i32_151, %c0_i32_152] : memref<4x8x128xf32, #tpu.memory_space<vmem>> -> memref<1x1x128xf32, #tpu.memory_space<vmem>>
      %165 = tpu.memref_squeeze %164 : memref<1x1x128xf32, #tpu.memory_space<vmem>> -> memref<1x128xf32, #tpu.memory_space<vmem>>
      %166 = tpu.memref_slice %arg9[%c2_i32_148, %c5_i32_149] : memref<4x8x!tpu.dma_semaphore, #tpu.memory_space<semaphore_mem>> -> memref<1x1x!tpu.dma_semaphore, #tpu.memory_space<semaphore_mem>>
      %167 = tpu.memref_squeeze %166 : memref<1x1x!tpu.dma_semaphore, #tpu.memory_space<semaphore_mem>> -> memref<!tpu.dma_semaphore, #tpu.memory_space<semaphore_mem>>
      tpu.enqueue_dma source(%163 : memref<1x128xf32, #tpu.memory_space<any>>) target(%165 : memref<1x128xf32, #tpu.memory_space<vmem>>) target_semaphore(%167 : memref<!tpu.dma_semaphore, #tpu.memory_space<semaphore_mem>>)
      %c23 = arith.constant 23 : index
      %168 = memref.load %arg1[%c23] : memref<32xi32, #tpu.memory_space<smem>>
      %c3_i32_153 = arith.constant 3 : i32
      %c3_i32_154 = arith.constant 3 : i32
      %c5_i32_155 = arith.constant 5 : i32
      %c0_i32_156 = arith.constant 0 : i32
      %169 = tpu.memref_slice %arg2[%168, %c0_i32_156] : memref<256x128xf32, #tpu.memory_space<any>> -> memref<1x128xf32, #tpu.memory_space<any>>
      %c5_i32_157 = arith.constant 5 : i32
      %c0_i32_158 = arith.constant 0 : i32
      %170 = tpu.memref_slice %arg5[%c3_i32_153, %c5_i32_157, %c0_i32_158] : memref<4x8x128xf32, #tpu.memory_space<vmem>> -> memref<1x1x128xf32, #tpu.memory_space<vmem>>
      %171 = tpu.memref_squeeze %170 : memref<1x1x128xf32, #tpu.memory_space<vmem>> -> memref<1x128xf32, #tpu.memory_space<vmem>>
      %172 = tpu.memref_slice %arg9[%c3_i32_154, %c5_i32_155] : memref<4x8x!tpu.dma_semaphore, #tpu.memory_space<semaphore_mem>> -> memref<1x1x!tpu.dma_semaphore, #tpu.memory_space<semaphore_mem>>
      %173 = tpu.memref_squeeze %172 : memref<1x1x!tpu.dma_semaphore, #tpu.memory_space<semaphore_mem>> -> memref<!tpu.dma_semaphore, #tpu.memory_space<semaphore_mem>>
      tpu.enqueue_dma source(%169 : memref<1x128xf32, #tpu.memory_space<any>>) target(%171 : memref<1x128xf32, #tpu.memory_space<vmem>>) target_semaphore(%173 : memref<!tpu.dma_semaphore, #tpu.memory_space<semaphore_mem>>)
      %c24 = arith.constant 24 : index
      %174 = memref.load %arg1[%c24] : memref<32xi32, #tpu.memory_space<smem>>
      %c0_i32_159 = arith.constant 0 : i32
      %c0_i32_160 = arith.constant 0 : i32
      %c6_i32 = arith.constant 6 : i32
      %c0_i32_161 = arith.constant 0 : i32
      %175 = tpu.memref_slice %arg2[%174, %c0_i32_161] : memref<256x128xf32, #tpu.memory_space<any>> -> memref<1x128xf32, #tpu.memory_space<any>>
      %c6_i32_162 = arith.constant 6 : i32
      %c0_i32_163 = arith.constant 0 : i32
      %176 = tpu.memref_slice %arg5[%c0_i32_159, %c6_i32_162, %c0_i32_163] : memref<4x8x128xf32, #tpu.memory_space<vmem>> -> memref<1x1x128xf32, #tpu.memory_space<vmem>>
      %177 = tpu.memref_squeeze %176 : memref<1x1x128xf32, #tpu.memory_space<vmem>> -> memref<1x128xf32, #tpu.memory_space<vmem>>
      %178 = tpu.memref_slice %arg9[%c0_i32_160, %c6_i32] : memref<4x8x!tpu.dma_semaphore, #tpu.memory_space<semaphore_mem>> -> memref<1x1x!tpu.dma_semaphore, #tpu.memory_space<semaphore_mem>>
      %179 = tpu.memref_squeeze %178 : memref<1x1x!tpu.dma_semaphore, #tpu.memory_space<semaphore_mem>> -> memref<!tpu.dma_semaphore, #tpu.memory_space<semaphore_mem>>
      tpu.enqueue_dma source(%175 : memref<1x128xf32, #tpu.memory_space<any>>) target(%177 : memref<1x128xf32, #tpu.memory_space<vmem>>) target_semaphore(%179 : memref<!tpu.dma_semaphore, #tpu.memory_space<semaphore_mem>>)
      %c25 = arith.constant 25 : index
      %180 = memref.load %arg1[%c25] : memref<32xi32, #tpu.memory_space<smem>>
      %c1_i32_164 = arith.constant 1 : i32
      %c1_i32_165 = arith.constant 1 : i32
      %c6_i32_166 = arith.constant 6 : i32
      %c0_i32_167 = arith.constant 0 : i32
      %181 = tpu.memref_slice %arg2[%180, %c0_i32_167] : memref<256x128xf32, #tpu.memory_space<any>> -> memref<1x128xf32, #tpu.memory_space<any>>
      %c6_i32_168 = arith.constant 6 : i32
      %c0_i32_169 = arith.constant 0 : i32
      %182 = tpu.memref_slice %arg5[%c1_i32_164, %c6_i32_168, %c0_i32_169] : memref<4x8x128xf32, #tpu.memory_space<vmem>> -> memref<1x1x128xf32, #tpu.memory_space<vmem>>
      %183 = tpu.memref_squeeze %182 : memref<1x1x128xf32, #tpu.memory_space<vmem>> -> memref<1x128xf32, #tpu.memory_space<vmem>>
      %184 = tpu.memref_slice %arg9[%c1_i32_165, %c6_i32_166] : memref<4x8x!tpu.dma_semaphore, #tpu.memory_space<semaphore_mem>> -> memref<1x1x!tpu.dma_semaphore, #tpu.memory_space<semaphore_mem>>
      %185 = tpu.memref_squeeze %184 : memref<1x1x!tpu.dma_semaphore, #tpu.memory_space<semaphore_mem>> -> memref<!tpu.dma_semaphore, #tpu.memory_space<semaphore_mem>>
      tpu.enqueue_dma source(%181 : memref<1x128xf32, #tpu.memory_space<any>>) target(%183 : memref<1x128xf32, #tpu.memory_space<vmem>>) target_semaphore(%185 : memref<!tpu.dma_semaphore, #tpu.memory_space<semaphore_mem>>)
      %c26 = arith.constant 26 : index
      %186 = memref.load %arg1[%c26] : memref<32xi32, #tpu.memory_space<smem>>
      %c2_i32_170 = arith.constant 2 : i32
      %c2_i32_171 = arith.constant 2 : i32
      %c6_i32_172 = arith.constant 6 : i32
      %c0_i32_173 = arith.constant 0 : i32
      %187 = tpu.memref_slice %arg2[%186, %c0_i32_173] : memref<256x128xf32, #tpu.memory_space<any>> -> memref<1x128xf32, #tpu.memory_space<any>>
      %c6_i32_174 = arith.constant 6 : i32
      %c0_i32_175 = arith.constant 0 : i32
      %188 = tpu.memref_slice %arg5[%c2_i32_170, %c6_i32_174, %c0_i32_175] : memref<4x8x128xf32, #tpu.memory_space<vmem>> -> memref<1x1x128xf32, #tpu.memory_space<vmem>>
      %189 = tpu.memref_squeeze %188 : memref<1x1x128xf32, #tpu.memory_space<vmem>> -> memref<1x128xf32, #tpu.memory_space<vmem>>
      %190 = tpu.memref_slice %arg9[%c2_i32_171, %c6_i32_172] : memref<4x8x!tpu.dma_semaphore, #tpu.memory_space<semaphore_mem>> -> memref<1x1x!tpu.dma_semaphore, #tpu.memory_space<semaphore_mem>>
      %191 = tpu.memref_squeeze %190 : memref<1x1x!tpu.dma_semaphore, #tpu.memory_space<semaphore_mem>> -> memref<!tpu.dma_semaphore, #tpu.memory_space<semaphore_mem>>
      tpu.enqueue_dma source(%187 : memref<1x128xf32, #tpu.memory_space<any>>) target(%189 : memref<1x128xf32, #tpu.memory_space<vmem>>) target_semaphore(%191 : memref<!tpu.dma_semaphore, #tpu.memory_space<semaphore_mem>>)
      %c27 = arith.constant 27 : index
      %192 = memref.load %arg1[%c27] : memref<32xi32, #tpu.memory_space<smem>>
      %c3_i32_176 = arith.constant 3 : i32
      %c3_i32_177 = arith.constant 3 : i32
      %c6_i32_178 = arith.constant 6 : i32
      %c0_i32_179 = arith.constant 0 : i32
      %193 = tpu.memref_slice %arg2[%192, %c0_i32_179] : memref<256x128xf32, #tpu.memory_space<any>> -> memref<1x128xf32, #tpu.memory_space<any>>
      %c6_i32_180 = arith.constant 6 : i32
      %c0_i32_181 = arith.constant 0 : i32
      %194 = tpu.memref_slice %arg5[%c3_i32_176, %c6_i32_180, %c0_i32_181] : memref<4x8x128xf32, #tpu.memory_space<vmem>> -> memref<1x1x128xf32, #tpu.memory_space<vmem>>
      %195 = tpu.memref_squeeze %194 : memref<1x1x128xf32, #tpu.memory_space<vmem>> -> memref<1x128xf32, #tpu.memory_space<vmem>>
      %196 = tpu.memref_slice %arg9[%c3_i32_177, %c6_i32_178] : memref<4x8x!tpu.dma_semaphore, #tpu.memory_space<semaphore_mem>> -> memref<1x1x!tpu.dma_semaphore, #tpu.memory_space<semaphore_mem>>
      %197 = tpu.memref_squeeze %196 : memref<1x1x!tpu.dma_semaphore, #tpu.memory_space<semaphore_mem>> -> memref<!tpu.dma_semaphore, #tpu.memory_space<semaphore_mem>>
      tpu.enqueue_dma source(%193 : memref<1x128xf32, #tpu.memory_space<any>>) target(%195 : memref<1x128xf32, #tpu.memory_space<vmem>>) target_semaphore(%197 : memref<!tpu.dma_semaphore, #tpu.memory_space<semaphore_mem>>)
      %c28 = arith.constant 28 : index
      %198 = memref.load %arg1[%c28] : memref<32xi32, #tpu.memory_space<smem>>
      %c0_i32_182 = arith.constant 0 : i32
      %c0_i32_183 = arith.constant 0 : i32
      %c7_i32 = arith.constant 7 : i32
      %c0_i32_184 = arith.constant 0 : i32
      %199 = tpu.memref_slice %arg2[%198, %c0_i32_184] : memref<256x128xf32, #tpu.memory_space<any>> -> memref<1x128xf32, #tpu.memory_space<any>>
      %c7_i32_185 = arith.constant 7 : i32
      %c0_i32_186 = arith.constant 0 : i32
      %200 = tpu.memref_slice %arg5[%c0_i32_182, %c7_i32_185, %c0_i32_186] : memref<4x8x128xf32, #tpu.memory_space<vmem>> -> memref<1x1x128xf32, #tpu.memory_space<vmem>>
      %201 = tpu.memref_squeeze %200 : memref<1x1x128xf32, #tpu.memory_space<vmem>> -> memref<1x128xf32, #tpu.memory_space<vmem>>
      %202 = tpu.memref_slice %arg9[%c0_i32_183, %c7_i32] : memref<4x8x!tpu.dma_semaphore, #tpu.memory_space<semaphore_mem>> -> memref<1x1x!tpu.dma_semaphore, #tpu.memory_space<semaphore_mem>>
      %203 = tpu.memref_squeeze %202 : memref<1x1x!tpu.dma_semaphore, #tpu.memory_space<semaphore_mem>> -> memref<!tpu.dma_semaphore, #tpu.memory_space<semaphore_mem>>
      tpu.enqueue_dma source(%199 : memref<1x128xf32, #tpu.memory_space<any>>) target(%201 : memref<1x128xf32, #tpu.memory_space<vmem>>) target_semaphore(%203 : memref<!tpu.dma_semaphore, #tpu.memory_space<semaphore_mem>>)
      %c29 = arith.constant 29 : index
      %204 = memref.load %arg1[%c29] : memref<32xi32, #tpu.memory_space<smem>>
      %c1_i32_187 = arith.constant 1 : i32
      %c1_i32_188 = arith.constant 1 : i32
      %c7_i32_189 = arith.constant 7 : i32
      %c0_i32_190 = arith.constant 0 : i32
      %205 = tpu.memref_slice %arg2[%204, %c0_i32_190] : memref<256x128xf32, #tpu.memory_space<any>> -> memref<1x128xf32, #tpu.memory_space<any>>
      %c7_i32_191 = arith.constant 7 : i32
      %c0_i32_192 = arith.constant 0 : i32
      %206 = tpu.memref_slice %arg5[%c1_i32_187, %c7_i32_191, %c0_i32_192] : memref<4x8x128xf32, #tpu.memory_space<vmem>> -> memref<1x1x128xf32, #tpu.memory_space<vmem>>
      %207 = tpu.memref_squeeze %206 : memref<1x1x128xf32, #tpu.memory_space<vmem>> -> memref<1x128xf32, #tpu.memory_space<vmem>>
      %208 = tpu.memref_slice %arg9[%c1_i32_188, %c7_i32_189] : memref<4x8x!tpu.dma_semaphore, #tpu.memory_space<semaphore_mem>> -> memref<1x1x!tpu.dma_semaphore, #tpu.memory_space<semaphore_mem>>
      %209 = tpu.memref_squeeze %208 : memref<1x1x!tpu.dma_semaphore, #tpu.memory_space<semaphore_mem>> -> memref<!tpu.dma_semaphore, #tpu.memory_space<semaphore_mem>>
      tpu.enqueue_dma source(%205 : memref<1x128xf32, #tpu.memory_space<any>>) target(%207 : memref<1x128xf32, #tpu.memory_space<vmem>>) target_semaphore(%209 : memref<!tpu.dma_semaphore, #tpu.memory_space<semaphore_mem>>)
      %c30 = arith.constant 30 : index
      %210 = memref.load %arg1[%c30] : memref<32xi32, #tpu.memory_space<smem>>
      %c2_i32_193 = arith.constant 2 : i32
      %c2_i32_194 = arith.constant 2 : i32
      %c7_i32_195 = arith.constant 7 : i32
      %c0_i32_196 = arith.constant 0 : i32
      %211 = tpu.memref_slice %arg2[%210, %c0_i32_196] : memref<256x128xf32, #tpu.memory_space<any>> -> memref<1x128xf32, #tpu.memory_space<any>>
      %c7_i32_197 = arith.constant 7 : i32
      %c0_i32_198 = arith.constant 0 : i32
      %212 = tpu.memref_slice %arg5[%c2_i32_193, %c7_i32_197, %c0_i32_198] : memref<4x8x128xf32, #tpu.memory_space<vmem>> -> memref<1x1x128xf32, #tpu.memory_space<vmem>>
      %213 = tpu.memref_squeeze %212 : memref<1x1x128xf32, #tpu.memory_space<vmem>> -> memref<1x128xf32, #tpu.memory_space<vmem>>
      %214 = tpu.memref_slice %arg9[%c2_i32_194, %c7_i32_195] : memref<4x8x!tpu.dma_semaphore, #tpu.memory_space<semaphore_mem>> -> memref<1x1x!tpu.dma_semaphore, #tpu.memory_space<semaphore_mem>>
      %215 = tpu.memref_squeeze %214 : memref<1x1x!tpu.dma_semaphore, #tpu.memory_space<semaphore_mem>> -> memref<!tpu.dma_semaphore, #tpu.memory_space<semaphore_mem>>
      tpu.enqueue_dma source(%211 : memref<1x128xf32, #tpu.memory_space<any>>) target(%213 : memref<1x128xf32, #tpu.memory_space<vmem>>) target_semaphore(%215 : memref<!tpu.dma_semaphore, #tpu.memory_space<semaphore_mem>>)
      %c31 = arith.constant 31 : index
      %216 = memref.load %arg1[%c31] : memref<32xi32, #tpu.memory_space<smem>>
      %c3_i32_199 = arith.constant 3 : i32
      %c3_i32_200 = arith.constant 3 : i32
      %c7_i32_201 = arith.constant 7 : i32
      %c0_i32_202 = arith.constant 0 : i32
      %217 = tpu.memref_slice %arg2[%216, %c0_i32_202] : memref<256x128xf32, #tpu.memory_space<any>> -> memref<1x128xf32, #tpu.memory_space<any>>
      %c7_i32_203 = arith.constant 7 : i32
      %c0_i32_204 = arith.constant 0 : i32
      %218 = tpu.memref_slice %arg5[%c3_i32_199, %c7_i32_203, %c0_i32_204] : memref<4x8x128xf32, #tpu.memory_space<vmem>> -> memref<1x1x128xf32, #tpu.memory_space<vmem>>
      %219 = tpu.memref_squeeze %218 : memref<1x1x128xf32, #tpu.memory_space<vmem>> -> memref<1x128xf32, #tpu.memory_space<vmem>>
      %220 = tpu.memref_slice %arg9[%c3_i32_200, %c7_i32_201] : memref<4x8x!tpu.dma_semaphore, #tpu.memory_space<semaphore_mem>> -> memref<1x1x!tpu.dma_semaphore, #tpu.memory_space<semaphore_mem>>
      %221 = tpu.memref_squeeze %220 : memref<1x1x!tpu.dma_semaphore, #tpu.memory_space<semaphore_mem>> -> memref<!tpu.dma_semaphore, #tpu.memory_space<semaphore_mem>>
      tpu.enqueue_dma source(%217 : memref<1x128xf32, #tpu.memory_space<any>>) target(%219 : memref<1x128xf32, #tpu.memory_space<vmem>>) target_semaphore(%221 : memref<!tpu.dma_semaphore, #tpu.memory_space<semaphore_mem>>)
      %c0_i32_205 = arith.constant 0 : i32
      %c0_i32_206 = arith.constant 0 : i32
      %c0_i32_207 = arith.constant 0 : i32
      %c0_i32_208 = arith.constant 0 : i32
      %222 = tpu.memref_slice %arg2[%30, %c0_i32_208] : memref<256x128xf32, #tpu.memory_space<any>> -> memref<1x128xf32, #tpu.memory_space<any>>
      %c0_i32_209 = arith.constant 0 : i32
      %c0_i32_210 = arith.constant 0 : i32
      %223 = tpu.memref_slice %arg5[%c0_i32_205, %c0_i32_209, %c0_i32_210] : memref<4x8x128xf32, #tpu.memory_space<vmem>> -> memref<1x1x128xf32, #tpu.memory_space<vmem>>
      %224 = tpu.memref_squeeze %223 : memref<1x1x128xf32, #tpu.memory_space<vmem>> -> memref<1x128xf32, #tpu.memory_space<vmem>>
      %225 = tpu.memref_slice %arg9[%c0_i32_206, %c0_i32_207] : memref<4x8x!tpu.dma_semaphore, #tpu.memory_space<semaphore_mem>> -> memref<1x1x!tpu.dma_semaphore, #tpu.memory_space<semaphore_mem>>
      %226 = tpu.memref_squeeze %225 : memref<1x1x!tpu.dma_semaphore, #tpu.memory_space<semaphore_mem>> -> memref<!tpu.dma_semaphore, #tpu.memory_space<semaphore_mem>>
      tpu.wait_dma2 semaphore(%226 : memref<!tpu.dma_semaphore, #tpu.memory_space<semaphore_mem>>) src(%222 : memref<1x128xf32, #tpu.memory_space<any>>) dst(%224 : memref<1x128xf32, #tpu.memory_space<vmem>>)
      %c1_i32_211 = arith.constant 1 : i32
      %c1_i32_212 = arith.constant 1 : i32
      %c0_i32_213 = arith.constant 0 : i32
      %c0_i32_214 = arith.constant 0 : i32
      %227 = tpu.memref_slice %arg2[%36, %c0_i32_214] : memref<256x128xf32, #tpu.memory_space<any>> -> memref<1x128xf32, #tpu.memory_space<any>>
      %c0_i32_215 = arith.constant 0 : i32
      %c0_i32_216 = arith.constant 0 : i32
      %228 = tpu.memref_slice %arg5[%c1_i32_211, %c0_i32_215, %c0_i32_216] : memref<4x8x128xf32, #tpu.memory_space<vmem>> -> memref<1x1x128xf32, #tpu.memory_space<vmem>>
      %229 = tpu.memref_squeeze %228 : memref<1x1x128xf32, #tpu.memory_space<vmem>> -> memref<1x128xf32, #tpu.memory_space<vmem>>
      %230 = tpu.memref_slice %arg9[%c1_i32_212, %c0_i32_213] : memref<4x8x!tpu.dma_semaphore, #tpu.memory_space<semaphore_mem>> -> memref<1x1x!tpu.dma_semaphore, #tpu.memory_space<semaphore_mem>>
      %231 = tpu.memref_squeeze %230 : memref<1x1x!tpu.dma_semaphore, #tpu.memory_space<semaphore_mem>> -> memref<!tpu.dma_semaphore, #tpu.memory_space<semaphore_mem>>
      tpu.wait_dma2 semaphore(%231 : memref<!tpu.dma_semaphore, #tpu.memory_space<semaphore_mem>>) src(%227 : memref<1x128xf32, #tpu.memory_space<any>>) dst(%229 : memref<1x128xf32, #tpu.memory_space<vmem>>)
      %c2_i32_217 = arith.constant 2 : i32
      %c2_i32_218 = arith.constant 2 : i32
      %c0_i32_219 = arith.constant 0 : i32
      %c0_i32_220 = arith.constant 0 : i32
      %232 = tpu.memref_slice %arg2[%42, %c0_i32_220] : memref<256x128xf32, #tpu.memory_space<any>> -> memref<1x128xf32, #tpu.memory_space<any>>
      %c0_i32_221 = arith.constant 0 : i32
      %c0_i32_222 = arith.constant 0 : i32
      %233 = tpu.memref_slice %arg5[%c2_i32_217, %c0_i32_221, %c0_i32_222] : memref<4x8x128xf32, #tpu.memory_space<vmem>> -> memref<1x1x128xf32, #tpu.memory_space<vmem>>
      %234 = tpu.memref_squeeze %233 : memref<1x1x128xf32, #tpu.memory_space<vmem>> -> memref<1x128xf32, #tpu.memory_space<vmem>>
      %235 = tpu.memref_slice %arg9[%c2_i32_218, %c0_i32_219] : memref<4x8x!tpu.dma_semaphore, #tpu.memory_space<semaphore_mem>> -> memref<1x1x!tpu.dma_semaphore, #tpu.memory_space<semaphore_mem>>
      %236 = tpu.memref_squeeze %235 : memref<1x1x!tpu.dma_semaphore, #tpu.memory_space<semaphore_mem>> -> memref<!tpu.dma_semaphore, #tpu.memory_space<semaphore_mem>>
      tpu.wait_dma2 semaphore(%236 : memref<!tpu.dma_semaphore, #tpu.memory_space<semaphore_mem>>) src(%232 : memref<1x128xf32, #tpu.memory_space<any>>) dst(%234 : memref<1x128xf32, #tpu.memory_space<vmem>>)
      %c3_i32_223 = arith.constant 3 : i32
      %c3_i32_224 = arith.constant 3 : i32
      %c0_i32_225 = arith.constant 0 : i32
      %c0_i32_226 = arith.constant 0 : i32
      %237 = tpu.memref_slice %arg2[%48, %c0_i32_226] : memref<256x128xf32, #tpu.memory_space<any>> -> memref<1x128xf32, #tpu.memory_space<any>>
      %c0_i32_227 = arith.constant 0 : i32
      %c0_i32_228 = arith.constant 0 : i32
      %238 = tpu.memref_slice %arg5[%c3_i32_223, %c0_i32_227, %c0_i32_228] : memref<4x8x128xf32, #tpu.memory_space<vmem>> -> memref<1x1x128xf32, #tpu.memory_space<vmem>>
      %239 = tpu.memref_squeeze %238 : memref<1x1x128xf32, #tpu.memory_space<vmem>> -> memref<1x128xf32, #tpu.memory_space<vmem>>
      %240 = tpu.memref_slice %arg9[%c3_i32_224, %c0_i32_225] : memref<4x8x!tpu.dma_semaphore, #tpu.memory_space<semaphore_mem>> -> memref<1x1x!tpu.dma_semaphore, #tpu.memory_space<semaphore_mem>>
      %241 = tpu.memref_squeeze %240 : memref<1x1x!tpu.dma_semaphore, #tpu.memory_space<semaphore_mem>> -> memref<!tpu.dma_semaphore, #tpu.memory_space<semaphore_mem>>
      tpu.wait_dma2 semaphore(%241 : memref<!tpu.dma_semaphore, #tpu.memory_space<semaphore_mem>>) src(%237 : memref<1x128xf32, #tpu.memory_space<any>>) dst(%239 : memref<1x128xf32, #tpu.memory_space<vmem>>)
      %c0_i32_229 = arith.constant 0 : i32
      %c0_i32_230 = arith.constant 0 : i32
      %c1_i32_231 = arith.constant 1 : i32
      %c0_i32_232 = arith.constant 0 : i32
      %242 = tpu.memref_slice %arg2[%54, %c0_i32_232] : memref<256x128xf32, #tpu.memory_space<any>> -> memref<1x128xf32, #tpu.memory_space<any>>
      %c1_i32_233 = arith.constant 1 : i32
      %c0_i32_234 = arith.constant 0 : i32
      %243 = tpu.memref_slice %arg5[%c0_i32_229, %c1_i32_233, %c0_i32_234] : memref<4x8x128xf32, #tpu.memory_space<vmem>> -> memref<1x1x128xf32, #tpu.memory_space<vmem>>
      %244 = tpu.memref_squeeze %243 : memref<1x1x128xf32, #tpu.memory_space<vmem>> -> memref<1x128xf32, #tpu.memory_space<vmem>>
      %245 = tpu.memref_slice %arg9[%c0_i32_230, %c1_i32_231] : memref<4x8x!tpu.dma_semaphore, #tpu.memory_space<semaphore_mem>> -> memref<1x1x!tpu.dma_semaphore, #tpu.memory_space<semaphore_mem>>
      %246 = tpu.memref_squeeze %245 : memref<1x1x!tpu.dma_semaphore, #tpu.memory_space<semaphore_mem>> -> memref<!tpu.dma_semaphore, #tpu.memory_space<semaphore_mem>>
      tpu.wait_dma2 semaphore(%246 : memref<!tpu.dma_semaphore, #tpu.memory_space<semaphore_mem>>) src(%242 : memref<1x128xf32, #tpu.memory_space<any>>) dst(%244 : memref<1x128xf32, #tpu.memory_space<vmem>>)
      %c1_i32_235 = arith.constant 1 : i32
      %c1_i32_236 = arith.constant 1 : i32
      %c1_i32_237 = arith.constant 1 : i32
      %c0_i32_238 = arith.constant 0 : i32
      %247 = tpu.memref_slice %arg2[%60, %c0_i32_238] : memref<256x128xf32, #tpu.memory_space<any>> -> memref<1x128xf32, #tpu.memory_space<any>>
      %c1_i32_239 = arith.constant 1 : i32
      %c0_i32_240 = arith.constant 0 : i32
      %248 = tpu.memref_slice %arg5[%c1_i32_235, %c1_i32_239, %c0_i32_240] : memref<4x8x128xf32, #tpu.memory_space<vmem>> -> memref<1x1x128xf32, #tpu.memory_space<vmem>>
      %249 = tpu.memref_squeeze %248 : memref<1x1x128xf32, #tpu.memory_space<vmem>> -> memref<1x128xf32, #tpu.memory_space<vmem>>
      %250 = tpu.memref_slice %arg9[%c1_i32_236, %c1_i32_237] : memref<4x8x!tpu.dma_semaphore, #tpu.memory_space<semaphore_mem>> -> memref<1x1x!tpu.dma_semaphore, #tpu.memory_space<semaphore_mem>>
      %251 = tpu.memref_squeeze %250 : memref<1x1x!tpu.dma_semaphore, #tpu.memory_space<semaphore_mem>> -> memref<!tpu.dma_semaphore, #tpu.memory_space<semaphore_mem>>
      tpu.wait_dma2 semaphore(%251 : memref<!tpu.dma_semaphore, #tpu.memory_space<semaphore_mem>>) src(%247 : memref<1x128xf32, #tpu.memory_space<any>>) dst(%249 : memref<1x128xf32, #tpu.memory_space<vmem>>)
      %c2_i32_241 = arith.constant 2 : i32
      %c2_i32_242 = arith.constant 2 : i32
      %c1_i32_243 = arith.constant 1 : i32
      %c0_i32_244 = arith.constant 0 : i32
      %252 = tpu.memref_slice %arg2[%66, %c0_i32_244] : memref<256x128xf32, #tpu.memory_space<any>> -> memref<1x128xf32, #tpu.memory_space<any>>
      %c1_i32_245 = arith.constant 1 : i32
      %c0_i32_246 = arith.constant 0 : i32
      %253 = tpu.memref_slice %arg5[%c2_i32_241, %c1_i32_245, %c0_i32_246] : memref<4x8x128xf32, #tpu.memory_space<vmem>> -> memref<1x1x128xf32, #tpu.memory_space<vmem>>
      %254 = tpu.memref_squeeze %253 : memref<1x1x128xf32, #tpu.memory_space<vmem>> -> memref<1x128xf32, #tpu.memory_space<vmem>>
      %255 = tpu.memref_slice %arg9[%c2_i32_242, %c1_i32_243] : memref<4x8x!tpu.dma_semaphore, #tpu.memory_space<semaphore_mem>> -> memref<1x1x!tpu.dma_semaphore, #tpu.memory_space<semaphore_mem>>
      %256 = tpu.memref_squeeze %255 : memref<1x1x!tpu.dma_semaphore, #tpu.memory_space<semaphore_mem>> -> memref<!tpu.dma_semaphore, #tpu.memory_space<semaphore_mem>>
      tpu.wait_dma2 semaphore(%256 : memref<!tpu.dma_semaphore, #tpu.memory_space<semaphore_mem>>) src(%252 : memref<1x128xf32, #tpu.memory_space<any>>) dst(%254 : memref<1x128xf32, #tpu.memory_space<vmem>>)
      %c3_i32_247 = arith.constant 3 : i32
      %c3_i32_248 = arith.constant 3 : i32
      %c1_i32_249 = arith.constant 1 : i32
      %c0_i32_250 = arith.constant 0 : i32
      %257 = tpu.memref_slice %arg2[%72, %c0_i32_250] : memref<256x128xf32, #tpu.memory_space<any>> -> memref<1x128xf32, #tpu.memory_space<any>>
      %c1_i32_251 = arith.constant 1 : i32
      %c0_i32_252 = arith.constant 0 : i32
      %258 = tpu.memref_slice %arg5[%c3_i32_247, %c1_i32_251, %c0_i32_252] : memref<4x8x128xf32, #tpu.memory_space<vmem>> -> memref<1x1x128xf32, #tpu.memory_space<vmem>>
      %259 = tpu.memref_squeeze %258 : memref<1x1x128xf32, #tpu.memory_space<vmem>> -> memref<1x128xf32, #tpu.memory_space<vmem>>
      %260 = tpu.memref_slice %arg9[%c3_i32_248, %c1_i32_249] : memref<4x8x!tpu.dma_semaphore, #tpu.memory_space<semaphore_mem>> -> memref<1x1x!tpu.dma_semaphore, #tpu.memory_space<semaphore_mem>>
      %261 = tpu.memref_squeeze %260 : memref<1x1x!tpu.dma_semaphore, #tpu.memory_space<semaphore_mem>> -> memref<!tpu.dma_semaphore, #tpu.memory_space<semaphore_mem>>
      tpu.wait_dma2 semaphore(%261 : memref<!tpu.dma_semaphore, #tpu.memory_space<semaphore_mem>>) src(%257 : memref<1x128xf32, #tpu.memory_space<any>>) dst(%259 : memref<1x128xf32, #tpu.memory_space<vmem>>)
      %c0_i32_253 = arith.constant 0 : i32
      %c0_i32_254 = arith.constant 0 : i32
      %c2_i32_255 = arith.constant 2 : i32
      %c0_i32_256 = arith.constant 0 : i32
      %262 = tpu.memref_slice %arg2[%78, %c0_i32_256] : memref<256x128xf32, #tpu.memory_space<any>> -> memref<1x128xf32, #tpu.memory_space<any>>
      %c2_i32_257 = arith.constant 2 : i32
      %c0_i32_258 = arith.constant 0 : i32
      %263 = tpu.memref_slice %arg5[%c0_i32_253, %c2_i32_257, %c0_i32_258] : memref<4x8x128xf32, #tpu.memory_space<vmem>> -> memref<1x1x128xf32, #tpu.memory_space<vmem>>
      %264 = tpu.memref_squeeze %263 : memref<1x1x128xf32, #tpu.memory_space<vmem>> -> memref<1x128xf32, #tpu.memory_space<vmem>>
      %265 = tpu.memref_slice %arg9[%c0_i32_254, %c2_i32_255] : memref<4x8x!tpu.dma_semaphore, #tpu.memory_space<semaphore_mem>> -> memref<1x1x!tpu.dma_semaphore, #tpu.memory_space<semaphore_mem>>
      %266 = tpu.memref_squeeze %265 : memref<1x1x!tpu.dma_semaphore, #tpu.memory_space<semaphore_mem>> -> memref<!tpu.dma_semaphore, #tpu.memory_space<semaphore_mem>>
      tpu.wait_dma2 semaphore(%266 : memref<!tpu.dma_semaphore, #tpu.memory_space<semaphore_mem>>) src(%262 : memref<1x128xf32, #tpu.memory_space<any>>) dst(%264 : memref<1x128xf32, #tpu.memory_space<vmem>>)
      %c1_i32_259 = arith.constant 1 : i32
      %c1_i32_260 = arith.constant 1 : i32
      %c2_i32_261 = arith.constant 2 : i32
      %c0_i32_262 = arith.constant 0 : i32
      %267 = tpu.memref_slice %arg2[%84, %c0_i32_262] : memref<256x128xf32, #tpu.memory_space<any>> -> memref<1x128xf32, #tpu.memory_space<any>>
      %c2_i32_263 = arith.constant 2 : i32
      %c0_i32_264 = arith.constant 0 : i32
      %268 = tpu.memref_slice %arg5[%c1_i32_259, %c2_i32_263, %c0_i32_264] : memref<4x8x128xf32, #tpu.memory_space<vmem>> -> memref<1x1x128xf32, #tpu.memory_space<vmem>>
      %269 = tpu.memref_squeeze %268 : memref<1x1x128xf32, #tpu.memory_space<vmem>> -> memref<1x128xf32, #tpu.memory_space<vmem>>
      %270 = tpu.memref_slice %arg9[%c1_i32_260, %c2_i32_261] : memref<4x8x!tpu.dma_semaphore, #tpu.memory_space<semaphore_mem>> -> memref<1x1x!tpu.dma_semaphore, #tpu.memory_space<semaphore_mem>>
      %271 = tpu.memref_squeeze %270 : memref<1x1x!tpu.dma_semaphore, #tpu.memory_space<semaphore_mem>> -> memref<!tpu.dma_semaphore, #tpu.memory_space<semaphore_mem>>
      tpu.wait_dma2 semaphore(%271 : memref<!tpu.dma_semaphore, #tpu.memory_space<semaphore_mem>>) src(%267 : memref<1x128xf32, #tpu.memory_space<any>>) dst(%269 : memref<1x128xf32, #tpu.memory_space<vmem>>)
      %c2_i32_265 = arith.constant 2 : i32
      %c2_i32_266 = arith.constant 2 : i32
      %c2_i32_267 = arith.constant 2 : i32
      %c0_i32_268 = arith.constant 0 : i32
      %272 = tpu.memref_slice %arg2[%90, %c0_i32_268] : memref<256x128xf32, #tpu.memory_space<any>> -> memref<1x128xf32, #tpu.memory_space<any>>
      %c2_i32_269 = arith.constant 2 : i32
      %c0_i32_270 = arith.constant 0 : i32
      %273 = tpu.memref_slice %arg5[%c2_i32_265, %c2_i32_269, %c0_i32_270] : memref<4x8x128xf32, #tpu.memory_space<vmem>> -> memref<1x1x128xf32, #tpu.memory_space<vmem>>
      %274 = tpu.memref_squeeze %273 : memref<1x1x128xf32, #tpu.memory_space<vmem>> -> memref<1x128xf32, #tpu.memory_space<vmem>>
      %275 = tpu.memref_slice %arg9[%c2_i32_266, %c2_i32_267] : memref<4x8x!tpu.dma_semaphore, #tpu.memory_space<semaphore_mem>> -> memref<1x1x!tpu.dma_semaphore, #tpu.memory_space<semaphore_mem>>
      %276 = tpu.memref_squeeze %275 : memref<1x1x!tpu.dma_semaphore, #tpu.memory_space<semaphore_mem>> -> memref<!tpu.dma_semaphore, #tpu.memory_space<semaphore_mem>>
      tpu.wait_dma2 semaphore(%276 : memref<!tpu.dma_semaphore, #tpu.memory_space<semaphore_mem>>) src(%272 : memref<1x128xf32, #tpu.memory_space<any>>) dst(%274 : memref<1x128xf32, #tpu.memory_space<vmem>>)
      %c3_i32_271 = arith.constant 3 : i32
      %c3_i32_272 = arith.constant 3 : i32
      %c2_i32_273 = arith.constant 2 : i32
      %c0_i32_274 = arith.constant 0 : i32
      %277 = tpu.memref_slice %arg2[%96, %c0_i32_274] : memref<256x128xf32, #tpu.memory_space<any>> -> memref<1x128xf32, #tpu.memory_space<any>>
      %c2_i32_275 = arith.constant 2 : i32
      %c0_i32_276 = arith.constant 0 : i32
      %278 = tpu.memref_slice %arg5[%c3_i32_271, %c2_i32_275, %c0_i32_276] : memref<4x8x128xf32, #tpu.memory_space<vmem>> -> memref<1x1x128xf32, #tpu.memory_space<vmem>>
      %279 = tpu.memref_squeeze %278 : memref<1x1x128xf32, #tpu.memory_space<vmem>> -> memref<1x128xf32, #tpu.memory_space<vmem>>
      %280 = tpu.memref_slice %arg9[%c3_i32_272, %c2_i32_273] : memref<4x8x!tpu.dma_semaphore, #tpu.memory_space<semaphore_mem>> -> memref<1x1x!tpu.dma_semaphore, #tpu.memory_space<semaphore_mem>>
      %281 = tpu.memref_squeeze %280 : memref<1x1x!tpu.dma_semaphore, #tpu.memory_space<semaphore_mem>> -> memref<!tpu.dma_semaphore, #tpu.memory_space<semaphore_mem>>
      tpu.wait_dma2 semaphore(%281 : memref<!tpu.dma_semaphore, #tpu.memory_space<semaphore_mem>>) src(%277 : memref<1x128xf32, #tpu.memory_space<any>>) dst(%279 : memref<1x128xf32, #tpu.memory_space<vmem>>)
      %c0_i32_277 = arith.constant 0 : i32
      %c0_i32_278 = arith.constant 0 : i32
      %c3_i32_279 = arith.constant 3 : i32
      %c0_i32_280 = arith.constant 0 : i32
      %282 = tpu.memref_slice %arg2[%102, %c0_i32_280] : memref<256x128xf32, #tpu.memory_space<any>> -> memref<1x128xf32, #tpu.memory_space<any>>
      %c3_i32_281 = arith.constant 3 : i32
      %c0_i32_282 = arith.constant 0 : i32
      %283 = tpu.memref_slice %arg5[%c0_i32_277, %c3_i32_281, %c0_i32_282] : memref<4x8x128xf32, #tpu.memory_space<vmem>> -> memref<1x1x128xf32, #tpu.memory_space<vmem>>
      %284 = tpu.memref_squeeze %283 : memref<1x1x128xf32, #tpu.memory_space<vmem>> -> memref<1x128xf32, #tpu.memory_space<vmem>>
      %285 = tpu.memref_slice %arg9[%c0_i32_278, %c3_i32_279] : memref<4x8x!tpu.dma_semaphore, #tpu.memory_space<semaphore_mem>> -> memref<1x1x!tpu.dma_semaphore, #tpu.memory_space<semaphore_mem>>
      %286 = tpu.memref_squeeze %285 : memref<1x1x!tpu.dma_semaphore, #tpu.memory_space<semaphore_mem>> -> memref<!tpu.dma_semaphore, #tpu.memory_space<semaphore_mem>>
      tpu.wait_dma2 semaphore(%286 : memref<!tpu.dma_semaphore, #tpu.memory_space<semaphore_mem>>) src(%282 : memref<1x128xf32, #tpu.memory_space<any>>) dst(%284 : memref<1x128xf32, #tpu.memory_space<vmem>>)
      %c1_i32_283 = arith.constant 1 : i32
      %c1_i32_284 = arith.constant 1 : i32
      %c3_i32_285 = arith.constant 3 : i32
      %c0_i32_286 = arith.constant 0 : i32
      %287 = tpu.memref_slice %arg2[%108, %c0_i32_286] : memref<256x128xf32, #tpu.memory_space<any>> -> memref<1x128xf32, #tpu.memory_space<any>>
      %c3_i32_287 = arith.constant 3 : i32
      %c0_i32_288 = arith.constant 0 : i32
      %288 = tpu.memref_slice %arg5[%c1_i32_283, %c3_i32_287, %c0_i32_288] : memref<4x8x128xf32, #tpu.memory_space<vmem>> -> memref<1x1x128xf32, #tpu.memory_space<vmem>>
      %289 = tpu.memref_squeeze %288 : memref<1x1x128xf32, #tpu.memory_space<vmem>> -> memref<1x128xf32, #tpu.memory_space<vmem>>
      %290 = tpu.memref_slice %arg9[%c1_i32_284, %c3_i32_285] : memref<4x8x!tpu.dma_semaphore, #tpu.memory_space<semaphore_mem>> -> memref<1x1x!tpu.dma_semaphore, #tpu.memory_space<semaphore_mem>>
      %291 = tpu.memref_squeeze %290 : memref<1x1x!tpu.dma_semaphore, #tpu.memory_space<semaphore_mem>> -> memref<!tpu.dma_semaphore, #tpu.memory_space<semaphore_mem>>
      tpu.wait_dma2 semaphore(%291 : memref<!tpu.dma_semaphore, #tpu.memory_space<semaphore_mem>>) src(%287 : memref<1x128xf32, #tpu.memory_space<any>>) dst(%289 : memref<1x128xf32, #tpu.memory_space<vmem>>)
      %c2_i32_289 = arith.constant 2 : i32
      %c2_i32_290 = arith.constant 2 : i32
      %c3_i32_291 = arith.constant 3 : i32
      %c0_i32_292 = arith.constant 0 : i32
      %292 = tpu.memref_slice %arg2[%114, %c0_i32_292] : memref<256x128xf32, #tpu.memory_space<any>> -> memref<1x128xf32, #tpu.memory_space<any>>
      %c3_i32_293 = arith.constant 3 : i32
      %c0_i32_294 = arith.constant 0 : i32
      %293 = tpu.memref_slice %arg5[%c2_i32_289, %c3_i32_293, %c0_i32_294] : memref<4x8x128xf32, #tpu.memory_space<vmem>> -> memref<1x1x128xf32, #tpu.memory_space<vmem>>
      %294 = tpu.memref_squeeze %293 : memref<1x1x128xf32, #tpu.memory_space<vmem>> -> memref<1x128xf32, #tpu.memory_space<vmem>>
      %295 = tpu.memref_slice %arg9[%c2_i32_290, %c3_i32_291] : memref<4x8x!tpu.dma_semaphore, #tpu.memory_space<semaphore_mem>> -> memref<1x1x!tpu.dma_semaphore, #tpu.memory_space<semaphore_mem>>
      %296 = tpu.memref_squeeze %295 : memref<1x1x!tpu.dma_semaphore, #tpu.memory_space<semaphore_mem>> -> memref<!tpu.dma_semaphore, #tpu.memory_space<semaphore_mem>>
      tpu.wait_dma2 semaphore(%296 : memref<!tpu.dma_semaphore, #tpu.memory_space<semaphore_mem>>) src(%292 : memref<1x128xf32, #tpu.memory_space<any>>) dst(%294 : memref<1x128xf32, #tpu.memory_space<vmem>>)
      %c3_i32_295 = arith.constant 3 : i32
      %c3_i32_296 = arith.constant 3 : i32
      %c3_i32_297 = arith.constant 3 : i32
      %c0_i32_298 = arith.constant 0 : i32
      %297 = tpu.memref_slice %arg2[%120, %c0_i32_298] : memref<256x128xf32, #tpu.memory_space<any>> -> memref<1x128xf32, #tpu.memory_space<any>>
      %c3_i32_299 = arith.constant 3 : i32
      %c0_i32_300 = arith.constant 0 : i32
      %298 = tpu.memref_slice %arg5[%c3_i32_295, %c3_i32_299, %c0_i32_300] : memref<4x8x128xf32, #tpu.memory_space<vmem>> -> memref<1x1x128xf32, #tpu.memory_space<vmem>>
      %299 = tpu.memref_squeeze %298 : memref<1x1x128xf32, #tpu.memory_space<vmem>> -> memref<1x128xf32, #tpu.memory_space<vmem>>
      %300 = tpu.memref_slice %arg9[%c3_i32_296, %c3_i32_297] : memref<4x8x!tpu.dma_semaphore, #tpu.memory_space<semaphore_mem>> -> memref<1x1x!tpu.dma_semaphore, #tpu.memory_space<semaphore_mem>>
      %301 = tpu.memref_squeeze %300 : memref<1x1x!tpu.dma_semaphore, #tpu.memory_space<semaphore_mem>> -> memref<!tpu.dma_semaphore, #tpu.memory_space<semaphore_mem>>
      tpu.wait_dma2 semaphore(%301 : memref<!tpu.dma_semaphore, #tpu.memory_space<semaphore_mem>>) src(%297 : memref<1x128xf32, #tpu.memory_space<any>>) dst(%299 : memref<1x128xf32, #tpu.memory_space<vmem>>)
      %c0_i32_301 = arith.constant 0 : i32
      %c0_i32_302 = arith.constant 0 : i32
      %c4_i32_303 = arith.constant 4 : i32
      %c0_i32_304 = arith.constant 0 : i32
      %302 = tpu.memref_slice %arg2[%126, %c0_i32_304] : memref<256x128xf32, #tpu.memory_space<any>> -> memref<1x128xf32, #tpu.memory_space<any>>
      %c4_i32_305 = arith.constant 4 : i32
      %c0_i32_306 = arith.constant 0 : i32
      %303 = tpu.memref_slice %arg5[%c0_i32_301, %c4_i32_305, %c0_i32_306] : memref<4x8x128xf32, #tpu.memory_space<vmem>> -> memref<1x1x128xf32, #tpu.memory_space<vmem>>
      %304 = tpu.memref_squeeze %303 : memref<1x1x128xf32, #tpu.memory_space<vmem>> -> memref<1x128xf32, #tpu.memory_space<vmem>>
      %305 = tpu.memref_slice %arg9[%c0_i32_302, %c4_i32_303] : memref<4x8x!tpu.dma_semaphore, #tpu.memory_space<semaphore_mem>> -> memref<1x1x!tpu.dma_semaphore, #tpu.memory_space<semaphore_mem>>
      %306 = tpu.memref_squeeze %305 : memref<1x1x!tpu.dma_semaphore, #tpu.memory_space<semaphore_mem>> -> memref<!tpu.dma_semaphore, #tpu.memory_space<semaphore_mem>>
      tpu.wait_dma2 semaphore(%306 : memref<!tpu.dma_semaphore, #tpu.memory_space<semaphore_mem>>) src(%302 : memref<1x128xf32, #tpu.memory_space<any>>) dst(%304 : memref<1x128xf32, #tpu.memory_space<vmem>>)
      %c1_i32_307 = arith.constant 1 : i32
      %c1_i32_308 = arith.constant 1 : i32
      %c4_i32_309 = arith.constant 4 : i32
      %c0_i32_310 = arith.constant 0 : i32
      %307 = tpu.memref_slice %arg2[%132, %c0_i32_310] : memref<256x128xf32, #tpu.memory_space<any>> -> memref<1x128xf32, #tpu.memory_space<any>>
      %c4_i32_311 = arith.constant 4 : i32
      %c0_i32_312 = arith.constant 0 : i32
      %308 = tpu.memref_slice %arg5[%c1_i32_307, %c4_i32_311, %c0_i32_312] : memref<4x8x128xf32, #tpu.memory_space<vmem>> -> memref<1x1x128xf32, #tpu.memory_space<vmem>>
      %309 = tpu.memref_squeeze %308 : memref<1x1x128xf32, #tpu.memory_space<vmem>> -> memref<1x128xf32, #tpu.memory_space<vmem>>
      %310 = tpu.memref_slice %arg9[%c1_i32_308, %c4_i32_309] : memref<4x8x!tpu.dma_semaphore, #tpu.memory_space<semaphore_mem>> -> memref<1x1x!tpu.dma_semaphore, #tpu.memory_space<semaphore_mem>>
      %311 = tpu.memref_squeeze %310 : memref<1x1x!tpu.dma_semaphore, #tpu.memory_space<semaphore_mem>> -> memref<!tpu.dma_semaphore, #tpu.memory_space<semaphore_mem>>
      tpu.wait_dma2 semaphore(%311 : memref<!tpu.dma_semaphore, #tpu.memory_space<semaphore_mem>>) src(%307 : memref<1x128xf32, #tpu.memory_space<any>>) dst(%309 : memref<1x128xf32, #tpu.memory_space<vmem>>)
      %c2_i32_313 = arith.constant 2 : i32
      %c2_i32_314 = arith.constant 2 : i32
      %c4_i32_315 = arith.constant 4 : i32
      %c0_i32_316 = arith.constant 0 : i32
      %312 = tpu.memref_slice %arg2[%138, %c0_i32_316] : memref<256x128xf32, #tpu.memory_space<any>> -> memref<1x128xf32, #tpu.memory_space<any>>
      %c4_i32_317 = arith.constant 4 : i32
      %c0_i32_318 = arith.constant 0 : i32
      %313 = tpu.memref_slice %arg5[%c2_i32_313, %c4_i32_317, %c0_i32_318] : memref<4x8x128xf32, #tpu.memory_space<vmem>> -> memref<1x1x128xf32, #tpu.memory_space<vmem>>
      %314 = tpu.memref_squeeze %313 : memref<1x1x128xf32, #tpu.memory_space<vmem>> -> memref<1x128xf32, #tpu.memory_space<vmem>>
      %315 = tpu.memref_slice %arg9[%c2_i32_314, %c4_i32_315] : memref<4x8x!tpu.dma_semaphore, #tpu.memory_space<semaphore_mem>> -> memref<1x1x!tpu.dma_semaphore, #tpu.memory_space<semaphore_mem>>
      %316 = tpu.memref_squeeze %315 : memref<1x1x!tpu.dma_semaphore, #tpu.memory_space<semaphore_mem>> -> memref<!tpu.dma_semaphore, #tpu.memory_space<semaphore_mem>>
      tpu.wait_dma2 semaphore(%316 : memref<!tpu.dma_semaphore, #tpu.memory_space<semaphore_mem>>) src(%312 : memref<1x128xf32, #tpu.memory_space<any>>) dst(%314 : memref<1x128xf32, #tpu.memory_space<vmem>>)
      %c3_i32_319 = arith.constant 3 : i32
      %c3_i32_320 = arith.constant 3 : i32
      %c4_i32_321 = arith.constant 4 : i32
      %c0_i32_322 = arith.constant 0 : i32
      %317 = tpu.memref_slice %arg2[%144, %c0_i32_322] : memref<256x128xf32, #tpu.memory_space<any>> -> memref<1x128xf32, #tpu.memory_space<any>>
      %c4_i32_323 = arith.constant 4 : i32
      %c0_i32_324 = arith.constant 0 : i32
      %318 = tpu.memref_slice %arg5[%c3_i32_319, %c4_i32_323, %c0_i32_324] : memref<4x8x128xf32, #tpu.memory_space<vmem>> -> memref<1x1x128xf32, #tpu.memory_space<vmem>>
      %319 = tpu.memref_squeeze %318 : memref<1x1x128xf32, #tpu.memory_space<vmem>> -> memref<1x128xf32, #tpu.memory_space<vmem>>
      %320 = tpu.memref_slice %arg9[%c3_i32_320, %c4_i32_321] : memref<4x8x!tpu.dma_semaphore, #tpu.memory_space<semaphore_mem>> -> memref<1x1x!tpu.dma_semaphore, #tpu.memory_space<semaphore_mem>>
      %321 = tpu.memref_squeeze %320 : memref<1x1x!tpu.dma_semaphore, #tpu.memory_space<semaphore_mem>> -> memref<!tpu.dma_semaphore, #tpu.memory_space<semaphore_mem>>
      tpu.wait_dma2 semaphore(%321 : memref<!tpu.dma_semaphore, #tpu.memory_space<semaphore_mem>>) src(%317 : memref<1x128xf32, #tpu.memory_space<any>>) dst(%319 : memref<1x128xf32, #tpu.memory_space<vmem>>)
      %c0_i32_325 = arith.constant 0 : i32
      %c0_i32_326 = arith.constant 0 : i32
      %c5_i32_327 = arith.constant 5 : i32
      %c0_i32_328 = arith.constant 0 : i32
      %322 = tpu.memref_slice %arg2[%150, %c0_i32_328] : memref<256x128xf32, #tpu.memory_space<any>> -> memref<1x128xf32, #tpu.memory_space<any>>
      %c5_i32_329 = arith.constant 5 : i32
      %c0_i32_330 = arith.constant 0 : i32
      %323 = tpu.memref_slice %arg5[%c0_i32_325, %c5_i32_329, %c0_i32_330] : memref<4x8x128xf32, #tpu.memory_space<vmem>> -> memref<1x1x128xf32, #tpu.memory_space<vmem>>
      %324 = tpu.memref_squeeze %323 : memref<1x1x128xf32, #tpu.memory_space<vmem>> -> memref<1x128xf32, #tpu.memory_space<vmem>>
      %325 = tpu.memref_slice %arg9[%c0_i32_326, %c5_i32_327] : memref<4x8x!tpu.dma_semaphore, #tpu.memory_space<semaphore_mem>> -> memref<1x1x!tpu.dma_semaphore, #tpu.memory_space<semaphore_mem>>
      %326 = tpu.memref_squeeze %325 : memref<1x1x!tpu.dma_semaphore, #tpu.memory_space<semaphore_mem>> -> memref<!tpu.dma_semaphore, #tpu.memory_space<semaphore_mem>>
      tpu.wait_dma2 semaphore(%326 : memref<!tpu.dma_semaphore, #tpu.memory_space<semaphore_mem>>) src(%322 : memref<1x128xf32, #tpu.memory_space<any>>) dst(%324 : memref<1x128xf32, #tpu.memory_space<vmem>>)
      %c1_i32_331 = arith.constant 1 : i32
      %c1_i32_332 = arith.constant 1 : i32
      %c5_i32_333 = arith.constant 5 : i32
      %c0_i32_334 = arith.constant 0 : i32
      %327 = tpu.memref_slice %arg2[%156, %c0_i32_334] : memref<256x128xf32, #tpu.memory_space<any>> -> memref<1x128xf32, #tpu.memory_space<any>>
      %c5_i32_335 = arith.constant 5 : i32
      %c0_i32_336 = arith.constant 0 : i32
      %328 = tpu.memref_slice %arg5[%c1_i32_331, %c5_i32_335, %c0_i32_336] : memref<4x8x128xf32, #tpu.memory_space<vmem>> -> memref<1x1x128xf32, #tpu.memory_space<vmem>>
      %329 = tpu.memref_squeeze %328 : memref<1x1x128xf32, #tpu.memory_space<vmem>> -> memref<1x128xf32, #tpu.memory_space<vmem>>
      %330 = tpu.memref_slice %arg9[%c1_i32_332, %c5_i32_333] : memref<4x8x!tpu.dma_semaphore, #tpu.memory_space<semaphore_mem>> -> memref<1x1x!tpu.dma_semaphore, #tpu.memory_space<semaphore_mem>>
      %331 = tpu.memref_squeeze %330 : memref<1x1x!tpu.dma_semaphore, #tpu.memory_space<semaphore_mem>> -> memref<!tpu.dma_semaphore, #tpu.memory_space<semaphore_mem>>
      tpu.wait_dma2 semaphore(%331 : memref<!tpu.dma_semaphore, #tpu.memory_space<semaphore_mem>>) src(%327 : memref<1x128xf32, #tpu.memory_space<any>>) dst(%329 : memref<1x128xf32, #tpu.memory_space<vmem>>)
      %c2_i32_337 = arith.constant 2 : i32
      %c2_i32_338 = arith.constant 2 : i32
      %c5_i32_339 = arith.constant 5 : i32
      %c0_i32_340 = arith.constant 0 : i32
      %332 = tpu.memref_slice %arg2[%162, %c0_i32_340] : memref<256x128xf32, #tpu.memory_space<any>> -> memref<1x128xf32, #tpu.memory_space<any>>
      %c5_i32_341 = arith.constant 5 : i32
      %c0_i32_342 = arith.constant 0 : i32
      %333 = tpu.memref_slice %arg5[%c2_i32_337, %c5_i32_341, %c0_i32_342] : memref<4x8x128xf32, #tpu.memory_space<vmem>> -> memref<1x1x128xf32, #tpu.memory_space<vmem>>
      %334 = tpu.memref_squeeze %333 : memref<1x1x128xf32, #tpu.memory_space<vmem>> -> memref<1x128xf32, #tpu.memory_space<vmem>>
      %335 = tpu.memref_slice %arg9[%c2_i32_338, %c5_i32_339] : memref<4x8x!tpu.dma_semaphore, #tpu.memory_space<semaphore_mem>> -> memref<1x1x!tpu.dma_semaphore, #tpu.memory_space<semaphore_mem>>
      %336 = tpu.memref_squeeze %335 : memref<1x1x!tpu.dma_semaphore, #tpu.memory_space<semaphore_mem>> -> memref<!tpu.dma_semaphore, #tpu.memory_space<semaphore_mem>>
      tpu.wait_dma2 semaphore(%336 : memref<!tpu.dma_semaphore, #tpu.memory_space<semaphore_mem>>) src(%332 : memref<1x128xf32, #tpu.memory_space<any>>) dst(%334 : memref<1x128xf32, #tpu.memory_space<vmem>>)
      %c3_i32_343 = arith.constant 3 : i32
      %c3_i32_344 = arith.constant 3 : i32
      %c5_i32_345 = arith.constant 5 : i32
      %c0_i32_346 = arith.constant 0 : i32
      %337 = tpu.memref_slice %arg2[%168, %c0_i32_346] : memref<256x128xf32, #tpu.memory_space<any>> -> memref<1x128xf32, #tpu.memory_space<any>>
      %c5_i32_347 = arith.constant 5 : i32
      %c0_i32_348 = arith.constant 0 : i32
      %338 = tpu.memref_slice %arg5[%c3_i32_343, %c5_i32_347, %c0_i32_348] : memref<4x8x128xf32, #tpu.memory_space<vmem>> -> memref<1x1x128xf32, #tpu.memory_space<vmem>>
      %339 = tpu.memref_squeeze %338 : memref<1x1x128xf32, #tpu.memory_space<vmem>> -> memref<1x128xf32, #tpu.memory_space<vmem>>
      %340 = tpu.memref_slice %arg9[%c3_i32_344, %c5_i32_345] : memref<4x8x!tpu.dma_semaphore, #tpu.memory_space<semaphore_mem>> -> memref<1x1x!tpu.dma_semaphore, #tpu.memory_space<semaphore_mem>>
      %341 = tpu.memref_squeeze %340 : memref<1x1x!tpu.dma_semaphore, #tpu.memory_space<semaphore_mem>> -> memref<!tpu.dma_semaphore, #tpu.memory_space<semaphore_mem>>
      tpu.wait_dma2 semaphore(%341 : memref<!tpu.dma_semaphore, #tpu.memory_space<semaphore_mem>>) src(%337 : memref<1x128xf32, #tpu.memory_space<any>>) dst(%339 : memref<1x128xf32, #tpu.memory_space<vmem>>)
      %c0_i32_349 = arith.constant 0 : i32
      %c0_i32_350 = arith.constant 0 : i32
      %c6_i32_351 = arith.constant 6 : i32
      %c0_i32_352 = arith.constant 0 : i32
      %342 = tpu.memref_slice %arg2[%174, %c0_i32_352] : memref<256x128xf32, #tpu.memory_space<any>> -> memref<1x128xf32, #tpu.memory_space<any>>
      %c6_i32_353 = arith.constant 6 : i32
      %c0_i32_354 = arith.constant 0 : i32
      %343 = tpu.memref_slice %arg5[%c0_i32_349, %c6_i32_353, %c0_i32_354] : memref<4x8x128xf32, #tpu.memory_space<vmem>> -> memref<1x1x128xf32, #tpu.memory_space<vmem>>
      %344 = tpu.memref_squeeze %343 : memref<1x1x128xf32, #tpu.memory_space<vmem>> -> memref<1x128xf32, #tpu.memory_space<vmem>>
      %345 = tpu.memref_slice %arg9[%c0_i32_350, %c6_i32_351] : memref<4x8x!tpu.dma_semaphore, #tpu.memory_space<semaphore_mem>> -> memref<1x1x!tpu.dma_semaphore, #tpu.memory_space<semaphore_mem>>
      %346 = tpu.memref_squeeze %345 : memref<1x1x!tpu.dma_semaphore, #tpu.memory_space<semaphore_mem>> -> memref<!tpu.dma_semaphore, #tpu.memory_space<semaphore_mem>>
      tpu.wait_dma2 semaphore(%346 : memref<!tpu.dma_semaphore, #tpu.memory_space<semaphore_mem>>) src(%342 : memref<1x128xf32, #tpu.memory_space<any>>) dst(%344 : memref<1x128xf32, #tpu.memory_space<vmem>>)
      %c1_i32_355 = arith.constant 1 : i32
      %c1_i32_356 = arith.constant 1 : i32
      %c6_i32_357 = arith.constant 6 : i32
      %c0_i32_358 = arith.constant 0 : i32
      %347 = tpu.memref_slice %arg2[%180, %c0_i32_358] : memref<256x128xf32, #tpu.memory_space<any>> -> memref<1x128xf32, #tpu.memory_space<any>>
      %c6_i32_359 = arith.constant 6 : i32
      %c0_i32_360 = arith.constant 0 : i32
      %348 = tpu.memref_slice %arg5[%c1_i32_355, %c6_i32_359, %c0_i32_360] : memref<4x8x128xf32, #tpu.memory_space<vmem>> -> memref<1x1x128xf32, #tpu.memory_space<vmem>>
      %349 = tpu.memref_squeeze %348 : memref<1x1x128xf32, #tpu.memory_space<vmem>> -> memref<1x128xf32, #tpu.memory_space<vmem>>
      %350 = tpu.memref_slice %arg9[%c1_i32_356, %c6_i32_357] : memref<4x8x!tpu.dma_semaphore, #tpu.memory_space<semaphore_mem>> -> memref<1x1x!tpu.dma_semaphore, #tpu.memory_space<semaphore_mem>>
      %351 = tpu.memref_squeeze %350 : memref<1x1x!tpu.dma_semaphore, #tpu.memory_space<semaphore_mem>> -> memref<!tpu.dma_semaphore, #tpu.memory_space<semaphore_mem>>
      tpu.wait_dma2 semaphore(%351 : memref<!tpu.dma_semaphore, #tpu.memory_space<semaphore_mem>>) src(%347 : memref<1x128xf32, #tpu.memory_space<any>>) dst(%349 : memref<1x128xf32, #tpu.memory_space<vmem>>)
      %c2_i32_361 = arith.constant 2 : i32
      %c2_i32_362 = arith.constant 2 : i32
      %c6_i32_363 = arith.constant 6 : i32
      %c0_i32_364 = arith.constant 0 : i32
      %352 = tpu.memref_slice %arg2[%186, %c0_i32_364] : memref<256x128xf32, #tpu.memory_space<any>> -> memref<1x128xf32, #tpu.memory_space<any>>
      %c6_i32_365 = arith.constant 6 : i32
      %c0_i32_366 = arith.constant 0 : i32
      %353 = tpu.memref_slice %arg5[%c2_i32_361, %c6_i32_365, %c0_i32_366] : memref<4x8x128xf32, #tpu.memory_space<vmem>> -> memref<1x1x128xf32, #tpu.memory_space<vmem>>
      %354 = tpu.memref_squeeze %353 : memref<1x1x128xf32, #tpu.memory_space<vmem>> -> memref<1x128xf32, #tpu.memory_space<vmem>>
      %355 = tpu.memref_slice %arg9[%c2_i32_362, %c6_i32_363] : memref<4x8x!tpu.dma_semaphore, #tpu.memory_space<semaphore_mem>> -> memref<1x1x!tpu.dma_semaphore, #tpu.memory_space<semaphore_mem>>
      %356 = tpu.memref_squeeze %355 : memref<1x1x!tpu.dma_semaphore, #tpu.memory_space<semaphore_mem>> -> memref<!tpu.dma_semaphore, #tpu.memory_space<semaphore_mem>>
      tpu.wait_dma2 semaphore(%356 : memref<!tpu.dma_semaphore, #tpu.memory_space<semaphore_mem>>) src(%352 : memref<1x128xf32, #tpu.memory_space<any>>) dst(%354 : memref<1x128xf32, #tpu.memory_space<vmem>>)
      %c3_i32_367 = arith.constant 3 : i32
      %c3_i32_368 = arith.constant 3 : i32
      %c6_i32_369 = arith.constant 6 : i32
      %c0_i32_370 = arith.constant 0 : i32
      %357 = tpu.memref_slice %arg2[%192, %c0_i32_370] : memref<256x128xf32, #tpu.memory_space<any>> -> memref<1x128xf32, #tpu.memory_space<any>>
      %c6_i32_371 = arith.constant 6 : i32
      %c0_i32_372 = arith.constant 0 : i32
      %358 = tpu.memref_slice %arg5[%c3_i32_367, %c6_i32_371, %c0_i32_372] : memref<4x8x128xf32, #tpu.memory_space<vmem>> -> memref<1x1x128xf32, #tpu.memory_space<vmem>>
      %359 = tpu.memref_squeeze %358 : memref<1x1x128xf32, #tpu.memory_space<vmem>> -> memref<1x128xf32, #tpu.memory_space<vmem>>
      %360 = tpu.memref_slice %arg9[%c3_i32_368, %c6_i32_369] : memref<4x8x!tpu.dma_semaphore, #tpu.memory_space<semaphore_mem>> -> memref<1x1x!tpu.dma_semaphore, #tpu.memory_space<semaphore_mem>>
      %361 = tpu.memref_squeeze %360 : memref<1x1x!tpu.dma_semaphore, #tpu.memory_space<semaphore_mem>> -> memref<!tpu.dma_semaphore, #tpu.memory_space<semaphore_mem>>
      tpu.wait_dma2 semaphore(%361 : memref<!tpu.dma_semaphore, #tpu.memory_space<semaphore_mem>>) src(%357 : memref<1x128xf32, #tpu.memory_space<any>>) dst(%359 : memref<1x128xf32, #tpu.memory_space<vmem>>)
      %c0_i32_373 = arith.constant 0 : i32
      %c0_i32_374 = arith.constant 0 : i32
      %c7_i32_375 = arith.constant 7 : i32
      %c0_i32_376 = arith.constant 0 : i32
      %362 = tpu.memref_slice %arg2[%198, %c0_i32_376] : memref<256x128xf32, #tpu.memory_space<any>> -> memref<1x128xf32, #tpu.memory_space<any>>
      %c7_i32_377 = arith.constant 7 : i32
      %c0_i32_378 = arith.constant 0 : i32
      %363 = tpu.memref_slice %arg5[%c0_i32_373, %c7_i32_377, %c0_i32_378] : memref<4x8x128xf32, #tpu.memory_space<vmem>> -> memref<1x1x128xf32, #tpu.memory_space<vmem>>
      %364 = tpu.memref_squeeze %363 : memref<1x1x128xf32, #tpu.memory_space<vmem>> -> memref<1x128xf32, #tpu.memory_space<vmem>>
      %365 = tpu.memref_slice %arg9[%c0_i32_374, %c7_i32_375] : memref<4x8x!tpu.dma_semaphore, #tpu.memory_space<semaphore_mem>> -> memref<1x1x!tpu.dma_semaphore, #tpu.memory_space<semaphore_mem>>
      %366 = tpu.memref_squeeze %365 : memref<1x1x!tpu.dma_semaphore, #tpu.memory_space<semaphore_mem>> -> memref<!tpu.dma_semaphore, #tpu.memory_space<semaphore_mem>>
      tpu.wait_dma2 semaphore(%366 : memref<!tpu.dma_semaphore, #tpu.memory_space<semaphore_mem>>) src(%362 : memref<1x128xf32, #tpu.memory_space<any>>) dst(%364 : memref<1x128xf32, #tpu.memory_space<vmem>>)
      %c1_i32_379 = arith.constant 1 : i32
      %c1_i32_380 = arith.constant 1 : i32
      %c7_i32_381 = arith.constant 7 : i32
      %c0_i32_382 = arith.constant 0 : i32
      %367 = tpu.memref_slice %arg2[%204, %c0_i32_382] : memref<256x128xf32, #tpu.memory_space<any>> -> memref<1x128xf32, #tpu.memory_space<any>>
      %c7_i32_383 = arith.constant 7 : i32
      %c0_i32_384 = arith.constant 0 : i32
      %368 = tpu.memref_slice %arg5[%c1_i32_379, %c7_i32_383, %c0_i32_384] : memref<4x8x128xf32, #tpu.memory_space<vmem>> -> memref<1x1x128xf32, #tpu.memory_space<vmem>>
      %369 = tpu.memref_squeeze %368 : memref<1x1x128xf32, #tpu.memory_space<vmem>> -> memref<1x128xf32, #tpu.memory_space<vmem>>
      %370 = tpu.memref_slice %arg9[%c1_i32_380, %c7_i32_381] : memref<4x8x!tpu.dma_semaphore, #tpu.memory_space<semaphore_mem>> -> memref<1x1x!tpu.dma_semaphore, #tpu.memory_space<semaphore_mem>>
      %371 = tpu.memref_squeeze %370 : memref<1x1x!tpu.dma_semaphore, #tpu.memory_space<semaphore_mem>> -> memref<!tpu.dma_semaphore, #tpu.memory_space<semaphore_mem>>
      tpu.wait_dma2 semaphore(%371 : memref<!tpu.dma_semaphore, #tpu.memory_space<semaphore_mem>>) src(%367 : memref<1x128xf32, #tpu.memory_space<any>>) dst(%369 : memref<1x128xf32, #tpu.memory_space<vmem>>)
      %c2_i32_385 = arith.constant 2 : i32
      %c2_i32_386 = arith.constant 2 : i32
      %c7_i32_387 = arith.constant 7 : i32
      %c0_i32_388 = arith.constant 0 : i32
      %372 = tpu.memref_slice %arg2[%210, %c0_i32_388] : memref<256x128xf32, #tpu.memory_space<any>> -> memref<1x128xf32, #tpu.memory_space<any>>
      %c7_i32_389 = arith.constant 7 : i32
      %c0_i32_390 = arith.constant 0 : i32
      %373 = tpu.memref_slice %arg5[%c2_i32_385, %c7_i32_389, %c0_i32_390] : memref<4x8x128xf32, #tpu.memory_space<vmem>> -> memref<1x1x128xf32, #tpu.memory_space<vmem>>
      %374 = tpu.memref_squeeze %373 : memref<1x1x128xf32, #tpu.memory_space<vmem>> -> memref<1x128xf32, #tpu.memory_space<vmem>>
      %375 = tpu.memref_slice %arg9[%c2_i32_386, %c7_i32_387] : memref<4x8x!tpu.dma_semaphore, #tpu.memory_space<semaphore_mem>> -> memref<1x1x!tpu.dma_semaphore, #tpu.memory_space<semaphore_mem>>
      %376 = tpu.memref_squeeze %375 : memref<1x1x!tpu.dma_semaphore, #tpu.memory_space<semaphore_mem>> -> memref<!tpu.dma_semaphore, #tpu.memory_space<semaphore_mem>>
      tpu.wait_dma2 semaphore(%376 : memref<!tpu.dma_semaphore, #tpu.memory_space<semaphore_mem>>) src(%372 : memref<1x128xf32, #tpu.memory_space<any>>) dst(%374 : memref<1x128xf32, #tpu.memory_space<vmem>>)
      %c3_i32_391 = arith.constant 3 : i32
      %c3_i32_392 = arith.constant 3 : i32
      %c7_i32_393 = arith.constant 7 : i32
      %c0_i32_394 = arith.constant 0 : i32
      %377 = tpu.memref_slice %arg2[%216, %c0_i32_394] : memref<256x128xf32, #tpu.memory_space<any>> -> memref<1x128xf32, #tpu.memory_space<any>>
      %c7_i32_395 = arith.constant 7 : i32
      %c0_i32_396 = arith.constant 0 : i32
      %378 = tpu.memref_slice %arg5[%c3_i32_391, %c7_i32_395, %c0_i32_396] : memref<4x8x128xf32, #tpu.memory_space<vmem>> -> memref<1x1x128xf32, #tpu.memory_space<vmem>>
      %379 = tpu.memref_squeeze %378 : memref<1x1x128xf32, #tpu.memory_space<vmem>> -> memref<1x128xf32, #tpu.memory_space<vmem>>
      %380 = tpu.memref_slice %arg9[%c3_i32_392, %c7_i32_393] : memref<4x8x!tpu.dma_semaphore, #tpu.memory_space<semaphore_mem>> -> memref<1x1x!tpu.dma_semaphore, #tpu.memory_space<semaphore_mem>>
      %381 = tpu.memref_squeeze %380 : memref<1x1x!tpu.dma_semaphore, #tpu.memory_space<semaphore_mem>> -> memref<!tpu.dma_semaphore, #tpu.memory_space<semaphore_mem>>
      tpu.wait_dma2 semaphore(%381 : memref<!tpu.dma_semaphore, #tpu.memory_space<semaphore_mem>>) src(%377 : memref<1x128xf32, #tpu.memory_space<any>>) dst(%379 : memref<1x128xf32, #tpu.memory_space<vmem>>)
      %c0_397 = arith.constant 0 : index
      %c0_398 = arith.constant 0 : index
      %c0_399 = arith.constant 0 : index
      %382 = vector.load %arg5[%c0_397, %c0_398, %c0_399] : memref<4x8x128xf32, #tpu.memory_space<vmem>>, vector<4x8x128xf32>
      %cst_400 = arith.constant dense<0.000000e+00> : vector<8x128xf32>
      %383 = vector.multi_reduction <add>, %382, %cst_400 [0] : vector<4x8x128xf32> to vector<8x128xf32>
      %cst_401 = arith.constant 4.000000e+00 : f32
      %384 = vector.broadcast %cst_401 : f32 to vector<8x128xf32>
      %385 = arith.divf %383, %384 : vector<8x128xf32>
      %c0_402 = arith.constant 0 : index
      %c0_403 = arith.constant 0 : index
      %386 = vector.load %arg6[%c0_402, %c0_403] : memref<8x128xf32, #tpu.memory_space<vmem>>, vector<8x128xf32>
      tpu.vector_store %arg6[%c0_402, %c0_403], %385 {strides = array<i32>} : memref<8x128xf32, #tpu.memory_space<vmem>>, vector<8x128xf32>,
      %cst_404 = arith.constant 0xFF800000 : f32
      %387 = vector.broadcast %cst_404 : f32 to vector<8x1xf32>
      %c0_405 = arith.constant 0 : index
      %c0_406 = arith.constant 0 : index
      %388 = vector.load %arg7[%c0_405, %c0_406] : memref<8x1xf32, #tpu.memory_space<vmem>>, vector<8x1xf32>
      tpu.vector_store %arg7[%c0_405, %c0_406], %387 {strides = array<i32>} : memref<8x1xf32, #tpu.memory_space<vmem>>, vector<8x1xf32>,
      %cst_407 = arith.constant 0.000000e+00 : f32
      %389 = vector.broadcast %cst_407 : f32 to vector<8x1xf32>
      %c0_408 = arith.constant 0 : index
      %c0_409 = arith.constant 0 : index
      %390 = vector.load %arg8[%c0_408, %c0_409] : memref<8x1xf32, #tpu.memory_space<vmem>>, vector<8x1xf32>
      tpu.vector_store %arg8[%c0_408, %c0_409], %389 {strides = array<i32>} : memref<8x1xf32, #tpu.memory_space<vmem>>, vector<8x1xf32>,
    } else {
    }
    %c0 = arith.constant 0 : index
    %c0_1 = arith.constant 0 : index
    %3 = vector.load %arg6[%c0, %c0_1] : memref<8x128xf32, #tpu.memory_space<vmem>>, vector<8x128xf32>
    %c0_2 = arith.constant 0 : index
    %c0_3 = arith.constant 0 : index
    %4 = vector.load %arg3[%c0_2, %c0_3] : memref<128x128xf32, #tpu.memory_space<vmem>>, vector<128x128xf32>
    %cst = arith.constant dense<0.000000e+00> : vector<8x128xf32>
    %5 = tpu.matmul %3, %4, %cst {dimension_numbers = #tpu.dot_dimension_numbers<[1], [0], [0], [1], [0, 0, 1, 1], [], []>} : vector<8x128xf32>, vector<128x128xf32>, vector<8x128xf32> -> vector<8x128xf32>
    %c0_4 = arith.constant 0 : index
    %c0_5 = arith.constant 0 : index
    %6 = vector.load %arg7[%c0_4, %c0_5] : memref<8x1xf32, #tpu.memory_space<vmem>>, vector<8x1xf32>
    %cst_6 = arith.constant dense<0xFF800000> : vector<8xf32>
    %7 = vector.multi_reduction <maximumf>, %5, %cst_6 [1] : vector<8x128xf32> to vector<8xf32>
    %8 = vector.shape_cast %7 : vector<8xf32> to vector<8x1xf32>
    %9 = arith.maximumf %6, %8 : vector<8x1xf32>
    %c0_7 = arith.constant 0 : index
    %c0_8 = arith.constant 0 : index
    %10 = vector.load %arg8[%c0_7, %c0_8] : memref<8x1xf32, #tpu.memory_space<vmem>>, vector<8x1xf32>
    %c0_9 = arith.constant 0 : index
    %c0_10 = arith.constant 0 : index
    %11 = vector.load %arg7[%c0_9, %c0_10] : memref<8x1xf32, #tpu.memory_space<vmem>>, vector<8x1xf32>
    %12 = arith.subf %11, %9 : vector<8x1xf32>
    %13 = math.exp %12 : vector<8x1xf32>
    %14 = arith.mulf %10, %13 : vector<8x1xf32>
    %15 = vector.broadcast %9 : vector<8x1xf32> to vector<8x128xf32>
    %16 = arith.subf %5, %15 : vector<8x128xf32>
    %17 = math.exp %16 : vector<8x128xf32>
    %cst_11 = arith.constant dense<0.000000e+00> : vector<8xf32>
    %18 = vector.multi_reduction <add>, %17, %cst_11 [1] : vector<8x128xf32> to vector<8xf32>
    %19 = vector.shape_cast %18 : vector<8xf32> to vector<8x1xf32>
    %20 = arith.addf %14, %19 : vector<8x1xf32>
    %c0_12 = arith.constant 0 : index
    %c0_13 = arith.constant 0 : index
    %21 = vector.load %arg8[%c0_12, %c0_13] : memref<8x1xf32, #tpu.memory_space<vmem>>, vector<8x1xf32>
    tpu.vector_store %arg8[%c0_12, %c0_13], %20 {strides = array<i32>} : memref<8x1xf32, #tpu.memory_space<vmem>>, vector<8x1xf32>,
    %c0_14 = arith.constant 0 : index
    %c0_15 = arith.constant 0 : index
    %22 = vector.load %arg7[%c0_14, %c0_15] : memref<8x1xf32, #tpu.memory_space<vmem>>, vector<8x1xf32>
    tpu.vector_store %arg7[%c0_14, %c0_15], %9 {strides = array<i32>} : memref<8x1xf32, #tpu.memory_space<vmem>>, vector<8x1xf32>,
    %c128_i32 = arith.constant 128 : i32
    %23 = arith.muli %arg0, %c128_i32 : i32
    %24 = tpu.assume_multiple %23, 128 : i32
    %c0_16 = arith.constant 0 : index
    %25 = arith.index_cast %24 : i32 to index
    %26 = vector.load %arg4[%c0_16, %25] : memref<8x256xf32, #tpu.memory_space<vmem>>, vector<8x128xf32>
    tpu.vector_store %arg4[%c0_16, %25], %5 {strides = array<i32>} : memref<8x256xf32, #tpu.memory_space<vmem>>, vector<8x128xf32>,
    %c1_i32 = arith.constant 1 : i32
    %27 = arith.cmpi eq, %arg0, %c1_i32 : i32
    %28 = arith.extui %27 : i1 to i32
    %c0_i32_17 = arith.constant 0 : i32
    %29 = arith.cmpi ne, %28, %c0_i32_17 : i32
    scf.if %29 {
      %c0_18 = arith.constant 0 : index
      %c0_19 = arith.constant 0 : index
      %30 = vector.load %arg7[%c0_18, %c0_19] : memref<8x1xf32, #tpu.memory_space<vmem>>, vector<8x1xf32>
      %c0_20 = arith.constant 0 : index
      %c0_21 = arith.constant 0 : index
      %31 = vector.load %arg8[%c0_20, %c0_21] : memref<8x1xf32, #tpu.memory_space<vmem>>, vector<8x1xf32>
      %32 = math.log %31 : vector<8x1xf32>
      %33 = arith.addf %30, %32 : vector<8x1xf32>
      %c0_22 = arith.constant 0 : index
      %c0_23 = arith.constant 0 : index
      %34 = vector.load %arg4[%c0_22, %c0_23] : memref<8x256xf32, #tpu.memory_space<vmem>>, vector<8x256xf32>
      %35 = vector.broadcast %33 : vector<8x1xf32> to vector<8x256xf32>
      %36 = arith.subf %34, %35 : vector<8x256xf32>
      %c0_24 = arith.constant 0 : index
      %c0_25 = arith.constant 0 : index
      %37 = vector.load %arg4[%c0_24, %c0_25] : memref<8x256xf32, #tpu.memory_space<vmem>>, vector<8x256xf32>
      tpu.vector_store %arg4[%c0_24, %c0_25], %36 {strides = array<i32>} : memref<8x256xf32, #tpu.memory_space<vmem>>, vector<8x256xf32>,
    } else {
    }
    return
  }
  func.func @transform_1(%arg0: i32, %arg1: memref<32xi32, #tpu.memory_space<smem>>) -> (i32, i32) {
    %c0_i32 = arith.constant 0 : i32
    %c0_i32_0 = arith.constant 0 : i32
    return %c0_i32, %arg0 : i32, i32
  }
  func.func @transform_2(%arg0: i32, %arg1: memref<32xi32, #tpu.memory_space<smem>>) -> (i32, i32) {
    %c0_i32 = arith.constant 0 : i32
    %c0_i32_0 = arith.constant 0 : i32
    %c0_i32_1 = arith.constant 0 : i32
    return %c0_i32, %c0_i32_0 : i32, i32
  }
}

</mosaic_0001>

<llo_original>
// kernel: tpu_custom_call.1
$region0: #{tpu_custom_call.1}
  #allocation0 [shape = 'u32[]', space=smem, size = 0x4, offset = 0x4, fixed_abs, tag = 'smem constant byte address 0x4 - core index']
  #allocation1 [shape = 'u32[72,128]{1,0:T(1,128)}', space=vmem, size = 0x9000, scoped, tag = 'internal scratch']
  #allocation2 [shape = 'f32[4,8,128]{2,1,0:T(8,128)}', space=vmem, size = 0x4000, scoped, tag = 'scratch operand']
  #allocation3 [shape = 'f32[8,128]{1,0:T(8,128)}', space=vmem, size = 0x1000, scoped, tag = 'scratch operand']
  #allocation4 [shape = 'f32[8,1]{1,0:T(8,128)}', space=vmem, size = 0x1000, scoped, tag = 'scratch operand']
  #allocation5 [shape = 'f32[8,1]{1,0:T(8,128)}', space=vmem, size = 0x1000, scoped, tag = 'scratch operand']
  #allocation6 [shape = 's32[32]{0}', space=sflag, size = 0x80, scoped, tag = 'scratch operand']
  #allocation7 [shape = 's32[1]{0}', space=sflag, size = 0x4, scoped, tag = 'scoped memory for tpu_custom_call.1']
  #allocation8 [shape = 'u8[512]{0}', space=smem, size = 0x200, scoped, tag = 'prefetched SMEM operand 0']
  #allocation13 [shape = 's32[]', space=sflag, size = 0x4, offset = 0, fixed_abs, tag = 'sflag constant byte address 0x0 - dummy sync flag']
  #allocation14 [shape = 's32[]', space=sflag, size = 0x4, offset = 0, fixed_abs, tag = 'sflag constant byte address 0x0 - dummy sync flag']
  #allocation15 [shape = 'u32[]', space=smem, size = 0x4, offset = 0x44, fixed_abs, tag = 'smem constant byte address 0x44 - assertion arg 0']
  #allocation16 [shape = 'u32[]', space=smem, size = 0x4, offset = 0x48, fixed_abs, tag = 'smem constant byte address 0x48 - assertion arg 1']
  #allocation17 [shape = 's32[]', space=sflag, size = 0x4, offset = 0, fixed_abs, tag = 'sflag constant byte address 0x0 - dummy sync flag']
  #allocation18 [shape = 's32[]', space=sflag, size = 0x4, offset = 0, fixed_abs, tag = 'sflag constant byte address 0x0 - dummy sync flag']
  #allocation19 [shape = 's32[]', space=sflag, size = 0x4, offset = 0, fixed_abs, tag = 'sflag constant byte address 0x0 - dummy sync flag']
  #allocation20 [shape = 's32[]', space=sflag, size = 0x4, offset = 0, fixed_abs, tag = 'sflag constant byte address 0x0 - dummy sync flag']
  #allocation21 [shape = 's32[]', space=sflag, size = 0x4, offset = 0, fixed_abs, tag = 'sflag constant byte address 0x0 - dummy sync flag']
  #allocation22 [shape = 's32[]', space=sflag, size = 0x4, offset = 0, fixed_abs, tag = 'sflag constant byte address 0x0 - dummy sync flag']
  #allocation23 [shape = 's32[]', space=sflag, size = 0x4, offset = 0, fixed_abs, tag = 'sflag constant byte address 0x0 - dummy sync flag']
  #allocation24 [shape = 's32[]', space=sflag, size = 0x4, offset = 0, fixed_abs, tag = 'sflag constant byte address 0x0 - dummy sync flag']
  #allocation25 [shape = 's32[]', space=sflag, size = 0x4, offset = 0, fixed_abs, tag = 'sflag constant byte address 0x0 - dummy sync flag']
  #allocation26 [shape = 's32[]', space=sflag, size = 0x4, offset = 0, fixed_abs, tag = 'sflag constant byte address 0x0 - dummy sync flag']
  #allocation27 [shape = 's32[]', space=sflag, size = 0x4, offset = 0, fixed_abs, tag = 'sflag constant byte address 0x0 - dummy sync flag']
  #allocation28 [shape = 's32[]', space=sflag, size = 0x4, offset = 0, fixed_abs, tag = 'sflag constant byte address 0x0 - dummy sync flag']
  #allocation29 [shape = 's32[]', space=sflag, size = 0x4, offset = 0, fixed_abs, tag = 'sflag constant byte address 0x0 - dummy sync flag']
  #allocation30 [shape = 's32[]', space=sflag, size = 0x4, offset = 0, fixed_abs, tag = 'sflag constant byte address 0x0 - dummy sync flag']
  #allocation31 [shape = 's32[]', space=sflag, size = 0x4, offset = 0, fixed_abs, tag = 'sflag constant byte address 0x0 - dummy sync flag']
  #allocation32 [shape = 's32[]', space=sflag, size = 0x4, offset = 0, fixed_abs, tag = 'sflag constant byte address 0x0 - dummy sync flag']
  #allocation33 [shape = 's32[]', space=sflag, size = 0x4, offset = 0, fixed_abs, tag = 'sflag constant byte address 0x0 - dummy sync flag']
  #allocation34 [shape = 's32[]', space=sflag, size = 0x4, offset = 0, fixed_abs, tag = 'sflag constant byte address 0x0 - dummy sync flag']
  #allocation35 [shape = 's32[]', space=sflag, size = 0x4, offset = 0, fixed_abs, tag = 'sflag constant byte address 0x0 - dummy sync flag']
  #allocation36 [shape = 's32[]', space=sflag, size = 0x4, offset = 0, fixed_abs, tag = 'sflag constant byte address 0x0 - dummy sync flag']
  #allocation37 [shape = 's32[]', space=sflag, size = 0x4, offset = 0, fixed_abs, tag = 'sflag constant byte address 0x0 - dummy sync flag']
  #allocation38 [shape = 's32[]', space=sflag, size = 0x4, offset = 0, fixed_abs, tag = 'sflag constant byte address 0x0 - dummy sync flag']
  #allocation39 [shape = 's32[]', space=sflag, size = 0x4, offset = 0, fixed_abs, tag = 'sflag constant byte address 0x0 - dummy sync flag']
  #allocation40 [shape = 's32[]', space=sflag, size = 0x4, offset = 0, fixed_abs, tag = 'sflag constant byte address 0x0 - dummy sync flag']
  #allocation41 [shape = 's32[]', space=sflag, size = 0x4, offset = 0, fixed_abs, tag = 'sflag constant byte address 0x0 - dummy sync flag']
  #allocation42 [shape = 's32[]', space=sflag, size = 0x4, offset = 0, fixed_abs, tag = 'sflag constant byte address 0x0 - dummy sync flag']
  #allocation43 [shape = 's32[]', space=sflag, size = 0x4, offset = 0, fixed_abs, tag = 'sflag constant byte address 0x0 - dummy sync flag']
  #allocation44 [shape = 's32[]', space=sflag, size = 0x4, offset = 0, fixed_abs, tag = 'sflag constant byte address 0x0 - dummy sync flag']
  #allocation45 [shape = 's32[]', space=sflag, size = 0x4, offset = 0, fixed_abs, tag = 'sflag constant byte address 0x0 - dummy sync flag']
  #allocation46 [shape = 's32[]', space=sflag, size = 0x4, offset = 0, fixed_abs, tag = 'sflag constant byte address 0x0 - dummy sync flag']
  #allocation47 [shape = 's32[]', space=sflag, size = 0x4, offset = 0, fixed_abs, tag = 'sflag constant byte address 0x0 - dummy sync flag']
  #allocation48 [shape = 's32[]', space=sflag, size = 0x4, offset = 0, fixed_abs, tag = 'sflag constant byte address 0x0 - dummy sync flag']
  #allocation49 [shape = 's32[]', space=sflag, size = 0x4, offset = 0, fixed_abs, tag = 'sflag constant byte address 0x0 - dummy sync flag']
  #allocation50 [shape = 's32[]', space=sflag, size = 0x4, offset = 0, fixed_abs, tag = 'sflag constant byte address 0x0 - dummy sync flag']
  #allocation51 [shape = 's32[]', space=sflag, size = 0x4, offset = 0, fixed_abs, tag = 'sflag constant byte address 0x0 - dummy sync flag']
  #allocation52 [shape = 's32[]', space=sflag, size = 0x4, offset = 0, fixed_abs, tag = 'sflag constant byte address 0x0 - dummy sync flag']
  #allocation53 [shape = 's32[]', space=sflag, size = 0x4, offset = 0, fixed_abs, tag = 'sflag constant byte address 0x0 - dummy sync flag']
  #allocation54 [shape = 's32[]', space=sflag, size = 0x4, offset = 0, fixed_abs, tag = 'sflag constant byte address 0x0 - dummy sync flag']
  #allocation55 [shape = 's32[]', space=sflag, size = 0x4, offset = 0, fixed_abs, tag = 'sflag constant byte address 0x0 - dummy sync flag']
  #allocation56 [shape = 's32[]', space=sflag, size = 0x4, offset = 0, fixed_abs, tag = 'sflag constant byte address 0x0 - dummy sync flag']
  #allocation57 [shape = 's32[]', space=sflag, size = 0x4, offset = 0, fixed_abs, tag = 'sflag constant byte address 0x0 - dummy sync flag']
  #allocation58 [shape = 's32[]', space=sflag, size = 0x4, offset = 0, fixed_abs, tag = 'sflag constant byte address 0x0 - dummy sync flag']
  #allocation59 [shape = 's32[]', space=sflag, size = 0x4, offset = 0, fixed_abs, tag = 'sflag constant byte address 0x0 - dummy sync flag']
  #allocation60 [shape = 's32[]', space=sflag, size = 0x4, offset = 0, fixed_abs, tag = 'sflag constant byte address 0x0 - dummy sync flag']
  #allocation61 [shape = 's32[]', space=sflag, size = 0x4, offset = 0, fixed_abs, tag = 'sflag constant byte address 0x0 - dummy sync flag']
  #allocation62 [shape = 's32[]', space=sflag, size = 0x4, offset = 0, fixed_abs, tag = 'sflag constant byte address 0x0 - dummy sync flag']
  #allocation63 [shape = 's32[]', space=sflag, size = 0x4, offset = 0, fixed_abs, tag = 'sflag constant byte address 0x0 - dummy sync flag']
  #allocation64 [shape = 's32[]', space=sflag, size = 0x4, offset = 0, fixed_abs, tag = 'sflag constant byte address 0x0 - dummy sync flag']
  #allocation65 [shape = 's32[]', space=sflag, size = 0x4, offset = 0, fixed_abs, tag = 'sflag constant byte address 0x0 - dummy sync flag']
  #allocation66 [shape = 's32[]', space=sflag, size = 0x4, offset = 0, fixed_abs, tag = 'sflag constant byte address 0x0 - dummy sync flag']
  #allocation67 [shape = 's32[]', space=sflag, size = 0x4, offset = 0, fixed_abs, tag = 'sflag constant byte address 0x0 - dummy sync flag']
  #allocation68 [shape = 's32[]', space=sflag, size = 0x4, offset = 0, fixed_abs, tag = 'sflag constant byte address 0x0 - dummy sync flag']
  #allocation69 [shape = 's32[]', space=sflag, size = 0x4, offset = 0, fixed_abs, tag = 'sflag constant byte address 0x0 - dummy sync flag']
  #allocation70 [shape = 's32[]', space=sflag, size = 0x4, offset = 0, fixed_abs, tag = 'sflag constant byte address 0x0 - dummy sync flag']
  #allocation71 [shape = 's32[]', space=sflag, size = 0x4, offset = 0, fixed_abs, tag = 'sflag constant byte address 0x0 - dummy sync flag']
  #allocation72 [shape = 's32[]', space=sflag, size = 0x4, offset = 0, fixed_abs, tag = 'sflag constant byte address 0x0 - dummy sync flag']
  #allocation73 [shape = 's32[]', space=sflag, size = 0x4, offset = 0, fixed_abs, tag = 'sflag constant byte address 0x0 - dummy sync flag']
  #allocation74 [shape = 's32[]', space=sflag, size = 0x4, offset = 0, fixed_abs, tag = 'sflag constant byte address 0x0 - dummy sync flag']
  #allocation75 [shape = 's32[]', space=sflag, size = 0x4, offset = 0, fixed_abs, tag = 'sflag constant byte address 0x0 - dummy sync flag']
  #allocation76 [shape = 's32[]', space=sflag, size = 0x4, offset = 0, fixed_abs, tag = 'sflag constant byte address 0x0 - dummy sync flag']
  #allocation77 [shape = 's32[]', space=sflag, size = 0x4, offset = 0, fixed_abs, tag = 'sflag constant byte address 0x0 - dummy sync flag']
  #allocation78 [shape = 's32[]', space=sflag, size = 0x4, offset = 0, fixed_abs, tag = 'sflag constant byte address 0x0 - dummy sync flag']
  %s0 = inlined_call_operand.hbm [shape: s32[32], index: 0, kind: input, shape index: {}]
  %s1 = inlined_call_operand.hbm [shape: f32[256,128], index: 1, kind: input, shape index: {}]
  %s2 = inlined_call_operand.hbm [shape: f32[128,256], index: 2, kind: input, shape index: {}]
  %s3 = inlined_call_operand.hbm [shape: f32[8,256], index: 3, kind: output, shape index: {}]
  %s4 = sld [smem:[#allocation0]]
  $region177: #{tpu_custom_call.1} parent=0
    _
  %s6 = ssub.s32 1, %s4
  %s7 = scalar_select 0, %s6, %s4
  %s9 = sshll.u32 %s0, 4
  %s10 = int_to_ptr.hbm [resolvable:$true] %s9
  %12 = dma.hbm_to_smem %s10, 16, [#allocation8], [#allocation7]
  %14 = dma.done [#allocation7], 16
  %15 = sfence
  $region1: #{tpu_custom_call.1} parent=0
    #allocation9 [shape = 'u8[131072]{0}', space=vmem, size = 0x20000, scoped, tag = 'input window, operand 2']
    #allocation10 [shape = 's32[2]{0}', space=sflag, size = 0x8, scoped, tag = 'scoped memory for tpu_custom_call.1']
    #allocation11 [shape = 's32[2]{0}', space=sflag, size = 0x8, scoped, tag = 'scoped memory for tpu_custom_call.1']
    #allocation12 [shape = 'u8[8192]{0}', space=vmem, size = 0x2000, scoped, tag = 'output window, operand 0, single buffered']
    %16 = vsyncpa [#allocation10], 0
    %s17 = scalar_lea.sflag [#allocation10], 1
    %18 = vsyncpa %s17, 0
    %19 = vsyncpa [#allocation11], 0
    loop: start=0, step=1, limit=4
    $region2: #{tpu_custom_call.1} parent=1 // loop_pre_header
      _
    $region3: #{tpu_custom_call.1} parent=1 // loop_header
      %s21 = sphi 0, %s25
      %p22 = scmp.ge.s32.totalorder %s21, 4
      %s31 = sphi 0, %s33
      %s34 = sphi 0, %s31
      %s35 = sphi 0, %s34
      %s51 = sphi 0, %s35
      %s55 = sphi 0, %s55
      %s57 = sphi 0, %s55
      %s58 = sphi 0, %s57
      %s72 = sphi 0, %s58
    $region4: #{tpu_custom_call.1} parent=1 // loop_header_branch
      %24 = sbr.rel (%p22) target = $region8
    $region5: #{tpu_custom_call.1} parent=1 // loop_body
      %s26 = ssub.s32 %s21, 1
      %s27 = ssub.s32 %s21, 2
      %s28 = sadd.s32 %s21, 1
      %s29 = ssub.s32 %s21, %s28
      %p30 = scmp.eq.s32.totalorder %s29, 0
      %s32 = sadd.s32 %s31, 1
      %s33 = scalar_select %p30, %s31, %s32
      %p36 = pneg %p30
      %p37 = scmp.eq.s32.totalorder %s21, 1
      %p38 = por %p36, %p37
      %p39 = scmp.ne.s32.totalorder %s31, %s34
      %p40 = scmp.eq.s32.totalorder %s21, 0
      %p41 = por %p39, %p40
      %p42 = scmp.ne.s32.totalorder %s31, %s34
      %p43 = scmp.eq.s32.totalorder %s26, 1
      %p44 = por %p42, %p43
      %p45 = scmp.ne.s32.totalorder %s34, %s35
      %p46 = scmp.eq.s32.totalorder %s26, 0
      %p47 = por %p45, %p46
      %p48 = scmp.ne.s32.totalorder %s34, %s35
      %p49 = scmp.eq.s32.totalorder %s27, 1
      %p50 = por %p48, %p49
      %p52 = scmp.ne.s32.totalorder %s35, %s51
      %p53 = scmp.eq.s32.totalorder %s27, 0
      %p54 = por %p52, %p53
      %s56 = sadd.s32 %s55, 1
      %p59 = scmp.eq.s32.totalorder %s21, 1
      %p60 = scmp.ne.s32.totalorder %s55, %s57
      %p61 = scmp.eq.s32.totalorder %s21, 0
      %p62 = por %p60, %p61
      %p63 = scmp.ne.s32.totalorder %s55, %s57
      %p64 = scmp.eq.s32.totalorder %s26, 1
      %p65 = por %p63, %p64
      %p66 = scmp.ne.s32.totalorder %s57, %s58
      %p67 = scmp.eq.s32.totalorder %s26, 0
      %p68 = por %p66, %p67
      %p69 = scmp.ne.s32.totalorder %s57, %s58
      %p70 = scmp.eq.s32.totalorder %s27, 1
      %p71 = por %p69, %p70
      %p73 = scmp.ne.s32.totalorder %s58, %s72
      %p74 = scmp.eq.s32.totalorder %s27, 0
      %p75 = por %p73, %p74
      %p76 = scmp.le.s32.totalorder 1, %s21
      %p77 = scmp.lt.s32.totalorder %s21, 3
      %p78 = pnand %p76, %p77
      %p79 = pneg %p78
      // Predicated region
      $region9: #{tpu_custom_call.1} parent=5 // pred_check
        _
      $region10: #{tpu_custom_call.1} parent=5 // pred_check_branch
        %81 = sbr.rel (%p78) target = $region12
      $region11: #{tpu_custom_call.1} parent=5 // pred_region
        %s82 = ssub.s32 %s21, 1
      $region12: #{tpu_custom_call.1} parent=5 // pred_fallthru
        _
      %p83 = scmp.lt.s32.totalorder %s21, 2
      // Predicated region
      $region13: #{tpu_custom_call.1} parent=5 // pred_check
        %p84 = pneg %p83
      $region14: #{tpu_custom_call.1} parent=5 // pred_check_branch
        %86 = sbr.rel (%p84) target = $region16
      $region15: #{tpu_custom_call.1} parent=5 // pred_region
        // Predicated region
        $region17: #{tpu_custom_call.1} parent=15 // pred_check
          %p87 = pneg %p41
        $region18: #{tpu_custom_call.1} parent=15 // pred_check_branch
          %89 = sbr.rel (%p87) target = $region20
        $region19: #{tpu_custom_call.1} parent=15 // pred_region
          %s90 = sand.u32 %s31, 1
          %s91 = scalar_lea.sflag [#allocation10], %s90
          %s92 = sand.u32 %s31, 1
          %s93 = smul.addr %s92, 128
          %s94 = scalar_lea.vmem [#allocation9], %s93
          %96 = vsyncadd %s91, 0
          %s97 = smul.addr %s21, 8
          %s98 = scalar_lea.hbm %s2, %s97
          %s99 = sshll.u32 %s98, 4
          %s100 = int_to_ptr.hbm [resolvable:$true] %s99
          %s101 = sshll.u32 %s94, 4
          %s102 = int_to_ptr.vmem [resolvable:$true] %s101
          %107 = dma.hbm_to_vmem [thread:$0]  %s100, 2048, %s102, %s91, 256, 128, 8
        $region20: #{tpu_custom_call.1} parent=15 // pred_fallthru
          _
      $region16: #{tpu_custom_call.1} parent=5 // pred_fallthru
        _
      %p108 = scmp.le.s32.totalorder 1, %s21
      %p109 = scmp.lt.s32.totalorder %s21, 3
      %p110 = pnand %p108, %p109
      %p111 = pneg %p110
      // Predicated region
      $region21: #{tpu_custom_call.1} parent=5 // pred_check
        _
      $region22: #{tpu_custom_call.1} parent=5 // pred_check_branch
        %113 = sbr.rel (%p110) target = $region24
      $region23: #{tpu_custom_call.1} parent=5 // pred_region
        %s114 = ssub.s32 %s21, 1
        %s115 = sand.u32 %s34, 1
        %s116 = scalar_lea.sflag [#allocation10], %s115
        %s117 = sand.u32 %s34, 1
        %s118 = smul.addr %s117, 128
        %s119 = scalar_lea.vmem [#allocation9], %s118
        // Predicated region
        $region25: #{tpu_custom_call.1} parent=23 // pred_check
          %p120 = pneg %p47
        $region26: #{tpu_custom_call.1} parent=23 // pred_check_branch
          %122 = sbr.rel (%p120) target = $region28
        $region27: #{tpu_custom_call.1} parent=23 // pred_region
          %124 = dma.done %s116, 2048
        $region28: #{tpu_custom_call.1} parent=23 // pred_fallthru
          _
        %s125 = sand.u32 %s34, 1
        %s126 = scalar_lea.sflag [#allocation10], %s125
        %s127 = sand.u32 %s34, 1
        %s128 = smul.addr %s127, 128
        %s129 = scalar_lea.vmem [#allocation9], %s128
        %p130 = pneg %p47
        %p131 = pneg %p44
        %p132 = pneg %p68
        %p133 = pneg %p65
        %p134 = scmp.eq.s32.totalorder %s26, 0
        // Predicated region
        $region29: #{tpu_custom_call.1} parent=23 // pred_check
          %p135 = pneg %p134
        $region30: #{tpu_custom_call.1} parent=23 // pred_check_branch
          %137 = sbr.rel (%p135) target = $region32
        $region31: #{tpu_custom_call.1} parent=23 // pred_region
          %s138 = sld [smem:[#allocation8]]
          %s139 = scalar_lea.hbm %s1, %s138
          // Predicated region
          $region33: #{tpu_custom_call.1} parent=31 // pred_check
            _
          $region34: #{tpu_custom_call.1} parent=31 // pred_check_branch
            %141 = sbr.rel target = $region36
          $region35: #{tpu_custom_call.1} parent=31 // pred_region
            %142 = sst [smem:[#allocation15]] [#allocation14]
            %143 = sst [smem:[#allocation16]] [#allocation13]
          $region36: #{tpu_custom_call.1} parent=31 // pred_fallthru
            _
          %145 = shalt.err (0)
          %s147 = sshll.u32 %s139, 4
          %s148 = int_to_ptr.hbm [resolvable:$true] %s147
          %s149 = sshll.u32 [#allocation2], 4
          %s150 = int_to_ptr.vmem [resolvable:$true] %s149
          %152 = dma.hbm_to_vmem [thread:$0]  %s148, 16, %s150, [#allocation6]
          %s153 = sld [smem:[#allocation8 + $0x1]]
          %s154 = scalar_lea.hbm %s1, %s153
          %s155 = scalar_lea.vmem [#allocation2], 8
          %s156 = scalar_lea.sflag [#allocation6], 8
          // Predicated region
          $region37: #{tpu_custom_call.1} parent=31 // pred_check
            _
          $region38: #{tpu_custom_call.1} parent=31 // pred_check_branch
            %158 = sbr.rel target = $region40
          $region39: #{tpu_custom_call.1} parent=31 // pred_region
            %159 = sst [smem:[#allocation15]] [#allocation18]
            %160 = sst [smem:[#allocation16]] [#allocation17]
          $region40: #{tpu_custom_call.1} parent=31 // pred_fallthru
            _
          %162 = shalt.err (0)
          %s164 = sshll.u32 %s154, 4
          %s165 = int_to_ptr.hbm [resolvable:$true] %s164
          %s166 = sshll.u32 %s155, 4
          %s167 = int_to_ptr.vmem [resolvable:$true] %s166
          %169 = dma.hbm_to_vmem [thread:$0]  %s165, 16, %s167, %s156
          %s170 = sld [smem:[#allocation8 + $0x2]]
          %s171 = scalar_lea.hbm %s1, %s170
          %s172 = scalar_lea.vmem [#allocation2], 16
          %s173 = scalar_lea.sflag [#allocation6], 16
          // Predicated region
          $region41: #{tpu_custom_call.1} parent=31 // pred_check
            _
          $region42: #{tpu_custom_call.1} parent=31 // pred_check_branch
            %175 = sbr.rel target = $region44
          $region43: #{tpu_custom_call.1} parent=31 // pred_region
            %176 = sst [smem:[#allocation15]] [#allocation20]
            %177 = sst [smem:[#allocation16]] [#allocation19]
          $region44: #{tpu_custom_call.1} parent=31 // pred_fallthru
            _
          %179 = shalt.err (0)
          %s181 = sshll.u32 %s171, 4
          %s182 = int_to_ptr.hbm [resolvable:$true] %s181
          %s183 = sshll.u32 %s172, 4
          %s184 = int_to_ptr.vmem [resolvable:$true] %s183
          %186 = dma.hbm_to_vmem [thread:$0]  %s182, 16, %s184, %s173
          %s187 = sld [smem:[#allocation8 + $0x3]]
          %s188 = scalar_lea.hbm %s1, %s187
          %s189 = scalar_lea.vmem [#allocation2], 24
          %s190 = scalar_lea.sflag [#allocation6], 24
          // Predicated region
          $region45: #{tpu_custom_call.1} parent=31 // pred_check
            _
          $region46: #{tpu_custom_call.1} parent=31 // pred_check_branch
            %192 = sbr.rel target = $region48
          $region47: #{tpu_custom_call.1} parent=31 // pred_region
            %193 = sst [smem:[#allocation15]] [#allocation22]
            %194 = sst [smem:[#allocation16]] [#allocation21]
          $region48: #{tpu_custom_call.1} parent=31 // pred_fallthru
            _
          %196 = shalt.err (0)
          %s198 = sshll.u32 %s188, 4
          %s199 = int_to_ptr.hbm [resolvable:$true] %s198
          %s200 = sshll.u32 %s189, 4
          %s201 = int_to_ptr.vmem [resolvable:$true] %s200
          %203 = dma.hbm_to_vmem [thread:$0]  %s199, 16, %s201, %s190
          %s204 = sld [smem:[#allocation8 + $0x4]]
          %s205 = scalar_lea.hbm %s1, %s204
          %s206 = scalar_lea.vmem [#allocation2], 1
          %s207 = scalar_lea.sflag [#allocation6], 1
          // Predicated region
          $region49: #{tpu_custom_call.1} parent=31 // pred_check
            _
          $region50: #{tpu_custom_call.1} parent=31 // pred_check_branch
            %209 = sbr.rel target = $region52
          $region51: #{tpu_custom_call.1} parent=31 // pred_region
            %210 = sst [smem:[#allocation15]] [#allocation24]
            %211 = sst [smem:[#allocation16]] [#allocation23]
          $region52: #{tpu_custom_call.1} parent=31 // pred_fallthru
            _
          %213 = shalt.err (0)
          %s215 = sshll.u32 %s205, 4
          %s216 = int_to_ptr.hbm [resolvable:$true] %s215
          %s217 = sshll.u32 %s206, 4
          %s218 = int_to_ptr.vmem [resolvable:$true] %s217
          %220 = dma.hbm_to_vmem [thread:$0]  %s216, 16, %s218, %s207
          %s221 = sld [smem:[#allocation8 + $0x5]]
          %s222 = scalar_lea.hbm %s1, %s221
          %s223 = scalar_lea.vmem [#allocation2], 9
          %s224 = scalar_lea.sflag [#allocation6], 9
          // Predicated region
          $region53: #{tpu_custom_call.1} parent=31 // pred_check
            _
          $region54: #{tpu_custom_call.1} parent=31 // pred_check_branch
            %226 = sbr.rel target = $region56
          $region55: #{tpu_custom_call.1} parent=31 // pred_region
            %227 = sst [smem:[#allocation15]] [#allocation26]
            %228 = sst [smem:[#allocation16]] [#allocation25]
          $region56: #{tpu_custom_call.1} parent=31 // pred_fallthru
            _
          %230 = shalt.err (0)
          %s232 = sshll.u32 %s222, 4
          %s233 = int_to_ptr.hbm [resolvable:$true] %s232
          %s234 = sshll.u32 %s223, 4
          %s235 = int_to_ptr.vmem [resolvable:$true] %s234
          %237 = dma.hbm_to_vmem [thread:$0]  %s233, 16, %s235, %s224
          %s238 = sld [smem:[#allocation8 + $0x6]]
          %s239 = scalar_lea.hbm %s1, %s238
          %s240 = scalar_lea.vmem [#allocation2], 17
          %s241 = scalar_lea.sflag [#allocation6], 17
          // Predicated region
          $region57: #{tpu_custom_call.1} parent=31 // pred_check
            _
          $region58: #{tpu_custom_call.1} parent=31 // pred_check_branch
            %243 = sbr.rel target = $region60
          $region59: #{tpu_custom_call.1} parent=31 // pred_region
            %244 = sst [smem:[#allocation15]] [#allocation28]
            %245 = sst [smem:[#allocation16]] [#allocation27]
          $region60: #{tpu_custom_call.1} parent=31 // pred_fallthru
            _
          %247 = shalt.err (0)
          %s249 = sshll.u32 %s239, 4
          %s250 = int_to_ptr.hbm [resolvable:$true] %s249
          %s251 = sshll.u32 %s240, 4
          %s252 = int_to_ptr.vmem [resolvable:$true] %s251
          %254 = dma.hbm_to_vmem [thread:$0]  %s250, 16, %s252, %s241
          %s255 = sld [smem:[#allocation8 + $0x7]]
          %s256 = scalar_lea.hbm %s1, %s255
          %s257 = scalar_lea.vmem [#allocation2], 25
          %s258 = scalar_lea.sflag [#allocation6], 25
          // Predicated region
          $region61: #{tpu_custom_call.1} parent=31 // pred_check
            _
          $region62: #{tpu_custom_call.1} parent=31 // pred_check_branch
            %260 = sbr.rel target = $region64
          $region63: #{tpu_custom_call.1} parent=31 // pred_region
            %261 = sst [smem:[#allocation15]] [#allocation30]
            %262 = sst [smem:[#allocation16]] [#allocation29]
          $region64: #{tpu_custom_call.1} parent=31 // pred_fallthru
            _
          %264 = shalt.err (0)
          %s266 = sshll.u32 %s256, 4
          %s267 = int_to_ptr.hbm [resolvable:$true] %s266
          %s268 = sshll.u32 %s257, 4
          %s269 = int_to_ptr.vmem [resolvable:$true] %s268
          %271 = dma.hbm_to_vmem [thread:$0]  %s267, 16, %s269, %s258
          %s272 = sld [smem:[#allocation8 + $0x8]]
          %s273 = scalar_lea.hbm %s1, %s272
          %s274 = scalar_lea.vmem [#allocation2], 2
          %s275 = scalar_lea.sflag [#allocation6], 2
          // Predicated region
          $region65: #{tpu_custom_call.1} parent=31 // pred_check
            _
          $region66: #{tpu_custom_call.1} parent=31 // pred_check_branch
            %277 = sbr.rel target = $region68
          $region67: #{tpu_custom_call.1} parent=31 // pred_region
            %278 = sst [smem:[#allocation15]] [#allocation32]
            %279 = sst [smem:[#allocation16]] [#allocation31]
          $region68: #{tpu_custom_call.1} parent=31 // pred_fallthru
            _
          %281 = shalt.err (0)
          %s283 = sshll.u32 %s273, 4
          %s284 = int_to_ptr.hbm [resolvable:$true] %s283
          %s285 = sshll.u32 %s274, 4
          %s286 = int_to_ptr.vmem [resolvable:$true] %s285
          %288 = dma.hbm_to_vmem [thread:$0]  %s284, 16, %s286, %s275
          %s289 = sld [smem:[#allocation8 + $0x9]]
          %s290 = scalar_lea.hbm %s1, %s289
          %s291 = scalar_lea.vmem [#allocation2], 10
          %s292 = scalar_lea.sflag [#allocation6], 10
          // Predicated region
          $region69: #{tpu_custom_call.1} parent=31 // pred_check
            _
          $region70: #{tpu_custom_call.1} parent=31 // pred_check_branch
            %294 = sbr.rel target = $region72
          $region71: #{tpu_custom_call.1} parent=31 // pred_region
            %295 = sst [smem:[#allocation15]] [#allocation34]
            %296 = sst [smem:[#allocation16]] [#allocation33]
          $region72: #{tpu_custom_call.1} parent=31 // pred_fallthru
            _
          %298 = shalt.err (0)
          %s300 = sshll.u32 %s290, 4
          %s301 = int_to_ptr.hbm [resolvable:$true] %s300
          %s302 = sshll.u32 %s291, 4
          %s303 = int_to_ptr.vmem [resolvable:$true] %s302
          %305 = dma.hbm_to_vmem [thread:$0]  %s301, 16, %s303, %s292
          %s306 = sld [smem:[#allocation8 + $0xa]]
          %s307 = scalar_lea.hbm %s1, %s306
          %s308 = scalar_lea.vmem [#allocation2], 18
          %s309 = scalar_lea.sflag [#allocation6], 18
          // Predicated region
          $region73: #{tpu_custom_call.1} parent=31 // pred_check
            _
          $region74: #{tpu_custom_call.1} parent=31 // pred_check_branch
            %311 = sbr.rel target = $region76
          $region75: #{tpu_custom_call.1} parent=31 // pred_region
            %312 = sst [smem:[#allocation15]] [#allocation36]
            %313 = sst [smem:[#allocation16]] [#allocation35]
          $region76: #{tpu_custom_call.1} parent=31 // pred_fallthru
            _
          %315 = shalt.err (0)
          %s317 = sshll.u32 %s307, 4
          %s318 = int_to_ptr.hbm [resolvable:$true] %s317
          %s319 = sshll.u32 %s308, 4
          %s320 = int_to_ptr.vmem [resolvable:$true] %s319
          %322 = dma.hbm_to_vmem [thread:$0]  %s318, 16, %s320, %s309
          %s323 = sld [smem:[#allocation8 + $0xb]]
          %s324 = scalar_lea.hbm %s1, %s323
          %s325 = scalar_lea.vmem [#allocation2], 26
          %s326 = scalar_lea.sflag [#allocation6], 26
          // Predicated region
          $region77: #{tpu_custom_call.1} parent=31 // pred_check
            _
          $region78: #{tpu_custom_call.1} parent=31 // pred_check_branch
            %328 = sbr.rel target = $region80
          $region79: #{tpu_custom_call.1} parent=31 // pred_region
            %329 = sst [smem:[#allocation15]] [#allocation38]
            %330 = sst [smem:[#allocation16]] [#allocation37]
          $region80: #{tpu_custom_call.1} parent=31 // pred_fallthru
            _
          %332 = shalt.err (0)
          %s334 = sshll.u32 %s324, 4
          %s335 = int_to_ptr.hbm [resolvable:$true] %s334
          %s336 = sshll.u32 %s325, 4
          %s337 = int_to_ptr.vmem [resolvable:$true] %s336
          %339 = dma.hbm_to_vmem [thread:$0]  %s335, 16, %s337, %s326
          %s340 = sld [smem:[#allocation8 + $0xc]]
          %s341 = scalar_lea.hbm %s1, %s340
          %s342 = scalar_lea.vmem [#allocation2], 3
          %s343 = scalar_lea.sflag [#allocation6], 3
          // Predicated region
          $region81: #{tpu_custom_call.1} parent=31 // pred_check
            _
          $region82: #{tpu_custom_call.1} parent=31 // pred_check_branch
            %345 = sbr.rel target = $region84
          $region83: #{tpu_custom_call.1} parent=31 // pred_region
            %346 = sst [smem:[#allocation15]] [#allocation40]
            %347 = sst [smem:[#allocation16]] [#allocation39]
          $region84: #{tpu_custom_call.1} parent=31 // pred_fallthru
            _
          %349 = shalt.err (0)
          %s351 = sshll.u32 %s341, 4
          %s352 = int_to_ptr.hbm [resolvable:$true] %s351
          %s353 = sshll.u32 %s342, 4
          %s354 = int_to_ptr.vmem [resolvable:$true] %s353
          %356 = dma.hbm_to_vmem [thread:$0]  %s352, 16, %s354, %s343
          %s357 = sld [smem:[#allocation8 + $0xd]]
          %s358 = scalar_lea.hbm %s1, %s357
          %s359 = scalar_lea.vmem [#allocation2], 11
          %s360 = scalar_lea.sflag [#allocation6], 11
          // Predicated region
          $region85: #{tpu_custom_call.1} parent=31 // pred_check
            _
          $region86: #{tpu_custom_call.1} parent=31 // pred_check_branch
            %362 = sbr.rel target = $region88
          $region87: #{tpu_custom_call.1} parent=31 // pred_region
            %363 = sst [smem:[#allocation15]] [#allocation42]
            %364 = sst [smem:[#allocation16]] [#allocation41]
          $region88: #{tpu_custom_call.1} parent=31 // pred_fallthru
            _
          %366 = shalt.err (0)
          %s368 = sshll.u32 %s358, 4
          %s369 = int_to_ptr.hbm [resolvable:$true] %s368
          %s370 = sshll.u32 %s359, 4
          %s371 = int_to_ptr.vmem [resolvable:$true] %s370
          %373 = dma.hbm_to_vmem [thread:$0]  %s369, 16, %s371, %s360
          %s374 = sld [smem:[#allocation8 + $0xe]]
          %s375 = scalar_lea.hbm %s1, %s374
          %s376 = scalar_lea.vmem [#allocation2], 19
          %s377 = scalar_lea.sflag [#allocation6], 19
          // Predicated region
          $region89: #{tpu_custom_call.1} parent=31 // pred_check
            _
          $region90: #{tpu_custom_call.1} parent=31 // pred_check_branch
            %379 = sbr.rel target = $region92
          $region91: #{tpu_custom_call.1} parent=31 // pred_region
            %380 = sst [smem:[#allocation15]] [#allocation44]
            %381 = sst [smem:[#allocation16]] [#allocation43]
          $region92: #{tpu_custom_call.1} parent=31 // pred_fallthru
            _
          %383 = shalt.err (0)
          %s385 = sshll.u32 %s375, 4
          %s386 = int_to_ptr.hbm [resolvable:$true] %s385
          %s387 = sshll.u32 %s376, 4
          %s388 = int_to_ptr.vmem [resolvable:$true] %s387
          %390 = dma.hbm_to_vmem [thread:$0]  %s386, 16, %s388, %s377
          %s391 = sld [smem:[#allocation8 + $0xf]]
          %s392 = scalar_lea.hbm %s1, %s391
          %s393 = scalar_lea.vmem [#allocation2], 27
          %s394 = scalar_lea.sflag [#allocation6], 27
          // Predicated region
          $region93: #{tpu_custom_call.1} parent=31 // pred_check
            _
          $region94: #{tpu_custom_call.1} parent=31 // pred_check_branch
            %396 = sbr.rel target = $region96
          $region95: #{tpu_custom_call.1} parent=31 // pred_region
            %397 = sst [smem:[#allocation15]] [#allocation46]
            %398 = sst [smem:[#allocation16]] [#allocation45]
          $region96: #{tpu_custom_call.1} parent=31 // pred_fallthru
            _
          %400 = shalt.err (0)
          %s402 = sshll.u32 %s392, 4
          %s403 = int_to_ptr.hbm [resolvable:$true] %s402
          %s404 = sshll.u32 %s393, 4
          %s405 = int_to_ptr.vmem [resolvable:$true] %s404
          %407 = dma.hbm_to_vmem [thread:$0]  %s403, 16, %s405, %s394
          %s408 = sld [smem:[#allocation8 + $0x10]]
          %s409 = scalar_lea.hbm %s1, %s408
          %s410 = scalar_lea.vmem [#allocation2], 4
          %s411 = scalar_lea.sflag [#allocation6], 4
          // Predicated region
          $region97: #{tpu_custom_call.1} parent=31 // pred_check
            _
          $region98: #{tpu_custom_call.1} parent=31 // pred_check_branch
            %413 = sbr.rel target = $region100
          $region99: #{tpu_custom_call.1} parent=31 // pred_region
            %414 = sst [smem:[#allocation15]] [#allocation48]
            %415 = sst [smem:[#allocation16]] [#allocation47]
          $region100: #{tpu_custom_call.1} parent=31 // pred_fallthru
            _
          %417 = shalt.err (0)
          %s419 = sshll.u32 %s409, 4
          %s420 = int_to_ptr.hbm [resolvable:$true] %s419
          %s421 = sshll.u32 %s410, 4
          %s422 = int_to_ptr.vmem [resolvable:$true] %s421
          %424 = dma.hbm_to_vmem [thread:$0]  %s420, 16, %s422, %s411
          %s425 = sld [smem:[#allocation8 + $0x11]]
          %s426 = scalar_lea.hbm %s1, %s425
          %s427 = scalar_lea.vmem [#allocation2], 12
          %s428 = scalar_lea.sflag [#allocation6], 12
          // Predicated region
          $region101: #{tpu_custom_call.1} parent=31 // pred_check
            _
          $region102: #{tpu_custom_call.1} parent=31 // pred_check_branch
            %430 = sbr.rel target = $region104
          $region103: #{tpu_custom_call.1} parent=31 // pred_region
            %431 = sst [smem:[#allocation15]] [#allocation50]
            %432 = sst [smem:[#allocation16]] [#allocation49]
          $region104: #{tpu_custom_call.1} parent=31 // pred_fallthru
            _
          %434 = shalt.err (0)
          %s436 = sshll.u32 %s426, 4
          %s437 = int_to_ptr.hbm [resolvable:$true] %s436
          %s438 = sshll.u32 %s427, 4
          %s439 = int_to_ptr.vmem [resolvable:$true] %s438
          %441 = dma.hbm_to_vmem [thread:$0]  %s437, 16, %s439, %s428
          %s442 = sld [smem:[#allocation8 + $0x12]]
          %s443 = scalar_lea.hbm %s1, %s442
          %s444 = scalar_lea.vmem [#allocation2], 20
          %s445 = scalar_lea.sflag [#allocation6], 20
          // Predicated region
          $region105: #{tpu_custom_call.1} parent=31 // pred_check
            _
          $region106: #{tpu_custom_call.1} parent=31 // pred_check_branch
            %447 = sbr.rel target = $region108
          $region107: #{tpu_custom_call.1} parent=31 // pred_region
            %448 = sst [smem:[#allocation15]] [#allocation52]
            %449 = sst [smem:[#allocation16]] [#allocation51]
          $region108: #{tpu_custom_call.1} parent=31 // pred_fallthru
            _
          %451 = shalt.err (0)
          %s453 = sshll.u32 %s443, 4
          %s454 = int_to_ptr.hbm [resolvable:$true] %s453
          %s455 = sshll.u32 %s444, 4
          %s456 = int_to_ptr.vmem [resolvable:$true] %s455
          %458 = dma.hbm_to_vmem [thread:$0]  %s454, 16, %s456, %s445
          %s459 = sld [smem:[#allocation8 + $0x13]]
          %s460 = scalar_lea.hbm %s1, %s459
          %s461 = scalar_lea.vmem [#allocation2], 28
          %s462 = scalar_lea.sflag [#allocation6], 28
          // Predicated region
          $region109: #{tpu_custom_call.1} parent=31 // pred_check
            _
          $region110: #{tpu_custom_call.1} parent=31 // pred_check_branch
            %464 = sbr.rel target = $region112
          $region111: #{tpu_custom_call.1} parent=31 // pred_region
            %465 = sst [smem:[#allocation15]] [#allocation54]
            %466 = sst [smem:[#allocation16]] [#allocation53]
          $region112: #{tpu_custom_call.1} parent=31 // pred_fallthru
            _
          %468 = shalt.err (0)
          %s470 = sshll.u32 %s460, 4
          %s471 = int_to_ptr.hbm [resolvable:$true] %s470
          %s472 = sshll.u32 %s461, 4
          %s473 = int_to_ptr.vmem [resolvable:$true] %s472
          %475 = dma.hbm_to_vmem [thread:$0]  %s471, 16, %s473, %s462
          %s476 = sld [smem:[#allocation8 + $0x14]]
          %s477 = scalar_lea.hbm %s1, %s476
          %s478 = scalar_lea.vmem [#allocation2], 5
          %s479 = scalar_lea.sflag [#allocation6], 5
          // Predicated region
          $region113: #{tpu_custom_call.1} parent=31 // pred_check
            _
          $region114: #{tpu_custom_call.1} parent=31 // pred_check_branch
            %481 = sbr.rel target = $region116
          $region115: #{tpu_custom_call.1} parent=31 // pred_region
            %482 = sst [smem:[#allocation15]] [#allocation56]
            %483 = sst [smem:[#allocation16]] [#allocation55]
          $region116: #{tpu_custom_call.1} parent=31 // pred_fallthru
            _
          %485 = shalt.err (0)
          %s487 = sshll.u32 %s477, 4
          %s488 = int_to_ptr.hbm [resolvable:$true] %s487
          %s489 = sshll.u32 %s478, 4
          %s490 = int_to_ptr.vmem [resolvable:$true] %s489
          %492 = dma.hbm_to_vmem [thread:$0]  %s488, 16, %s490, %s479
          %s493 = sld [smem:[#allocation8 + $0x15]]
          %s494 = scalar_lea.hbm %s1, %s493
          %s495 = scalar_lea.vmem [#allocation2], 13
          %s496 = scalar_lea.sflag [#allocation6], 13
          // Predicated region
          $region117: #{tpu_custom_call.1} parent=31 // pred_check
            _
          $region118: #{tpu_custom_call.1} parent=31 // pred_check_branch
            %498 = sbr.rel target = $region120
          $region119: #{tpu_custom_call.1} parent=31 // pred_region
            %499 = sst [smem:[#allocation15]] [#allocation58]
            %500 = sst [smem:[#allocation16]] [#allocation57]
          $region120: #{tpu_custom_call.1} parent=31 // pred_fallthru
            _
          %502 = shalt.err (0)
          %s504 = sshll.u32 %s494, 4
          %s505 = int_to_ptr.hbm [resolvable:$true] %s504
          %s506 = sshll.u32 %s495, 4
          %s507 = int_to_ptr.vmem [resolvable:$true] %s506
          %509 = dma.hbm_to_vmem [thread:$0]  %s505, 16, %s507, %s496
          %s510 = sld [smem:[#allocation8 + $0x16]]
          %s511 = scalar_lea.hbm %s1, %s510
          %s512 = scalar_lea.vmem [#allocation2], 21
          %s513 = scalar_lea.sflag [#allocation6], 21
          // Predicated region
          $region121: #{tpu_custom_call.1} parent=31 // pred_check
            _
          $region122: #{tpu_custom_call.1} parent=31 // pred_check_branch
            %515 = sbr.rel target = $region124
          $region123: #{tpu_custom_call.1} parent=31 // pred_region
            %516 = sst [smem:[#allocation15]] [#allocation60]
            %517 = sst [smem:[#allocation16]] [#allocation59]
          $region124: #{tpu_custom_call.1} parent=31 // pred_fallthru
            _
          %519 = shalt.err (0)
          %s521 = sshll.u32 %s511, 4
          %s522 = int_to_ptr.hbm [resolvable:$true] %s521
          %s523 = sshll.u32 %s512, 4
          %s524 = int_to_ptr.vmem [resolvable:$true] %s523
          %526 = dma.hbm_to_vmem [thread:$0]  %s522, 16, %s524, %s513
          %s527 = sld [smem:[#allocation8 + $0x17]]
          %s528 = scalar_lea.hbm %s1, %s527
          %s529 = scalar_lea.vmem [#allocation2], 29
          %s530 = scalar_lea.sflag [#allocation6], 29
          // Predicated region
          $region125: #{tpu_custom_call.1} parent=31 // pred_check
            _
          $region126: #{tpu_custom_call.1} parent=31 // pred_check_branch
            %532 = sbr.rel target = $region128
          $region127: #{tpu_custom_call.1} parent=31 // pred_region
            %533 = sst [smem:[#allocation15]] [#allocation62]
            %534 = sst [smem:[#allocation16]] [#allocation61]
          $region128: #{tpu_custom_call.1} parent=31 // pred_fallthru
            _
          %536 = shalt.err (0)
          %s538 = sshll.u32 %s528, 4
          %s539 = int_to_ptr.hbm [resolvable:$true] %s538
          %s540 = sshll.u32 %s529, 4
          %s541 = int_to_ptr.vmem [resolvable:$true] %s540
          %543 = dma.hbm_to_vmem [thread:$0]  %s539, 16, %s541, %s530
          %s544 = sld [smem:[#allocation8 + $0x18]]
          %s545 = scalar_lea.hbm %s1, %s544
          %s546 = scalar_lea.vmem [#allocation2], 6
          %s547 = scalar_lea.sflag [#allocation6], 6
          // Predicated region
          $region129: #{tpu_custom_call.1} parent=31 // pred_check
            _
          $region130: #{tpu_custom_call.1} parent=31 // pred_check_branch
            %549 = sbr.rel target = $region132
          $region131: #{tpu_custom_call.1} parent=31 // pred_region
            %550 = sst [smem:[#allocation15]] [#allocation64]
            %551 = sst [smem:[#allocation16]] [#allocation63]
          $region132: #{tpu_custom_call.1} parent=31 // pred_fallthru
            _
          %553 = shalt.err (0)
          %s555 = sshll.u32 %s545, 4
          %s556 = int_to_ptr.hbm [resolvable:$true] %s555
          %s557 = sshll.u32 %s546, 4
          %s558 = int_to_ptr.vmem [resolvable:$true] %s557
          %560 = dma.hbm_to_vmem [thread:$0]  %s556, 16, %s558, %s547
          %s561 = sld [smem:[#allocation8 + $0x19]]
          %s562 = scalar_lea.hbm %s1, %s561
          %s563 = scalar_lea.vmem [#allocation2], 14
          %s564 = scalar_lea.sflag [#allocation6], 14
          // Predicated region
          $region133: #{tpu_custom_call.1} parent=31 // pred_check
            _
          $region134: #{tpu_custom_call.1} parent=31 // pred_check_branch
            %566 = sbr.rel target = $region136
          $region135: #{tpu_custom_call.1} parent=31 // pred_region
            %567 = sst [smem:[#allocation15]] [#allocation66]
            %568 = sst [smem:[#allocation16]] [#allocation65]
          $region136: #{tpu_custom_call.1} parent=31 // pred_fallthru
            _
          %570 = shalt.err (0)
          %s572 = sshll.u32 %s562, 4
          %s573 = int_to_ptr.hbm [resolvable:$true] %s572
          %s574 = sshll.u32 %s563, 4
          %s575 = int_to_ptr.vmem [resolvable:$true] %s574
          %577 = dma.hbm_to_vmem [thread:$0]  %s573, 16, %s575, %s564
          %s578 = sld [smem:[#allocation8 + $0x1a]]
          %s579 = scalar_lea.hbm %s1, %s578
          %s580 = scalar_lea.vmem [#allocation2], 22
          %s581 = scalar_lea.sflag [#allocation6], 22
          // Predicated region
          $region137: #{tpu_custom_call.1} parent=31 // pred_check
            _
          $region138: #{tpu_custom_call.1} parent=31 // pred_check_branch
            %583 = sbr.rel target = $region140
          $region139: #{tpu_custom_call.1} parent=31 // pred_region
            %584 = sst [smem:[#allocation15]] [#allocation68]
            %585 = sst [smem:[#allocation16]] [#allocation67]
          $region140: #{tpu_custom_call.1} parent=31 // pred_fallthru
            _
          %587 = shalt.err (0)
          %s589 = sshll.u32 %s579, 4
          %s590 = int_to_ptr.hbm [resolvable:$true] %s589
          %s591 = sshll.u32 %s580, 4
          %s592 = int_to_ptr.vmem [resolvable:$true] %s591
          %594 = dma.hbm_to_vmem [thread:$0]  %s590, 16, %s592, %s581
          %s595 = sld [smem:[#allocation8 + $0x1b]]
          %s596 = scalar_lea.hbm %s1, %s595
          %s597 = scalar_lea.vmem [#allocation2], 30
          %s598 = scalar_lea.sflag [#allocation6], 30
          // Predicated region
          $region141: #{tpu_custom_call.1} parent=31 // pred_check
            _
          $region142: #{tpu_custom_call.1} parent=31 // pred_check_branch
            %600 = sbr.rel target = $region144
          $region143: #{tpu_custom_call.1} parent=31 // pred_region
            %601 = sst [smem:[#allocation15]] [#allocation70]
            %602 = sst [smem:[#allocation16]] [#allocation69]
          $region144: #{tpu_custom_call.1} parent=31 // pred_fallthru
            _
          %604 = shalt.err (0)
          %s606 = sshll.u32 %s596, 4
          %s607 = int_to_ptr.hbm [resolvable:$true] %s606
          %s608 = sshll.u32 %s597, 4
          %s609 = int_to_ptr.vmem [resolvable:$true] %s608
          %611 = dma.hbm_to_vmem [thread:$0]  %s607, 16, %s609, %s598
          %s612 = sld [smem:[#allocation8 + $0x1c]]
          %s613 = scalar_lea.hbm %s1, %s612
          %s614 = scalar_lea.vmem [#allocation2], 7
          %s615 = scalar_lea.sflag [#allocation6], 7
          // Predicated region
          $region145: #{tpu_custom_call.1} parent=31 // pred_check
            _
          $region146: #{tpu_custom_call.1} parent=31 // pred_check_branch
            %617 = sbr.rel target = $region148
          $region147: #{tpu_custom_call.1} parent=31 // pred_region
            %618 = sst [smem:[#allocation15]] [#allocation72]
            %619 = sst [smem:[#allocation16]] [#allocation71]
          $region148: #{tpu_custom_call.1} parent=31 // pred_fallthru
            _
          %621 = shalt.err (0)
          %s623 = sshll.u32 %s613, 4
          %s624 = int_to_ptr.hbm [resolvable:$true] %s623
          %s625 = sshll.u32 %s614, 4
          %s626 = int_to_ptr.vmem [resolvable:$true] %s625
          %628 = dma.hbm_to_vmem [thread:$0]  %s624, 16, %s626, %s615
          %s629 = sld [smem:[#allocation8 + $0x1d]]
          %s630 = scalar_lea.hbm %s1, %s629
          %s631 = scalar_lea.vmem [#allocation2], 15
          %s632 = scalar_lea.sflag [#allocation6], 15
          // Predicated region
          $region149: #{tpu_custom_call.1} parent=31 // pred_check
            _
          $region150: #{tpu_custom_call.1} parent=31 // pred_check_branch
            %634 = sbr.rel target = $region152
          $region151: #{tpu_custom_call.1} parent=31 // pred_region
            %635 = sst [smem:[#allocation15]] [#allocation74]
            %636 = sst [smem:[#allocation16]] [#allocation73]
          $region152: #{tpu_custom_call.1} parent=31 // pred_fallthru
            _
          %638 = shalt.err (0)
          %s640 = sshll.u32 %s630, 4
          %s641 = int_to_ptr.hbm [resolvable:$true] %s640
          %s642 = sshll.u32 %s631, 4
          %s643 = int_to_ptr.vmem [resolvable:$true] %s642
          %645 = dma.hbm_to_vmem [thread:$0]  %s641, 16, %s643, %s632
          %s646 = sld [smem:[#allocation8 + $0x1e]]
          %s647 = scalar_lea.hbm %s1, %s646
          %s648 = scalar_lea.vmem [#allocation2], 23
          %s649 = scalar_lea.sflag [#allocation6], 23
          // Predicated region
          $region153: #{tpu_custom_call.1} parent=31 // pred_check
            _
          $region154: #{tpu_custom_call.1} parent=31 // pred_check_branch
            %651 = sbr.rel target = $region156
          $region155: #{tpu_custom_call.1} parent=31 // pred_region
            %652 = sst [smem:[#allocation15]] [#allocation76]
            %653 = sst [smem:[#allocation16]] [#allocation75]
          $region156: #{tpu_custom_call.1} parent=31 // pred_fallthru
            _
          %655 = shalt.err (0)
          %s657 = sshll.u32 %s647, 4
          %s658 = int_to_ptr.hbm [resolvable:$true] %s657
          %s659 = sshll.u32 %s648, 4
          %s660 = int_to_ptr.vmem [resolvable:$true] %s659
          %662 = dma.hbm_to_vmem [thread:$0]  %s658, 16, %s660, %s649
          %s663 = sld [smem:[#allocation8 + $0x1f]]
          %s664 = scalar_lea.hbm %s1, %s663
          %s665 = scalar_lea.vmem [#allocation2], 31
          %s666 = scalar_lea.sflag [#allocation6], 31
          // Predicated region
          $region157: #{tpu_custom_call.1} parent=31 // pred_check
            _
          $region158: #{tpu_custom_call.1} parent=31 // pred_check_branch
            %668 = sbr.rel target = $region160
          $region159: #{tpu_custom_call.1} parent=31 // pred_region
            %669 = sst [smem:[#allocation15]] [#allocation78]
            %670 = sst [smem:[#allocation16]] [#allocation77]
          $region160: #{tpu_custom_call.1} parent=31 // pred_fallthru
            _
          %672 = shalt.err (0)
          %s674 = sshll.u32 %s664, 4
          %s675 = int_to_ptr.hbm [resolvable:$true] %s674
          %s676 = sshll.u32 %s665, 4
          %s677 = int_to_ptr.vmem [resolvable:$true] %s676
          %679 = dma.hbm_to_vmem [thread:$0]  %s675, 16, %s677, %s666
          %s680 = smul.u32 1, 1
          %s681 = sshll.u32 %s680, 4
          %682 = dma.done [#allocation6], %s681
          %s683 = sshll.u32 %s680, 4
          %684 = dma.done %s156, %s683
          %s685 = sshll.u32 %s680, 4
          %686 = dma.done %s173, %s685
          %s687 = sshll.u32 %s680, 4
          %688 = dma.done %s190, %s687
          %s689 = sshll.u32 %s680, 4
          %690 = dma.done %s207, %s689
          %s691 = sshll.u32 %s680, 4
          %692 = dma.done %s224, %s691
          %s693 = sshll.u32 %s680, 4
          %694 = dma.done %s241, %s693
          %s695 = sshll.u32 %s680, 4
          %696 = dma.done %s258, %s695
          %s697 = sshll.u32 %s680, 4
          %698 = dma.done %s275, %s697
          %s699 = sshll.u32 %s680, 4
          %700 = dma.done %s292, %s699
          %s701 = sshll.u32 %s680, 4
          %702 = dma.done %s309, %s701
          %s703 = sshll.u32 %s680, 4
          %704 = dma.done %s326, %s703
          %s705 = sshll.u32 %s680, 4
          %706 = dma.done %s343, %s705
          %s707 = sshll.u32 %s680, 4
          %708 = dma.done %s360, %s707
          %s709 = sshll.u32 %s680, 4
          %710 = dma.done %s377, %s709
          %s711 = sshll.u32 %s680, 4
          %712 = dma.done %s394, %s711
          %s713 = sshll.u32 %s680, 4
          %714 = dma.done %s411, %s713
          %s715 = sshll.u32 %s680, 4
          %716 = dma.done %s428, %s715
          %s717 = sshll.u32 %s680, 4
          %718 = dma.done %s445, %s717
          %s719 = sshll.u32 %s680, 4
          %720 = dma.done %s462, %s719
          %s721 = sshll.u32 %s680, 4
          %722 = dma.done %s479, %s721
          %s723 = sshll.u32 %s680, 4
          %724 = dma.done %s496, %s723
          %s725 = sshll.u32 %s680, 4
          %726 = dma.done %s513, %s725
          %s727 = sshll.u32 %s680, 4
          %728 = dma.done %s530, %s727
          %s729 = sshll.u32 %s680, 4
          %730 = dma.done %s547, %s729
          %s731 = sshll.u32 %s680, 4
          %732 = dma.done %s564, %s731
          %s733 = sshll.u32 %s680, 4
          %734 = dma.done %s581, %s733
          %s735 = sshll.u32 %s680, 4
          %736 = dma.done %s598, %s735
          %s737 = sshll.u32 %s680, 4
          %738 = dma.done %s615, %s737
          %s739 = sshll.u32 %s680, 4
          %740 = dma.done %s632, %s739
          %s741 = sshll.u32 %s680, 4
          %742 = dma.done %s649, %s741
          %s743 = sshll.u32 %s680, 4
          %744 = dma.done %s666, %s743
          %v745 = vld [vmem:[#allocation2] sm:$0xff]
          %v746 = vld [vmem:[#allocation2 + $0x8] sm:$0xff]
          %v747 = vld [vmem:[#allocation2 + $0x10] sm:$0xff]
          %v748 = vld [vmem:[#allocation2 + $0x18] sm:$0xff]
          %v749 = vadd.f32 %v745, %v746
          %v750 = vadd.f32 %v749, %v747
          %v751 = vadd.f32 %v750, %v748
          %v752 = vrcp.pop 4.0
          %v753 = vmul.f32 4.0, %v752
          %v754 = vsub.f32 1.0, %v753
          %v755 = vmul.f32 %v752, %v754
          %v756 = vadd.f32 %v752, %v755
          %vm757 = vweird.f32 %v752
          %v758 = vsel %vm757, %v752, %v756
          %v759 = vmul.f32 %v751, %v758
          %760 = vst [vmem:[#allocation3] sm:$0xff] %v759
          %vm761 = vcmask 7168
          %762 = vst.msk [vmem:[#allocation4] sm:$0xff] %vm761, -inf
          %763 = vst.msk [vmem:[#allocation5] sm:$0xff] %vm761, 0.0
        $region32: #{tpu_custom_call.1} parent=23 // pred_fallthru
          _
        %v764 = vld [vmem:[#allocation3] sm:$0xff]
        %v765 = vld [vmem:[%s119] sm:$0xff]
        %v766 = vld [vmem:[%s119 + $0x8] sm:$0xff]
        %v767 = vld [vmem:[%s119 + $0x10] sm:$0xff]
        %v768 = vld [vmem:[%s119 + $0x18] sm:$0xff]
        %v769 = vld [vmem:[%s119 + $0x20] sm:$0xff]
        %v770 = vld [vmem:[%s119 + $0x28] sm:$0xff]
        %v771 = vld [vmem:[%s119 + $0x30] sm:$0xff]
        %v772 = vld [vmem:[%s119 + $0x38] sm:$0xff]
        %v773 = vld [vmem:[%s119 + $0x40] sm:$0xff]
        %v774 = vld [vmem:[%s119 + $0x48] sm:$0xff]
        %v775 = vld [vmem:[%s119 + $0x50] sm:$0xff]
        %v776 = vld [vmem:[%s119 + $0x58] sm:$0xff]
        %v777 = vld [vmem:[%s119 + $0x60] sm:$0xff]
        %v778 = vld [vmem:[%s119 + $0x68] sm:$0xff]
        %v779 = vld [vmem:[%s119 + $0x70] sm:$0xff]
        %v780 = vld [vmem:[%s119 + $0x78] sm:$0xff]
        %781 = vmatpush.msra.mxu0 %v780
        %782 = vmatpush.msra.mxu0 %v779
        %783 = vmatpush.msra.mxu0 %v778
        %784 = vmatpush.msra.mxu0 %v777
        %785 = vmatpush.msra.mxu0 %v776
        %786 = vmatpush.msra.mxu0 %v775
        %787 = vmatpush.msra.mxu0 %v774
        %788 = vmatpush.msra.mxu0 %v773
        %789 = vmatpush.msra.mxu0 %v772
        %790 = vmatpush.msra.mxu0 %v771
        %791 = vmatpush.msra.mxu0 %v770
        %792 = vmatpush.msra.mxu0 %v769
        %793 = vmatpush.msra.mxu0 %v768
        %794 = vmatpush.msra.mxu0 %v767
        %795 = vmatpush.msra.mxu0 %v766
        %796 = vmatpush.msra.mxu0 %v765
        %797 = vmatmul.f32.gmra.mxu0 %v764
        %v798 = vpop.f32.mrf.mxu0
        %v799 = vadd.f32 0.0, %v798
        %800 = vdwg.mxu0
        %v801 = vld [vmem:[#allocation4] sm:$0xff]
        %802 = vmax.xlane.f32.xlu0 %v799
        %v803 = vpop.xlane.xlu0 %802
        %v804 = vmax.f32 %v801, %v803
        %v805 = vld [vmem:[#allocation5] sm:$0xff]
        %v806 = vsub.f32 %v801, %v804
        %v807 = vmul.f32 %v806, 1.442695
        %v808 = vpow.pop %v807
        %v809 = vmul.f32 %v805, %v808
        %811 = vset.pattern.permute.xlu0 0
        %812 = vperm.xlu0 %811, %v804
        %v813 = vpop.permute.xlu0 %812
        %v815 = vsub.f32 %v799, %v813
        %v816 = vmul.f32 %v815, 1.442695
        %v817 = vpow.pop %v816
        %818 = vadd.xlane.f32.xlu0 %v817
        %v819 = vpop.xlane.xlu0 %818
        %v820 = vadd.f32 %v809, %v819
        %vm821 = vcmask 7168
        %822 = vst.msk [vmem:[#allocation5] sm:$0xff] %vm821, %v820
        %823 = vst.msk [vmem:[#allocation4] sm:$0xff] %vm821, %v804
        %s824 = smul.u32 %s26, 128
        %s825 = sshra.s32 %s824, 7
        %s826 = sand.u32 %s824, 127
        %s827 = smul.addr %s825, 8
        %s828 = scalar_lea.vmem [#allocation12], %s827
        %829 = vst [vmem:[%s828] sm:$0xff] %v799
        %p830 = scmp.eq.s32.totalorder %s26, 1
        // Predicated region
        $region161: #{tpu_custom_call.1} parent=23 // pred_check
          %p831 = pneg %p830
        $region162: #{tpu_custom_call.1} parent=23 // pred_check_branch
          %833 = sbr.rel (%p831) target = $region164
        $region163: #{tpu_custom_call.1} parent=23 // pred_region
          %v834 = vld [vmem:[#allocation4] sm:$0xff]
          %v835 = vld [vmem:[#allocation5] sm:$0xff]
          %v836 = vlog2.pop %v835
          %v837 = vmul.f32 %v836, 0.6931472
          %v838 = vadd.f32 %v834, %v837
          %v839 = vld [vmem:[#allocation12] sm:$0xff]
          %v840 = vld [vmem:[#allocation12 + $0x8] sm:$0xff]
          %842 = vset.pattern.permute.xlu0 0
          %843 = vperm.xlu0 %842, %v838
          %v844 = vpop.permute.xlu0 %843
          %v846 = vsub.f32 %v839, %v844
          %v847 = vsub.f32 %v840, %v844
          %848 = vst [vmem:[#allocation12] sm:$0xff] %v846
          %849 = vst [vmem:[#allocation12 + $0x8] sm:$0xff] %v847
        $region164: #{tpu_custom_call.1} parent=23 // pred_fallthru
          _
        // Predicated region
        $region165: #{tpu_custom_call.1} parent=23 // pred_check
          %p850 = pneg %p65
        $region166: #{tpu_custom_call.1} parent=23 // pred_check_branch
          %852 = sbr.rel (%p850) target = $region168
        $region167: #{tpu_custom_call.1} parent=23 // pred_region
          %854 = vsyncadd [#allocation11], 0
          %s856 = sshll.u32 [#allocation12], 4
          %s857 = int_to_ptr.vmem [resolvable:$true] %s856
          %s858 = sshll.u32 %s3, 4
          %s859 = int_to_ptr.hbm [resolvable:$true] %s858
          %861 = dma.vmem_to_hbm [thread:$0]  %s857, 256, %s859, [#allocation11]
        $region168: #{tpu_custom_call.1} parent=23 // pred_fallthru
          _
        // Predicated region
        $region169: #{tpu_custom_call.1} parent=23 // pred_check
          %p862 = pneg %p65
        $region170: #{tpu_custom_call.1} parent=23 // pred_check_branch
          %864 = sbr.rel (%p862) target = $region172
        $region171: #{tpu_custom_call.1} parent=23 // pred_region
          %866 = dma.done [#allocation11], 256
        $region172: #{tpu_custom_call.1} parent=23 // pred_fallthru
          _
      $region24: #{tpu_custom_call.1} parent=5 // pred_fallthru
        _
      %p867 = scmp.le.s32.totalorder 2, %s21
      // Predicated region
      $region173: #{tpu_custom_call.1} parent=5 // pred_check
        %p868 = pneg %p867
      $region174: #{tpu_custom_call.1} parent=5 // pred_check_branch
        %870 = sbr.rel (%p868) target = $region176
      $region175: #{tpu_custom_call.1} parent=5 // pred_region
        %s871 = ssub.s32 %s21, 2
      $region176: #{tpu_custom_call.1} parent=5 // pred_fallthru
        _
    $region6: #{tpu_custom_call.1} parent=1 // loop_footer
      %s25 = sadd.s32 1, %s21
    $region7: #{tpu_custom_call.1} parent=1 // loop_footer_branch
      %20 = sbr.rel target = $region3
    $region8: #{tpu_custom_call.1} parent=1 // loop_exit
      _
    %872 = vsyncpa [#allocation10], 1
    %s873 = scalar_lea.sflag [#allocation10], 1
    %874 = vsyncpa %s873, 1
    %875 = vsyncpa [#allocation11], 1
    %s876 = scalar_lea.sflag [#allocation11], 1
    %877 = vsyncpa %s876, 1
  %878 = vsyncmov [#allocation6]
  %s879 = vpop.sfrf %878
  %p880 = scmp.eq.s32.totalorder %s879, 0
  %p881 = pneg %p880
  %883 = shalt.err (%p881)
  %s884 = scalar_lea.sflag [#allocation6], 1
  %885 = vsyncmov %s884
  %s886 = vpop.sfrf %885
  %p887 = scmp.eq.s32.totalorder %s886, 0
  %p888 = pneg %p887
  %890 = shalt.err (%p888)
  %s891 = scalar_lea.sflag [#allocation6], 2
  %892 = vsyncmov %s891
  %s893 = vpop.sfrf %892
  %p894 = scmp.eq.s32.totalorder %s893, 0
  %p895 = pneg %p894
  %897 = shalt.err (%p895)
  %s898 = scalar_lea.sflag [#allocation6], 3
  %899 = vsyncmov %s898
  %s900 = vpop.sfrf %899
  %p901 = scmp.eq.s32.totalorder %s900, 0
  %p902 = pneg %p901
  %904 = shalt.err (%p902)
  %s905 = scalar_lea.sflag [#allocation6], 4
  %906 = vsyncmov %s905
  %s907 = vpop.sfrf %906
  %p908 = scmp.eq.s32.totalorder %s907, 0
  %p909 = pneg %p908
  %911 = shalt.err (%p909)
  %s912 = scalar_lea.sflag [#allocation6], 5
  %913 = vsyncmov %s912
  %s914 = vpop.sfrf %913
  %p915 = scmp.eq.s32.totalorder %s914, 0
  %p916 = pneg %p915
  %918 = shalt.err (%p916)
  %s919 = scalar_lea.sflag [#allocation6], 6
  %920 = vsyncmov %s919
  %s921 = vpop.sfrf %920
  %p922 = scmp.eq.s32.totalorder %s921, 0
  %p923 = pneg %p922
  %925 = shalt.err (%p923)
  %s926 = scalar_lea.sflag [#allocation6], 7
  %927 = vsyncmov %s926
  %s928 = vpop.sfrf %927
  %p929 = scmp.eq.s32.totalorder %s928, 0
  %p930 = pneg %p929
  %932 = shalt.err (%p930)
  %s933 = scalar_lea.sflag [#allocation6], 8
  %934 = vsyncmov %s933
  %s935 = vpop.sfrf %934
  %p936 = scmp.eq.s32.totalorder %s935, 0
  %p937 = pneg %p936
  %939 = shalt.err (%p937)
  %s940 = scalar_lea.sflag [#allocation6], 9
  %941 = vsyncmov %s940
  %s942 = vpop.sfrf %941
  %p943 = scmp.eq.s32.totalorder %s942, 0
  %p944 = pneg %p943
  %946 = shalt.err (%p944)
  %s947 = scalar_lea.sflag [#allocation6], 10
  %948 = vsyncmov %s947
  %s949 = vpop.sfrf %948
  %p950 = scmp.eq.s32.totalorder %s949, 0
  %p951 = pneg %p950
  %953 = shalt.err (%p951)
  %s954 = scalar_lea.sflag [#allocation6], 11
  %955 = vsyncmov %s954
  %s956 = vpop.sfrf %955
  %p957 = scmp.eq.s32.totalorder %s956, 0
  %p958 = pneg %p957
  %960 = shalt.err (%p958)
  %s961 = scalar_lea.sflag [#allocation6], 12
  %962 = vsyncmov %s961
  %s963 = vpop.sfrf %962
  %p964 = scmp.eq.s32.totalorder %s963, 0
  %p965 = pneg %p964
  %967 = shalt.err (%p965)
  %s968 = scalar_lea.sflag [#allocation6], 13
  %969 = vsyncmov %s968
  %s970 = vpop.sfrf %969
  %p971 = scmp.eq.s32.totalorder %s970, 0
  %p972 = pneg %p971
  %974 = shalt.err (%p972)
  %s975 = scalar_lea.sflag [#allocation6], 14
  %976 = vsyncmov %s975
  %s977 = vpop.sfrf %976
  %p978 = scmp.eq.s32.totalorder %s977, 0
  %p979 = pneg %p978
  %981 = shalt.err (%p979)
  %s982 = scalar_lea.sflag [#allocation6], 15
  %983 = vsyncmov %s982
  %s984 = vpop.sfrf %983
  %p985 = scmp.eq.s32.totalorder %s984, 0
  %p986 = pneg %p985
  %988 = shalt.err (%p986)
  %s989 = scalar_lea.sflag [#allocation6], 16
  %990 = vsyncmov %s989
  %s991 = vpop.sfrf %990
  %p992 = scmp.eq.s32.totalorder %s991, 0
  %p993 = pneg %p992
  %995 = shalt.err (%p993)
  %s996 = scalar_lea.sflag [#allocation6], 17
  %997 = vsyncmov %s996
  %s998 = vpop.sfrf %997
  %p999 = scmp.eq.s32.totalorder %s998, 0
  %p1000 = pneg %p999
  %1002 = shalt.err (%p1000)
  %s1003 = scalar_lea.sflag [#allocation6], 18
  %1004 = vsyncmov %s1003
  %s1005 = vpop.sfrf %1004
  %p1006 = scmp.eq.s32.totalorder %s1005, 0
  %p1007 = pneg %p1006
  %1009 = shalt.err (%p1007)
  %s1010 = scalar_lea.sflag [#allocation6], 19
  %1011 = vsyncmov %s1010
  %s1012 = vpop.sfrf %1011
  %p1013 = scmp.eq.s32.totalorder %s1012, 0
  %p1014 = pneg %p1013
  %1016 = shalt.err (%p1014)
  %s1017 = scalar_lea.sflag [#allocation6], 20
  %1018 = vsyncmov %s1017
  %s1019 = vpop.sfrf %1018
  %p1020 = scmp.eq.s32.totalorder %s1019, 0
  %p1021 = pneg %p1020
  %1023 = shalt.err (%p1021)
  %s1024 = scalar_lea.sflag [#allocation6], 21
  %1025 = vsyncmov %s1024
  %s1026 = vpop.sfrf %1025
  %p1027 = scmp.eq.s32.totalorder %s1026, 0
  %p1028 = pneg %p1027
  %1030 = shalt.err (%p1028)
  %s1031 = scalar_lea.sflag [#allocation6], 22
  %1032 = vsyncmov %s1031
  %s1033 = vpop.sfrf %1032
  %p1034 = scmp.eq.s32.totalorder %s1033, 0
  %p1035 = pneg %p1034
  %1037 = shalt.err (%p1035)
  %s1038 = scalar_lea.sflag [#allocation6], 23
  %1039 = vsyncmov %s1038
  %s1040 = vpop.sfrf %1039
  %p1041 = scmp.eq.s32.totalorder %s1040, 0
  %p1042 = pneg %p1041
  %1044 = shalt.err (%p1042)
  %s1045 = scalar_lea.sflag [#allocation6], 24
  %1046 = vsyncmov %s1045
  %s1047 = vpop.sfrf %1046
  %p1048 = scmp.eq.s32.totalorder %s1047, 0
  %p1049 = pneg %p1048
  %1051 = shalt.err (%p1049)
  %s1052 = scalar_lea.sflag [#allocation6], 25
  %1053 = vsyncmov %s1052
  %s1054 = vpop.sfrf %1053
  %p1055 = scmp.eq.s32.totalorder %s1054, 0
  %p1056 = pneg %p1055
  %1058 = shalt.err (%p1056)
  %s1059 = scalar_lea.sflag [#allocation6], 26
  %1060 = vsyncmov %s1059
  %s1061 = vpop.sfrf %1060
  %p1062 = scmp.eq.s32.totalorder %s1061, 0
  %p1063 = pneg %p1062
  %1065 = shalt.err (%p1063)
  %s1066 = scalar_lea.sflag [#allocation6], 27
  %1067 = vsyncmov %s1066
  %s1068 = vpop.sfrf %1067
  %p1069 = scmp.eq.s32.totalorder %s1068, 0
  %p1070 = pneg %p1069
  %1072 = shalt.err (%p1070)
  %s1073 = scalar_lea.sflag [#allocation6], 28
  %1074 = vsyncmov %s1073
  %s1075 = vpop.sfrf %1074
  %p1076 = scmp.eq.s32.totalorder %s1075, 0
  %p1077 = pneg %p1076
  %1079 = shalt.err (%p1077)
  %s1080 = scalar_lea.sflag [#allocation6], 29
  %1081 = vsyncmov %s1080
  %s1082 = vpop.sfrf %1081
  %p1083 = scmp.eq.s32.totalorder %s1082, 0
  %p1084 = pneg %p1083
  %1086 = shalt.err (%p1084)
  %s1087 = scalar_lea.sflag [#allocation6], 30
  %1088 = vsyncmov %s1087
  %s1089 = vpop.sfrf %1088
  %p1090 = scmp.eq.s32.totalorder %s1089, 0
  %p1091 = pneg %p1090
  %1093 = shalt.err (%p1091)
  %s1094 = scalar_lea.sflag [#allocation6], 31
  %1095 = vsyncmov %s1094
  %s1096 = vpop.sfrf %1095
  %p1097 = scmp.eq.s32.totalorder %s1096, 0
  %p1098 = pneg %p1097
  %1100 = shalt.err (%p1098)

</llo_original>
